<compile_context>
chip_gen: v6e
topology: v6e:2x2x1
jax: 0.10.0
libtpu: 0.0.40
codegen_flags: <defaults>
</compile_context>

<pallas_src>
import functools

import jax
import jax.numpy as jnp
from jax import lax
from jax.experimental import pallas as pl
from jax.experimental.pallas import tpu as pltpu

LANE = 128


def _round_up(x, m):
    return (x + m - 1) // m * m


# ----------------------------- fused Pallas kernel ---------------------------- #

def _conv3x3_gn_silu_kernel(x_ref, w_ref, gamma_ref, beta_ref, mask_ref,
                            gmap_ref, gmapt_ref, o_ref, *,
                            width, hw, inv_nelem, eps):
    """One batch element per grid step.

    x_ref    : (1, (H+2)*W + 2, Cin_pad) f32   row-padded, flattened activation
    w_ref    : (9, Cin_pad, Cout_pad)    bf16  per-tap weight matrices
    gamma/beta: (1, Cout_pad)            f32   GroupNorm affine (pad chans = 0)
    mask_ref : (2, HW, 1)                f32   left / right column-validity
    gmap_ref : (Cout_pad, G)             f32   one-hot channel -> group map
    gmapt_ref: (G, Cout_pad)             f32   its transpose
    o_ref    : (1, HW, Cout_pad)         f32
    """
    cout = o_ref.shape[-1]

    # ---- 3x3 conv: 9 accumulated tap matmuls, bf16 on the MXU, f32 acc ----
    # (for very large channel counts each tap is already a separate K chunk;
    #  a K grid axis + VMEM accumulator would be added only at that scale)
    acc = jnp.zeros((hw, cout), jnp.float32)
    for t in range(9):
        dy, dx = t // 3, t % 3
        s = dy * width + dx                       # static sublane offset
        tap = x_ref[0, pl.ds(s, hw), :]           # (HW, Cin_pad), contiguous window
        if dx == 0:                               # left neighbour needs col w-1 >= 0
            tap = tap * mask_ref[0]
        elif dx == 2:                             # right neighbour needs col w+1 < W
            tap = tap * mask_ref[1]
        acc = acc + jnp.dot(tap.astype(jnp.bfloat16), w_ref[t],
                            preferred_element_type=jnp.float32)

    # ---- GroupNorm (vectorized; pad channels excluded via one-hot map) ----
    ssum = jnp.sum(acc, axis=0, keepdims=True)            # (1, Cout_pad)
    ssq = jnp.sum(acc * acc, axis=0, keepdims=True)       # (1, Cout_pad)
    gsum = jnp.dot(ssum, gmap_ref[...], preferred_element_type=jnp.float32)
    gsq = jnp.dot(ssq, gmap_ref[...], preferred_element_type=jnp.float32)
    mean_g = gsum * inv_nelem                              # (1, G)
    var_g = jnp.maximum(gsq * inv_nelem - mean_g * mean_g, 0.0)
    inv_g = lax.rsqrt(var_g + eps)
    mean_c = jnp.dot(mean_g, gmapt_ref[...], preferred_element_type=jnp.float32)
    inv_c = jnp.dot(inv_g, gmapt_ref[...], preferred_element_type=jnp.float32)
    scale = inv_c * gamma_ref[...]                         # (1, Cout_pad)
    shift = beta_ref[...] - mean_c * scale
    y = acc * scale + shift

    # ---- SiLU: y * sigmoid(y); reciprocal pushed to the EUP ----
    y = y * pl.reciprocal(1.0 + jnp.exp(-y), approx=True)

    o_ref[0] = y                                           # single lane-dense store


# ------------------------------- stage wrapper -------------------------------- #

def _column_masks(H, W):
    w_idx = jnp.arange(H * W, dtype=jnp.int32) % W
    left = (w_idx >= 1).astype(jnp.float32)      # dx = 0 taps
    right = (w_idx <= W - 2).astype(jnp.float32) # dx = 2 taps
    return jnp.stack([left, right])[:, :, None]  # (2, HW, 1)


def _conv3x3_gn_silu(x_bhwc, w9, gamma, beta, masks, gmap, gmapt,
                     num_groups, c_out_real, eps=1e-5):
    """x_bhwc: (B, H, W, Cin_pad) f32 -> (B, H*W, Cout_pad) f32 (fused stage)."""
    B, H, W, cin_p = x_bhwc.shape
    cout_p = w9.shape[-1]
    G = gmap.shape[1]
    HW = H * W
    L = (H + 2) * W + 2

    # Row-pad, flatten, and pad one element front/back so every 3x3 tap is a
    # contiguous length-HW window at a static offset (no k^2 HBM im2col blow-up).
    xp = jnp.pad(x_bhwc, ((0, 0), (1, 1), (0, 0), (0, 0)))
    xf = jnp.pad(xp.reshape(B, (H + 2) * W, cin_p), ((0, 0), (1, 1), (0, 0)))

    kernel = functools.partial(
        _conv3x3_gn_silu_kernel, width=W, hw=HW,
        inv_nelem=1.0 / float(HW * (c_out_real // num_groups)), eps=eps)

    return pl.pallas_call(
        kernel,
        out_shape=jax.ShapeDtypeStruct((B, HW, cout_p), jnp.float32),
        grid=(B,),
        in_specs=[
            pl.BlockSpec((1, L, cin_p), lambda b: (b, 0, 0)),
            pl.BlockSpec((9, cin_p, cout_p), lambda b: (0, 0, 0)),
            pl.BlockSpec((1, cout_p), lambda b: (0, 0)),
            pl.BlockSpec((1, cout_p), lambda b: (0, 0)),
            pl.BlockSpec((2, HW, 1), lambda b: (0, 0, 0)),
            pl.BlockSpec((cout_p, G), lambda b: (0, 0)),
            pl.BlockSpec((G, cout_p), lambda b: (0, 0)),
        ],
        out_specs=pl.BlockSpec((1, HW, cout_p), lambda b: (b, 0, 0)),
        compiler_params=pltpu.CompilerParams(
            dimension_semantics=("parallel",)),
    )(xf, w9, gamma, beta, masks, gmap, gmapt)


# -------------------------------- module forward ------------------------------ #

def double_conv2d_forward(x_nchw, params):
    B, Cin, H, W = x_nchw.shape
    cin_p = params["cin_pad"]
    cout_p = params["cout_pad"]
    out_ch = params["out_ch"]
    G = params["num_groups"]
    masks = _column_masks(H, W)

    x = jnp.transpose(x_nchw, (0, 2, 3, 1)).astype(jnp.float32)       # NHWC
    x = jnp.pad(x, ((0, 0), (0, 0), (0, 0), (0, cin_p - Cin)))        # lane-pad channels

    s1, s2 = params["stage1"], params["stage2"]
    h = _conv3x3_gn_silu(x, s1["w9"], s1["gamma"], s1["beta"], masks,
                         params["gmap"], params["gmapt"], G, out_ch)
    h = _conv3x3_gn_silu(h.reshape(B, H, W, cout_p), s2["w9"], s2["gamma"],
                         s2["beta"], masks, params["gmap"], params["gmapt"],
                         G, out_ch)

    out = h[:, :, :out_ch].reshape(B, H, W, out_ch)
    return jnp.transpose(out, (0, 3, 1, 2))                           # NCHW


# -------------------------------- parameter init ------------------------------ #

def init_params(key, in_ch, out_ch, num_groups=8):
    assert out_ch % num_groups == 0, "GroupNorm needs out_ch % num_groups == 0"
    cin_p = _round_up(in_ch, LANE)
    cout_p = _round_up(out_ch, LANE)
    ks = jax.random.split(key, 6)

    def conv_w(kk, cin, cout, cin_pad, cout_pad):
        # torch Conv2d layout (Cout, Cin, 3, 3); pre-reshape + pad + bf16 once.
        w = jax.random.normal(kk, (cout, cin, 3, 3), jnp.float32) / jnp.sqrt(9.0 * cin)
        w9 = jnp.transpose(w, (2, 3, 1, 0)).reshape(9, cin, cout)     # (tap, Cin, Cout)
        w9 = jnp.pad(w9, ((0, 0), (0, cin_pad - cin), (0, cout_pad - cout)))
        return w9.astype(jnp.bfloat16)

    def gn_affine(kg, kb, c, c_pad):
        gamma = 1.0 + 0.1 * jax.random.normal(kg, (c,), jnp.float32)
        beta = 0.1 * jax.random.normal(kb, (c,), jnp.float32)
        return (jnp.pad(gamma, (0, c_pad - c)).reshape(1, c_pad),
                jnp.pad(beta, (0, c_pad - c)).reshape(1, c_pad))

    g1, b1 = gn_affine(ks[1], ks[2], out_ch, cout_p)
    g2, b2 = gn_affine(ks[4], ks[5], out_ch, cout_p)

    cg = out_ch // num_groups
    ch = jnp.arange(cout_p)
    gmap = ((ch[:, None] // cg) == jnp.arange(num_groups)[None, :])
    gmap = jnp.where(ch[:, None] < out_ch, gmap, False).astype(jnp.float32)

    return dict(
        in_ch=in_ch, out_ch=out_ch, num_groups=num_groups,
        cin_pad=cin_p, cout_pad=cout_p,
        gmap=gmap, gmapt=jnp.asarray(gmap.T),
        stage1=dict(w9=conv_w(ks[0], in_ch, out_ch, cin_p, cout_p), gamma=g1, beta=b1),
        stage2=dict(w9=conv_w(ks[3], out_ch, out_ch, cout_p, cout_p), gamma=g2, beta=b2),
    )


# ----------------------------- pure-JAX reference ----------------------------- #

def reference_forward(x_nchw, params, eps=1e-5):
    G = params["num_groups"]
    in_ch, out_ch = params["in_ch"], params["out_ch"]

    def stage(x, w9, gamma, beta, cin, cout):
        w9 = w9.astype(jnp.float32)[:, :cin, :cout]
        w = jnp.transpose(w9.reshape(3, 3, cin, cout), (3, 2, 0, 1))  # OIHW
        y = lax.conv_general_dilated(x, w, (1, 1), "SAME",
                                     dimension_numbers=("NCHW", "OIHW", "NCHW"))
        B, C, H, W = y.shape
        yg = y.reshape(B, G, C // G, H, W)
        m = jnp.mean(yg, axis=(2, 3, 4), keepdims=True)
        v = jnp.mean((yg - m) ** 2, axis=(2, 3, 4), keepdims=True)
        yn = ((yg - m) / jnp.sqrt(v + eps)).reshape(B, C, H, W)
        y = yn * gamma[0, :cout].reshape(1, C, 1, 1) + beta[0, :cout].reshape(1, C, 1, 1)
        return y * jax.nn.sigmoid(y)

    s1, s2 = params["stage1"], params["stage2"]
    h = stage(x_nchw.astype(jnp.float32), s1["w9"], s1["gamma"], s1["beta"], in_ch, out_ch)
    return stage(h, s2["w9"], s2["gamma"], s2["beta"], out_ch, out_ch)


# ------------------------------------ main ------------------------------------ #

if __name__ == "__main__":
    key = jax.random.PRNGKey(0)
    pkey, xkey = jax.random.split(key)

    B, in_ch, out_ch, H, W = 2, 16, 32, 16, 16     # GroupNorm(8) -> out_ch % 8 == 0
    params = init_params(pkey, in_ch, out_ch, num_groups=8)
    x = jax.random.normal(xkey, (B, in_ch, H, W), jnp.float32)   # NCHW, like PyTorch

    out = double_conv2d_forward(x, params)
    out = jax.block_until_ready(out)

    assert out.shape == (B, out_ch, H, W), out.shape
    assert bool(jnp.all(jnp.isfinite(out)))

    # Correctness vs. a pure-JAX f32 reference; tolerance covers the intentional
    # bf16 MXU inputs and the approx EUP reciprocal in the SiLU epilogue.
    ref = reference_forward(x, params)
    assert bool(jnp.allclose(out, ref, rtol=1e-1, atol=1e-1)), \
        float(jnp.max(jnp.abs(out - ref)))

    print("KERNEL_OK")
</pallas_src>

<mosaic_0001>
module attributes {stable_mosaic.version = 11 : i64} {
  func.func @_conv3x3_gn_silu_kernel(%arg0: i32, %arg1: memref<1x290x128xf32, #tpu.memory_space<vmem>>, %arg2: memref<9x128x128xbf16, #tpu.memory_space<vmem>>, %arg3: memref<1x128xf32, #tpu.memory_space<vmem>>, %arg4: memref<1x128xf32, #tpu.memory_space<vmem>>, %arg5: memref<2x256x1xf32, #tpu.memory_space<vmem>>, %arg6: memref<128x8xf32, #tpu.memory_space<vmem>>, %arg7: memref<8x128xf32, #tpu.memory_space<vmem>>, %arg8: memref<1x256x128xf32, #tpu.memory_space<vmem>>) attributes {dimension_semantics = [#tpu.dimension_semantics<parallel>], iteration_bounds = array<i64: 2>, scalar_prefetch = 0 : i64, scratch_operands = 0 : i64, tpu.core_type = #tpu.core_type<tc>, window_params = [{transform_indices = @transform_0, window_bounds = array<i64: 1, 290, 128>}, {pipeline_mode = #tpu.pipeline_mode<synchronous>, transform_indices = @transform_1, window_bounds = array<i64: 9, 128, 128>}, {pipeline_mode = #tpu.pipeline_mode<synchronous>, transform_indices = @transform_2, window_bounds = array<i64: 1, 128>}, {pipeline_mode = #tpu.pipeline_mode<synchronous>, transform_indices = @transform_3, window_bounds = array<i64: 1, 128>}, {pipeline_mode = #tpu.pipeline_mode<synchronous>, transform_indices = @transform_4, window_bounds = array<i64: 2, 256, 1>}, {pipeline_mode = #tpu.pipeline_mode<synchronous>, transform_indices = @transform_5, window_bounds = array<i64: 128, 8>}, {pipeline_mode = #tpu.pipeline_mode<synchronous>, transform_indices = @transform_6, window_bounds = array<i64: 8, 128>}, {transform_indices = @transform_7, window_bounds = array<i64: 1, 256, 128>}]} {
    %cst = arith.constant 0.000000e+00 : f32
    %0 = vector.broadcast %cst : f32 to vector<256x128xf32>
    %c0 = arith.constant 0 : index
    %c0_0 = arith.constant 0 : index
    %c0_1 = arith.constant 0 : index
    %1 = vector.load %arg1[%c0, %c0_0, %c0_1] : memref<1x290x128xf32, #tpu.memory_space<vmem>>, vector<1x256x128xf32>
    %2 = vector.shape_cast %1 : vector<1x256x128xf32> to vector<256x128xf32>
    %c0_2 = arith.constant 0 : index
    %c0_3 = arith.constant 0 : index
    %c0_4 = arith.constant 0 : index
    %3 = vector.load %arg5[%c0_2, %c0_3, %c0_4] : memref<2x256x1xf32, #tpu.memory_space<vmem>>, vector<1x256x1xf32>
    %4 = vector.shape_cast %3 : vector<1x256x1xf32> to vector<256x1xf32>
    %5 = vector.broadcast %4 : vector<256x1xf32> to vector<256x128xf32>
    %6 = arith.mulf %2, %5 : vector<256x128xf32>
    %7 = arith.truncf %6 : vector<256x128xf32> to vector<256x128xbf16>
    %c0_5 = arith.constant 0 : index
    %c0_6 = arith.constant 0 : index
    %c0_7 = arith.constant 0 : index
    %8 = vector.load %arg2[%c0_5, %c0_6, %c0_7] : memref<9x128x128xbf16, #tpu.memory_space<vmem>>, vector<1x128x128xbf16>
    %9 = vector.shape_cast %8 : vector<1x128x128xbf16> to vector<128x128xbf16>
    %cst_8 = arith.constant dense<0.000000e+00> : vector<256x128xf32>
    %10 = tpu.matmul %7, %9, %cst_8 {dimension_numbers = #tpu.dot_dimension_numbers<[1], [0], [0], [1], [0, 0, 1, 1], [], []>} : vector<256x128xbf16>, vector<128x128xbf16>, vector<256x128xf32> -> vector<256x128xf32>
    %11 = arith.addf %0, %10 : vector<256x128xf32>
    %c0_9 = arith.constant 0 : index
    %c1 = arith.constant 1 : index
    %c0_10 = arith.constant 0 : index
    %12 = vector.load %arg1[%c0_9, %c1, %c0_10] : memref<1x290x128xf32, #tpu.memory_space<vmem>>, vector<1x256x128xf32>
    %13 = vector.shape_cast %12 : vector<1x256x128xf32> to vector<256x128xf32>
    %14 = arith.truncf %13 : vector<256x128xf32> to vector<256x128xbf16>
    %c1_11 = arith.constant 1 : index
    %c0_12 = arith.constant 0 : index
    %c0_13 = arith.constant 0 : index
    %15 = vector.load %arg2[%c1_11, %c0_12, %c0_13] : memref<9x128x128xbf16, #tpu.memory_space<vmem>>, vector<1x128x128xbf16>
    %16 = vector.shape_cast %15 : vector<1x128x128xbf16> to vector<128x128xbf16>
    %cst_14 = arith.constant dense<0.000000e+00> : vector<256x128xf32>
    %17 = tpu.matmul %14, %16, %cst_14 {dimension_numbers = #tpu.dot_dimension_numbers<[1], [0], [0], [1], [0, 0, 1, 1], [], []>} : vector<256x128xbf16>, vector<128x128xbf16>, vector<256x128xf32> -> vector<256x128xf32>
    %18 = arith.addf %11, %17 : vector<256x128xf32>
    %c0_15 = arith.constant 0 : index
    %c2 = arith.constant 2 : index
    %c0_16 = arith.constant 0 : index
    %19 = vector.load %arg1[%c0_15, %c2, %c0_16] : memref<1x290x128xf32, #tpu.memory_space<vmem>>, vector<1x256x128xf32>
    %20 = vector.shape_cast %19 : vector<1x256x128xf32> to vector<256x128xf32>
    %c1_17 = arith.constant 1 : index
    %c0_18 = arith.constant 0 : index
    %c0_19 = arith.constant 0 : index
    %21 = vector.load %arg5[%c1_17, %c0_18, %c0_19] : memref<2x256x1xf32, #tpu.memory_space<vmem>>, vector<1x256x1xf32>
    %22 = vector.shape_cast %21 : vector<1x256x1xf32> to vector<256x1xf32>
    %23 = vector.broadcast %22 : vector<256x1xf32> to vector<256x128xf32>
    %24 = arith.mulf %20, %23 : vector<256x128xf32>
    %25 = arith.truncf %24 : vector<256x128xf32> to vector<256x128xbf16>
    %c2_20 = arith.constant 2 : index
    %c0_21 = arith.constant 0 : index
    %c0_22 = arith.constant 0 : index
    %26 = vector.load %arg2[%c2_20, %c0_21, %c0_22] : memref<9x128x128xbf16, #tpu.memory_space<vmem>>, vector<1x128x128xbf16>
    %27 = vector.shape_cast %26 : vector<1x128x128xbf16> to vector<128x128xbf16>
    %cst_23 = arith.constant dense<0.000000e+00> : vector<256x128xf32>
    %28 = tpu.matmul %25, %27, %cst_23 {dimension_numbers = #tpu.dot_dimension_numbers<[1], [0], [0], [1], [0, 0, 1, 1], [], []>} : vector<256x128xbf16>, vector<128x128xbf16>, vector<256x128xf32> -> vector<256x128xf32>
    %29 = arith.addf %18, %28 : vector<256x128xf32>
    %c0_24 = arith.constant 0 : index
    %c16 = arith.constant 16 : index
    %c0_25 = arith.constant 0 : index
    %30 = vector.load %arg1[%c0_24, %c16, %c0_25] : memref<1x290x128xf32, #tpu.memory_space<vmem>>, vector<1x256x128xf32>
    %31 = vector.shape_cast %30 : vector<1x256x128xf32> to vector<256x128xf32>
    %c0_26 = arith.constant 0 : index
    %c0_27 = arith.constant 0 : index
    %c0_28 = arith.constant 0 : index
    %32 = vector.load %arg5[%c0_26, %c0_27, %c0_28] : memref<2x256x1xf32, #tpu.memory_space<vmem>>, vector<1x256x1xf32>
    %33 = vector.shape_cast %32 : vector<1x256x1xf32> to vector<256x1xf32>
    %34 = vector.broadcast %33 : vector<256x1xf32> to vector<256x128xf32>
    %35 = arith.mulf %31, %34 : vector<256x128xf32>
    %36 = arith.truncf %35 : vector<256x128xf32> to vector<256x128xbf16>
    %c3 = arith.constant 3 : index
    %c0_29 = arith.constant 0 : index
    %c0_30 = arith.constant 0 : index
    %37 = vector.load %arg2[%c3, %c0_29, %c0_30] : memref<9x128x128xbf16, #tpu.memory_space<vmem>>, vector<1x128x128xbf16>
    %38 = vector.shape_cast %37 : vector<1x128x128xbf16> to vector<128x128xbf16>
    %cst_31 = arith.constant dense<0.000000e+00> : vector<256x128xf32>
    %39 = tpu.matmul %36, %38, %cst_31 {dimension_numbers = #tpu.dot_dimension_numbers<[1], [0], [0], [1], [0, 0, 1, 1], [], []>} : vector<256x128xbf16>, vector<128x128xbf16>, vector<256x128xf32> -> vector<256x128xf32>
    %40 = arith.addf %29, %39 : vector<256x128xf32>
    %c0_32 = arith.constant 0 : index
    %c17 = arith.constant 17 : index
    %c0_33 = arith.constant 0 : index
    %41 = vector.load %arg1[%c0_32, %c17, %c0_33] : memref<1x290x128xf32, #tpu.memory_space<vmem>>, vector<1x256x128xf32>
    %42 = vector.shape_cast %41 : vector<1x256x128xf32> to vector<256x128xf32>
    %43 = arith.truncf %42 : vector<256x128xf32> to vector<256x128xbf16>
    %c4 = arith.constant 4 : index
    %c0_34 = arith.constant 0 : index
    %c0_35 = arith.constant 0 : index
    %44 = vector.load %arg2[%c4, %c0_34, %c0_35] : memref<9x128x128xbf16, #tpu.memory_space<vmem>>, vector<1x128x128xbf16>
    %45 = vector.shape_cast %44 : vector<1x128x128xbf16> to vector<128x128xbf16>
    %cst_36 = arith.constant dense<0.000000e+00> : vector<256x128xf32>
    %46 = tpu.matmul %43, %45, %cst_36 {dimension_numbers = #tpu.dot_dimension_numbers<[1], [0], [0], [1], [0, 0, 1, 1], [], []>} : vector<256x128xbf16>, vector<128x128xbf16>, vector<256x128xf32> -> vector<256x128xf32>
    %47 = arith.addf %40, %46 : vector<256x128xf32>
    %c0_37 = arith.constant 0 : index
    %c18 = arith.constant 18 : index
    %c0_38 = arith.constant 0 : index
    %48 = vector.load %arg1[%c0_37, %c18, %c0_38] : memref<1x290x128xf32, #tpu.memory_space<vmem>>, vector<1x256x128xf32>
    %49 = vector.shape_cast %48 : vector<1x256x128xf32> to vector<256x128xf32>
    %c1_39 = arith.constant 1 : index
    %c0_40 = arith.constant 0 : index
    %c0_41 = arith.constant 0 : index
    %50 = vector.load %arg5[%c1_39, %c0_40, %c0_41] : memref<2x256x1xf32, #tpu.memory_space<vmem>>, vector<1x256x1xf32>
    %51 = vector.shape_cast %50 : vector<1x256x1xf32> to vector<256x1xf32>
    %52 = vector.broadcast %51 : vector<256x1xf32> to vector<256x128xf32>
    %53 = arith.mulf %49, %52 : vector<256x128xf32>
    %54 = arith.truncf %53 : vector<256x128xf32> to vector<256x128xbf16>
    %c5 = arith.constant 5 : index
    %c0_42 = arith.constant 0 : index
    %c0_43 = arith.constant 0 : index
    %55 = vector.load %arg2[%c5, %c0_42, %c0_43] : memref<9x128x128xbf16, #tpu.memory_space<vmem>>, vector<1x128x128xbf16>
    %56 = vector.shape_cast %55 : vector<1x128x128xbf16> to vector<128x128xbf16>
    %cst_44 = arith.constant dense<0.000000e+00> : vector<256x128xf32>
    %57 = tpu.matmul %54, %56, %cst_44 {dimension_numbers = #tpu.dot_dimension_numbers<[1], [0], [0], [1], [0, 0, 1, 1], [], []>} : vector<256x128xbf16>, vector<128x128xbf16>, vector<256x128xf32> -> vector<256x128xf32>
    %58 = arith.addf %47, %57 : vector<256x128xf32>
    %c0_45 = arith.constant 0 : index
    %c32 = arith.constant 32 : index
    %c0_46 = arith.constant 0 : index
    %59 = vector.load %arg1[%c0_45, %c32, %c0_46] : memref<1x290x128xf32, #tpu.memory_space<vmem>>, vector<1x256x128xf32>
    %60 = vector.shape_cast %59 : vector<1x256x128xf32> to vector<256x128xf32>
    %c0_47 = arith.constant 0 : index
    %c0_48 = arith.constant 0 : index
    %c0_49 = arith.constant 0 : index
    %61 = vector.load %arg5[%c0_47, %c0_48, %c0_49] : memref<2x256x1xf32, #tpu.memory_space<vmem>>, vector<1x256x1xf32>
    %62 = vector.shape_cast %61 : vector<1x256x1xf32> to vector<256x1xf32>
    %63 = vector.broadcast %62 : vector<256x1xf32> to vector<256x128xf32>
    %64 = arith.mulf %60, %63 : vector<256x128xf32>
    %65 = arith.truncf %64 : vector<256x128xf32> to vector<256x128xbf16>
    %c6 = arith.constant 6 : index
    %c0_50 = arith.constant 0 : index
    %c0_51 = arith.constant 0 : index
    %66 = vector.load %arg2[%c6, %c0_50, %c0_51] : memref<9x128x128xbf16, #tpu.memory_space<vmem>>, vector<1x128x128xbf16>
    %67 = vector.shape_cast %66 : vector<1x128x128xbf16> to vector<128x128xbf16>
    %cst_52 = arith.constant dense<0.000000e+00> : vector<256x128xf32>
    %68 = tpu.matmul %65, %67, %cst_52 {dimension_numbers = #tpu.dot_dimension_numbers<[1], [0], [0], [1], [0, 0, 1, 1], [], []>} : vector<256x128xbf16>, vector<128x128xbf16>, vector<256x128xf32> -> vector<256x128xf32>
    %69 = arith.addf %58, %68 : vector<256x128xf32>
    %c0_53 = arith.constant 0 : index
    %c33 = arith.constant 33 : index
    %c0_54 = arith.constant 0 : index
    %70 = vector.load %arg1[%c0_53, %c33, %c0_54] : memref<1x290x128xf32, #tpu.memory_space<vmem>>, vector<1x256x128xf32>
    %71 = vector.shape_cast %70 : vector<1x256x128xf32> to vector<256x128xf32>
    %72 = arith.truncf %71 : vector<256x128xf32> to vector<256x128xbf16>
    %c7 = arith.constant 7 : index
    %c0_55 = arith.constant 0 : index
    %c0_56 = arith.constant 0 : index
    %73 = vector.load %arg2[%c7, %c0_55, %c0_56] : memref<9x128x128xbf16, #tpu.memory_space<vmem>>, vector<1x128x128xbf16>
    %74 = vector.shape_cast %73 : vector<1x128x128xbf16> to vector<128x128xbf16>
    %cst_57 = arith.constant dense<0.000000e+00> : vector<256x128xf32>
    %75 = tpu.matmul %72, %74, %cst_57 {dimension_numbers = #tpu.dot_dimension_numbers<[1], [0], [0], [1], [0, 0, 1, 1], [], []>} : vector<256x128xbf16>, vector<128x128xbf16>, vector<256x128xf32> -> vector<256x128xf32>
    %76 = arith.addf %69, %75 : vector<256x128xf32>
    %c0_58 = arith.constant 0 : index
    %c34 = arith.constant 34 : index
    %c0_59 = arith.constant 0 : index
    %77 = vector.load %arg1[%c0_58, %c34, %c0_59] : memref<1x290x128xf32, #tpu.memory_space<vmem>>, vector<1x256x128xf32>
    %78 = vector.shape_cast %77 : vector<1x256x128xf32> to vector<256x128xf32>
    %c1_60 = arith.constant 1 : index
    %c0_61 = arith.constant 0 : index
    %c0_62 = arith.constant 0 : index
    %79 = vector.load %arg5[%c1_60, %c0_61, %c0_62] : memref<2x256x1xf32, #tpu.memory_space<vmem>>, vector<1x256x1xf32>
    %80 = vector.shape_cast %79 : vector<1x256x1xf32> to vector<256x1xf32>
    %81 = vector.broadcast %80 : vector<256x1xf32> to vector<256x128xf32>
    %82 = arith.mulf %78, %81 : vector<256x128xf32>
    %83 = arith.truncf %82 : vector<256x128xf32> to vector<256x128xbf16>
    %c8 = arith.constant 8 : index
    %c0_63 = arith.constant 0 : index
    %c0_64 = arith.constant 0 : index
    %84 = vector.load %arg2[%c8, %c0_63, %c0_64] : memref<9x128x128xbf16, #tpu.memory_space<vmem>>, vector<1x128x128xbf16>
    %85 = vector.shape_cast %84 : vector<1x128x128xbf16> to vector<128x128xbf16>
    %cst_65 = arith.constant dense<0.000000e+00> : vector<256x128xf32>
    %86 = tpu.matmul %83, %85, %cst_65 {dimension_numbers = #tpu.dot_dimension_numbers<[1], [0], [0], [1], [0, 0, 1, 1], [], []>} : vector<256x128xbf16>, vector<128x128xbf16>, vector<256x128xf32> -> vector<256x128xf32>
    %87 = arith.addf %76, %86 : vector<256x128xf32>
    %cst_66 = arith.constant dense<0.000000e+00> : vector<128xf32>
    %88 = vector.multi_reduction <add>, %87, %cst_66 [0] : vector<256x128xf32> to vector<128xf32>
    %89 = vector.shape_cast %88 : vector<128xf32> to vector<1x128xf32>
    %90 = arith.mulf %87, %87 : vector<256x128xf32>
    %cst_67 = arith.constant dense<0.000000e+00> : vector<128xf32>
    %91 = vector.multi_reduction <add>, %90, %cst_67 [0] : vector<256x128xf32> to vector<128xf32>
    %92 = vector.shape_cast %91 : vector<128xf32> to vector<1x128xf32>
    %c0_68 = arith.constant 0 : index
    %c0_69 = arith.constant 0 : index
    %93 = vector.load %arg6[%c0_68, %c0_69] : memref<128x8xf32, #tpu.memory_space<vmem>>, vector<128x8xf32>
    %cst_70 = arith.constant dense<0.000000e+00> : vector<1x8xf32>
    %94 = tpu.matmul %89, %93, %cst_70 {dimension_numbers = #tpu.dot_dimension_numbers<[1], [0], [0], [1], [0, 0, 1, 1], [], []>} : vector<1x128xf32>, vector<128x8xf32>, vector<1x8xf32> -> vector<1x8xf32>
    %c0_71 = arith.constant 0 : index
    %c0_72 = arith.constant 0 : index
    %95 = vector.load %arg6[%c0_71, %c0_72] : memref<128x8xf32, #tpu.memory_space<vmem>>, vector<128x8xf32>
    %cst_73 = arith.constant dense<0.000000e+00> : vector<1x8xf32>
    %96 = tpu.matmul %92, %95, %cst_73 {dimension_numbers = #tpu.dot_dimension_numbers<[1], [0], [0], [1], [0, 0, 1, 1], [], []>} : vector<1x128xf32>, vector<128x8xf32>, vector<1x8xf32> -> vector<1x8xf32>
    %cst_74 = arith.constant 9.765625E-4 : f32
    %97 = vector.broadcast %cst_74 : f32 to vector<1x8xf32>
    %98 = arith.mulf %94, %97 : vector<1x8xf32>
    %cst_75 = arith.constant 9.765625E-4 : f32
    %99 = vector.broadcast %cst_75 : f32 to vector<1x8xf32>
    %100 = arith.mulf %96, %99 : vector<1x8xf32>
    %101 = arith.mulf %98, %98 : vector<1x8xf32>
    %102 = arith.subf %100, %101 : vector<1x8xf32>
    %cst_76 = arith.constant 0.000000e+00 : f32
    %103 = vector.broadcast %cst_76 : f32 to vector<1x8xf32>
    %104 = arith.maximumf %102, %103 : vector<1x8xf32>
    %cst_77 = arith.constant 9.99999974E-6 : f32
    %105 = vector.broadcast %cst_77 : f32 to vector<1x8xf32>
    %106 = arith.addf %104, %105 : vector<1x8xf32>
    %107 = math.rsqrt %106 : vector<1x8xf32>
    %c0_78 = arith.constant 0 : index
    %c0_79 = arith.constant 0 : index
    %108 = vector.load %arg7[%c0_78, %c0_79] : memref<8x128xf32, #tpu.memory_space<vmem>>, vector<8x128xf32>
    %cst_80 = arith.constant dense<0.000000e+00> : vector<1x128xf32>
    %109 = tpu.matmul %98, %108, %cst_80 {dimension_numbers = #tpu.dot_dimension_numbers<[1], [0], [0], [1], [0, 0, 1, 1], [], []>} : vector<1x8xf32>, vector<8x128xf32>, vector<1x128xf32> -> vector<1x128xf32>
    %c0_81 = arith.constant 0 : index
    %c0_82 = arith.constant 0 : index
    %110 = vector.load %arg7[%c0_81, %c0_82] : memref<8x128xf32, #tpu.memory_space<vmem>>, vector<8x128xf32>
    %cst_83 = arith.constant dense<0.000000e+00> : vector<1x128xf32>
    %111 = tpu.matmul %107, %110, %cst_83 {dimension_numbers = #tpu.dot_dimension_numbers<[1], [0], [0], [1], [0, 0, 1, 1], [], []>} : vector<1x8xf32>, vector<8x128xf32>, vector<1x128xf32> -> vector<1x128xf32>
    %c0_84 = arith.constant 0 : index
    %c0_85 = arith.constant 0 : index
    %112 = vector.load %arg3[%c0_84, %c0_85] : memref<1x128xf32, #tpu.memory_space<vmem>>, vector<1x128xf32>
    %113 = arith.mulf %111, %112 : vector<1x128xf32>
    %c0_86 = arith.constant 0 : index
    %c0_87 = arith.constant 0 : index
    %114 = vector.load %arg4[%c0_86, %c0_87] : memref<1x128xf32, #tpu.memory_space<vmem>>, vector<1x128xf32>
    %115 = arith.mulf %109, %113 : vector<1x128xf32>
    %116 = arith.subf %114, %115 : vector<1x128xf32>
    %117 = vector.broadcast %113 : vector<1x128xf32> to vector<256x128xf32>
    %118 = arith.mulf %87, %117 : vector<256x128xf32>
    %119 = vector.broadcast %116 : vector<1x128xf32> to vector<256x128xf32>
    %120 = arith.addf %118, %119 : vector<256x128xf32>
    %cst_88 = arith.constant 0.000000e+00 : f32
    %121 = vector.broadcast %cst_88 : f32 to vector<256x128xf32>
    %122 = arith.subf %121, %120 : vector<256x128xf32>
    %123 = math.exp %122 : vector<256x128xf32>
    %cst_89 = arith.constant 1.000000e+00 : f32
    %124 = vector.broadcast %cst_89 : f32 to vector<256x128xf32>
    %125 = arith.addf %124, %123 : vector<256x128xf32>
    %126 = tpu.reciprocal %125 {approx = true} : vector<256x128xf32> -> vector<256x128xf32>
    %127 = arith.mulf %120, %126 : vector<256x128xf32>
    %c0_90 = arith.constant 0 : index
    %c0_91 = arith.constant 0 : index
    %c0_92 = arith.constant 0 : index
    %128 = vector.load %arg8[%c0_90, %c0_91, %c0_92] : memref<1x256x128xf32, #tpu.memory_space<vmem>>, vector<1x256x128xf32>
    %129 = vector.shape_cast %128 : vector<1x256x128xf32> to vector<256x128xf32>
    %130 = vector.shape_cast %127 : vector<256x128xf32> to vector<1x256x128xf32>
    tpu.vector_store %arg8[%c0_90, %c0_91, %c0_92], %130 {strides = array<i32>} : memref<1x256x128xf32, #tpu.memory_space<vmem>>, vector<1x256x128xf32>,
    return
  }
  func.func @transform_0(%arg0: i32) -> (i32, i32, i32) {
    %c0_i32 = arith.constant 0 : i32
    %c0_i32_0 = arith.constant 0 : i32
    %c0_i32_1 = arith.constant 0 : i32
    return %arg0, %c0_i32, %c0_i32_0 : i32, i32, i32
  }
  func.func @transform_1(%arg0: i32) -> (i32, i32, i32) {
    %c0_i32 = arith.constant 0 : i32
    %c0_i32_0 = arith.constant 0 : i32
    %c0_i32_1 = arith.constant 0 : i32
    %c0_i32_2 = arith.constant 0 : i32
    return %c0_i32, %c0_i32_0, %c0_i32_1 : i32, i32, i32
  }
  func.func @transform_2(%arg0: i32) -> (i32, i32) {
    %c0_i32 = arith.constant 0 : i32
    %c0_i32_0 = arith.constant 0 : i32
    %c0_i32_1 = arith.constant 0 : i32
    return %c0_i32, %c0_i32_0 : i32, i32
  }
  func.func @transform_3(%arg0: i32) -> (i32, i32) {
    %c0_i32 = arith.constant 0 : i32
    %c0_i32_0 = arith.constant 0 : i32
    %c0_i32_1 = arith.constant 0 : i32
    return %c0_i32, %c0_i32_0 : i32, i32
  }
  func.func @transform_4(%arg0: i32) -> (i32, i32, i32) {
    %c0_i32 = arith.constant 0 : i32
    %c0_i32_0 = arith.constant 0 : i32
    %c0_i32_1 = arith.constant 0 : i32
    %c0_i32_2 = arith.constant 0 : i32
    return %c0_i32, %c0_i32_0, %c0_i32_1 : i32, i32, i32
  }
  func.func @transform_5(%arg0: i32) -> (i32, i32) {
    %c0_i32 = arith.constant 0 : i32
    %c0_i32_0 = arith.constant 0 : i32
    %c0_i32_1 = arith.constant 0 : i32
    return %c0_i32, %c0_i32_0 : i32, i32
  }
  func.func @transform_6(%arg0: i32) -> (i32, i32) {
    %c0_i32 = arith.constant 0 : i32
    %c0_i32_0 = arith.constant 0 : i32
    %c0_i32_1 = arith.constant 0 : i32
    return %c0_i32, %c0_i32_0 : i32, i32
  }
  func.func @transform_7(%arg0: i32) -> (i32, i32, i32) {
    %c0_i32 = arith.constant 0 : i32
    %c0_i32_0 = arith.constant 0 : i32
    %c0_i32_1 = arith.constant 0 : i32
    return %arg0, %c0_i32, %c0_i32_0 : i32, i32, i32
  }
}

</mosaic_0001>

<llo_original>
// kernel: tpu_custom_call.1
$region0: #{tpu_custom_call.1}
  #allocation0 [shape = 'u32[]', space=smem, size = 0x4, offset = 0x4, fixed_abs, tag = 'smem constant byte address 0x4 - core index']
  #allocation1 [shape = 'u32[144,128]{1,0:T(1,128)}', space=vmem, size = 0x12000, scoped, tag = 'internal scratch']
  %s0 = inlined_call_operand.vmem [shape: f32[2,290,128], index: 0, kind: input, shape index: {}]
  %s1 = inlined_call_operand.vmem [shape: bf16[9,128,128], index: 1, kind: input, shape index: {}]
  %s2 = inlined_call_operand.vmem [shape: f32[1,128], index: 2, kind: input, shape index: {}]
  %s3 = inlined_call_operand.vmem [shape: f32[1,128], index: 3, kind: input, shape index: {}]
  %s4 = inlined_call_operand.vmem [shape: f32[2,256,1], index: 4, kind: input, shape index: {}]
  %s5 = inlined_call_operand.vmem [shape: f32[128,8], index: 5, kind: input, shape index: {}]
  %s6 = inlined_call_operand.vmem [shape: f32[8,128], index: 6, kind: input, shape index: {}]
  %s7 = inlined_call_operand.hbm [shape: f32[2,256,128], index: 7, kind: output, shape index: {}]
  %s8 = sld [smem:[#allocation0]]
  $region61: #{tpu_custom_call.1} parent=0
    _
  %s10 = ssub.s32 1, %s8
  %s11 = scalar_select 0, %s10, %s8
  $region1: #{tpu_custom_call.1} parent=0
    #allocation2 [shape = 'u8[262144]{0}', space=vmem, size = 0x40000, scoped, tag = 'output window, operand 0']
    #allocation3 [shape = 's32[2]{0}', space=sflag, size = 0x8, scoped, tag = 'scoped memory for tpu_custom_call.1']
    %12 = vsyncpa [#allocation3], 0
    %s13 = scalar_lea.sflag [#allocation3], 1
    %14 = vsyncpa %s13, 0
    loop: start=0, step=1, limit=4
    $region2: #{tpu_custom_call.1} parent=1 // loop_pre_header
      _
    $region3: #{tpu_custom_call.1} parent=1 // loop_header
      %s16 = sphi 0, %s20
      %p17 = scmp.ge.s32.totalorder %s16, 4
      %s26 = sphi 0, %s28
      %s29 = sphi 0, %s26
      %s30 = sphi 0, %s29
      %s46 = sphi 0, %s30
      %s50 = sphi 0, %s50
      %s52 = sphi 0, %s50
      %s53 = sphi 0, %s52
      %s67 = sphi 0, %s53
      %s71 = sphi 0, %s71
      %s73 = sphi 0, %s71
      %s74 = sphi 0, %s73
      %s88 = sphi 0, %s74
      %s92 = sphi 0, %s92
      %s94 = sphi 0, %s92
      %s95 = sphi 0, %s94
      %s109 = sphi 0, %s95
      %s113 = sphi 0, %s113
      %s115 = sphi 0, %s113
      %s116 = sphi 0, %s115
      %s130 = sphi 0, %s116
      %s134 = sphi 0, %s134
      %s136 = sphi 0, %s134
      %s137 = sphi 0, %s136
      %s151 = sphi 0, %s137
      %s155 = sphi 0, %s155
      %s157 = sphi 0, %s155
      %s158 = sphi 0, %s157
      %s172 = sphi 0, %s158
      %s178 = sphi 0, %s180
      %s181 = sphi 0, %s178
      %s182 = sphi 0, %s181
      %s198 = sphi 0, %s182
    $region4: #{tpu_custom_call.1} parent=1 // loop_header_branch
      %19 = sbr.rel (%p17) target = $region8
    $region5: #{tpu_custom_call.1} parent=1 // loop_body
      %s21 = ssub.s32 %s16, 1
      %s22 = ssub.s32 %s16, 2
      %s23 = sadd.s32 %s16, 1
      %s24 = ssub.s32 %s16, %s23
      %p25 = scmp.eq.s32.totalorder %s24, 0
      %s27 = sadd.s32 %s26, 1
      %s28 = scalar_select %p25, %s26, %s27
      %p31 = pneg %p25
      %p32 = scmp.eq.s32.totalorder %s16, 1
      %p33 = por %p31, %p32
      %p34 = scmp.ne.s32.totalorder %s26, %s29
      %p35 = scmp.eq.s32.totalorder %s16, 0
      %p36 = por %p34, %p35
      %p37 = scmp.ne.s32.totalorder %s26, %s29
      %p38 = scmp.eq.s32.totalorder %s21, 1
      %p39 = por %p37, %p38
      %p40 = scmp.ne.s32.totalorder %s29, %s30
      %p41 = scmp.eq.s32.totalorder %s21, 0
      %p42 = por %p40, %p41
      %p43 = scmp.ne.s32.totalorder %s29, %s30
      %p44 = scmp.eq.s32.totalorder %s22, 1
      %p45 = por %p43, %p44
      %p47 = scmp.ne.s32.totalorder %s30, %s46
      %p48 = scmp.eq.s32.totalorder %s22, 0
      %p49 = por %p47, %p48
      %s51 = sadd.s32 %s50, 1
      %p54 = scmp.eq.s32.totalorder %s16, 1
      %p55 = scmp.ne.s32.totalorder %s50, %s52
      %p56 = scmp.eq.s32.totalorder %s16, 0
      %p57 = por %p55, %p56
      %p58 = scmp.ne.s32.totalorder %s50, %s52
      %p59 = scmp.eq.s32.totalorder %s21, 1
      %p60 = por %p58, %p59
      %p61 = scmp.ne.s32.totalorder %s52, %s53
      %p62 = scmp.eq.s32.totalorder %s21, 0
      %p63 = por %p61, %p62
      %p64 = scmp.ne.s32.totalorder %s52, %s53
      %p65 = scmp.eq.s32.totalorder %s22, 1
      %p66 = por %p64, %p65
      %p68 = scmp.ne.s32.totalorder %s53, %s67
      %p69 = scmp.eq.s32.totalorder %s22, 0
      %p70 = por %p68, %p69
      %s72 = sadd.s32 %s71, 1
      %p75 = scmp.eq.s32.totalorder %s16, 1
      %p76 = scmp.ne.s32.totalorder %s71, %s73
      %p77 = scmp.eq.s32.totalorder %s16, 0
      %p78 = por %p76, %p77
      %p79 = scmp.ne.s32.totalorder %s71, %s73
      %p80 = scmp.eq.s32.totalorder %s21, 1
      %p81 = por %p79, %p80
      %p82 = scmp.ne.s32.totalorder %s73, %s74
      %p83 = scmp.eq.s32.totalorder %s21, 0
      %p84 = por %p82, %p83
      %p85 = scmp.ne.s32.totalorder %s73, %s74
      %p86 = scmp.eq.s32.totalorder %s22, 1
      %p87 = por %p85, %p86
      %p89 = scmp.ne.s32.totalorder %s74, %s88
      %p90 = scmp.eq.s32.totalorder %s22, 0
      %p91 = por %p89, %p90
      %s93 = sadd.s32 %s92, 1
      %p96 = scmp.eq.s32.totalorder %s16, 1
      %p97 = scmp.ne.s32.totalorder %s92, %s94
      %p98 = scmp.eq.s32.totalorder %s16, 0
      %p99 = por %p97, %p98
      %p100 = scmp.ne.s32.totalorder %s92, %s94
      %p101 = scmp.eq.s32.totalorder %s21, 1
      %p102 = por %p100, %p101
      %p103 = scmp.ne.s32.totalorder %s94, %s95
      %p104 = scmp.eq.s32.totalorder %s21, 0
      %p105 = por %p103, %p104
      %p106 = scmp.ne.s32.totalorder %s94, %s95
      %p107 = scmp.eq.s32.totalorder %s22, 1
      %p108 = por %p106, %p107
      %p110 = scmp.ne.s32.totalorder %s95, %s109
      %p111 = scmp.eq.s32.totalorder %s22, 0
      %p112 = por %p110, %p111
      %s114 = sadd.s32 %s113, 1
      %p117 = scmp.eq.s32.totalorder %s16, 1
      %p118 = scmp.ne.s32.totalorder %s113, %s115
      %p119 = scmp.eq.s32.totalorder %s16, 0
      %p120 = por %p118, %p119
      %p121 = scmp.ne.s32.totalorder %s113, %s115
      %p122 = scmp.eq.s32.totalorder %s21, 1
      %p123 = por %p121, %p122
      %p124 = scmp.ne.s32.totalorder %s115, %s116
      %p125 = scmp.eq.s32.totalorder %s21, 0
      %p126 = por %p124, %p125
      %p127 = scmp.ne.s32.totalorder %s115, %s116
      %p128 = scmp.eq.s32.totalorder %s22, 1
      %p129 = por %p127, %p128
      %p131 = scmp.ne.s32.totalorder %s116, %s130
      %p132 = scmp.eq.s32.totalorder %s22, 0
      %p133 = por %p131, %p132
      %s135 = sadd.s32 %s134, 1
      %p138 = scmp.eq.s32.totalorder %s16, 1
      %p139 = scmp.ne.s32.totalorder %s134, %s136
      %p140 = scmp.eq.s32.totalorder %s16, 0
      %p141 = por %p139, %p140
      %p142 = scmp.ne.s32.totalorder %s134, %s136
      %p143 = scmp.eq.s32.totalorder %s21, 1
      %p144 = por %p142, %p143
      %p145 = scmp.ne.s32.totalorder %s136, %s137
      %p146 = scmp.eq.s32.totalorder %s21, 0
      %p147 = por %p145, %p146
      %p148 = scmp.ne.s32.totalorder %s136, %s137
      %p149 = scmp.eq.s32.totalorder %s22, 1
      %p150 = por %p148, %p149
      %p152 = scmp.ne.s32.totalorder %s137, %s151
      %p153 = scmp.eq.s32.totalorder %s22, 0
      %p154 = por %p152, %p153
      %s156 = sadd.s32 %s155, 1
      %p159 = scmp.eq.s32.totalorder %s16, 1
      %p160 = scmp.ne.s32.totalorder %s155, %s157
      %p161 = scmp.eq.s32.totalorder %s16, 0
      %p162 = por %p160, %p161
      %p163 = scmp.ne.s32.totalorder %s155, %s157
      %p164 = scmp.eq.s32.totalorder %s21, 1
      %p165 = por %p163, %p164
      %p166 = scmp.ne.s32.totalorder %s157, %s158
      %p167 = scmp.eq.s32.totalorder %s21, 0
      %p168 = por %p166, %p167
      %p169 = scmp.ne.s32.totalorder %s157, %s158
      %p170 = scmp.eq.s32.totalorder %s22, 1
      %p171 = por %p169, %p170
      %p173 = scmp.ne.s32.totalorder %s158, %s172
      %p174 = scmp.eq.s32.totalorder %s22, 0
      %p175 = por %p173, %p174
      %s176 = ssub.s32 %s16, %s23
      %p177 = scmp.eq.s32.totalorder %s176, 0
      %s179 = sadd.s32 %s178, 1
      %s180 = scalar_select %p177, %s178, %s179
      %p183 = pneg %p177
      %p184 = scmp.eq.s32.totalorder %s16, 1
      %p185 = por %p183, %p184
      %p186 = scmp.ne.s32.totalorder %s178, %s181
      %p187 = scmp.eq.s32.totalorder %s16, 0
      %p188 = por %p186, %p187
      %p189 = scmp.ne.s32.totalorder %s178, %s181
      %p190 = scmp.eq.s32.totalorder %s21, 1
      %p191 = por %p189, %p190
      %p192 = scmp.ne.s32.totalorder %s181, %s182
      %p193 = scmp.eq.s32.totalorder %s21, 0
      %p194 = por %p192, %p193
      %p195 = scmp.ne.s32.totalorder %s181, %s182
      %p196 = scmp.eq.s32.totalorder %s22, 1
      %p197 = por %p195, %p196
      %p199 = scmp.ne.s32.totalorder %s182, %s198
      %p200 = scmp.eq.s32.totalorder %s22, 0
      %p201 = por %p199, %p200
      %p202 = scmp.le.s32.totalorder 1, %s16
      %p203 = scmp.lt.s32.totalorder %s16, 3
      %p204 = pnand %p202, %p203
      %p205 = pneg %p204
      // Predicated region
      $region9: #{tpu_custom_call.1} parent=5 // pred_check
        _
      $region10: #{tpu_custom_call.1} parent=5 // pred_check_branch
        %207 = sbr.rel (%p204) target = $region12
      $region11: #{tpu_custom_call.1} parent=5 // pred_region
        %s208 = ssub.s32 %s16, 1
        // Predicated region
        $region13: #{tpu_custom_call.1} parent=11 // pred_check
          %p209 = pneg %p63
        $region14: #{tpu_custom_call.1} parent=11 // pred_check_branch
          %211 = sbr.rel (%p209) target = $region16
        $region15: #{tpu_custom_call.1} parent=11 // pred_region
          _
        $region16: #{tpu_custom_call.1} parent=11 // pred_fallthru
          _
        // Predicated region
        $region17: #{tpu_custom_call.1} parent=11 // pred_check
          %p212 = pneg %p84
        $region18: #{tpu_custom_call.1} parent=11 // pred_check_branch
          %214 = sbr.rel (%p212) target = $region20
        $region19: #{tpu_custom_call.1} parent=11 // pred_region
          _
        $region20: #{tpu_custom_call.1} parent=11 // pred_fallthru
          _
        // Predicated region
        $region21: #{tpu_custom_call.1} parent=11 // pred_check
          %p215 = pneg %p105
        $region22: #{tpu_custom_call.1} parent=11 // pred_check_branch
          %217 = sbr.rel (%p215) target = $region24
        $region23: #{tpu_custom_call.1} parent=11 // pred_region
          _
        $region24: #{tpu_custom_call.1} parent=11 // pred_fallthru
          _
        // Predicated region
        $region25: #{tpu_custom_call.1} parent=11 // pred_check
          %p218 = pneg %p126
        $region26: #{tpu_custom_call.1} parent=11 // pred_check_branch
          %220 = sbr.rel (%p218) target = $region28
        $region27: #{tpu_custom_call.1} parent=11 // pred_region
          _
        $region28: #{tpu_custom_call.1} parent=11 // pred_fallthru
          _
        // Predicated region
        $region29: #{tpu_custom_call.1} parent=11 // pred_check
          %p221 = pneg %p147
        $region30: #{tpu_custom_call.1} parent=11 // pred_check_branch
          %223 = sbr.rel (%p221) target = $region32
        $region31: #{tpu_custom_call.1} parent=11 // pred_region
          _
        $region32: #{tpu_custom_call.1} parent=11 // pred_fallthru
          _
        // Predicated region
        $region33: #{tpu_custom_call.1} parent=11 // pred_check
          %p224 = pneg %p168
        $region34: #{tpu_custom_call.1} parent=11 // pred_check_branch
          %226 = sbr.rel (%p224) target = $region36
        $region35: #{tpu_custom_call.1} parent=11 // pred_region
          _
        $region36: #{tpu_custom_call.1} parent=11 // pred_fallthru
          _
      $region12: #{tpu_custom_call.1} parent=5 // pred_fallthru
        _
      %p227 = scmp.lt.s32.totalorder %s16, 2
      // Predicated region
      $region37: #{tpu_custom_call.1} parent=5 // pred_check
        %p228 = pneg %p227
      $region38: #{tpu_custom_call.1} parent=5 // pred_check_branch
        %230 = sbr.rel (%p228) target = $region40
      $region39: #{tpu_custom_call.1} parent=5 // pred_region
        // Predicated region
        $region41: #{tpu_custom_call.1} parent=39 // pred_check
          %p231 = pneg %p36
        $region42: #{tpu_custom_call.1} parent=39 // pred_check_branch
          %233 = sbr.rel (%p231) target = $region44
        $region43: #{tpu_custom_call.1} parent=39 // pred_region
          %p234 = scmp.lt.s32.totalorder %s16, 1
          %s235 = scalar_select %p234, %s16, 1
          %s236 = smul.addr %s235, 37
          %s237 = smul.addr %s236, 8
          %s238 = scalar_lea.vmem %s0, %s237
        $region44: #{tpu_custom_call.1} parent=39 // pred_fallthru
          _
      $region40: #{tpu_custom_call.1} parent=5 // pred_fallthru
        _
      %p239 = scmp.le.s32.totalorder 1, %s16
      %p240 = scmp.lt.s32.totalorder %s16, 3
      %p241 = pnand %p239, %p240
      %p242 = pneg %p241
      // Predicated region
      $region45: #{tpu_custom_call.1} parent=5 // pred_check
        _
      $region46: #{tpu_custom_call.1} parent=5 // pred_check_branch
        %244 = sbr.rel (%p241) target = $region48
      $region47: #{tpu_custom_call.1} parent=5 // pred_region
        %s245 = ssub.s32 %s16, 1
        %p246 = scmp.lt.s32.totalorder %s21, 1
        %s247 = scalar_select %p246, %s21, 1
        %s248 = smul.addr %s247, 37
        %s249 = smul.addr %s248, 8
        %s250 = scalar_lea.vmem %s0, %s249
        %p251 = pneg %p42
        %p252 = pneg %p39
        %p253 = pneg %p63
        %p254 = pneg %p60
        %p255 = pneg %p84
        %p256 = pneg %p81
        %p257 = pneg %p105
        %p258 = pneg %p102
        %p259 = pneg %p126
        %p260 = pneg %p123
        %p261 = pneg %p147
        %p262 = pneg %p144
        %p263 = pneg %p168
        %p264 = pneg %p165
        %p265 = pneg %p194
        %p266 = pneg %p191
        %s267 = sand.u32 %s181, 1
        %s268 = scalar_lea.sflag [#allocation3], %s267
        %s269 = sand.u32 %s181, 1
        %s270 = smul.addr %s269, 256
        %s271 = scalar_lea.vmem [#allocation2], %s270
        %p272 = scmp.lt.s32.totalorder %s21, 1
        %s273 = scalar_select %p272, %s21, 1
        %s274 = smul.addr %s273, 37
        %s275 = smul.addr %s274, 8
        %s276 = scalar_lea.vmem %s0, %s275
        %v278 = vld [vmem:[%s276] sm:$0xff]
        %v279 = vld [vmem:[%s276 + $0x8] sm:$0xff]
        %v280 = vld [vmem:[%s276 + $0x10] sm:$0xff]
        %v281 = vld [vmem:[%s276 + $0x18] sm:$0xff]
        %v282 = vld [vmem:[%s276 + $0x20] sm:$0xff]
        %v283 = vld [vmem:[%s276 + $0x28] sm:$0xff]
        %v284 = vld [vmem:[%s276 + $0x30] sm:$0xff]
        %v285 = vld [vmem:[%s276 + $0x38] sm:$0xff]
        %v286 = vld [vmem:[%s276 + $0x40] sm:$0xff]
        %v287 = vld [vmem:[%s276 + $0x48] sm:$0xff]
        %v288 = vld [vmem:[%s276 + $0x50] sm:$0xff]
        %v289 = vld [vmem:[%s276 + $0x58] sm:$0xff]
        %v290 = vld [vmem:[%s276 + $0x60] sm:$0xff]
        %v291 = vld [vmem:[%s276 + $0x68] sm:$0xff]
        %v292 = vld [vmem:[%s276 + $0x70] sm:$0xff]
        %v293 = vld [vmem:[%s276 + $0x78] sm:$0xff]
        %v294 = vld [vmem:[%s276 + $0x80] sm:$0xff]
        %v295 = vld [vmem:[%s276 + $0x88] sm:$0xff]
        %v296 = vld [vmem:[%s276 + $0x90] sm:$0xff]
        %v297 = vld [vmem:[%s276 + $0x98] sm:$0xff]
        %v298 = vld [vmem:[%s276 + $0xa0] sm:$0xff]
        %v299 = vld [vmem:[%s276 + $0xa8] sm:$0xff]
        %v300 = vld [vmem:[%s276 + $0xb0] sm:$0xff]
        %v301 = vld [vmem:[%s276 + $0xb8] sm:$0xff]
        %v302 = vld [vmem:[%s276 + $0xc0] sm:$0xff]
        %v303 = vld [vmem:[%s276 + $0xc8] sm:$0xff]
        %v304 = vld [vmem:[%s276 + $0xd0] sm:$0xff]
        %v305 = vld [vmem:[%s276 + $0xd8] sm:$0xff]
        %v306 = vld [vmem:[%s276 + $0xe0] sm:$0xff]
        %v307 = vld [vmem:[%s276 + $0xe8] sm:$0xff]
        %v308 = vld [vmem:[%s276 + $0xf0] sm:$0xff]
        %v309 = vld [vmem:[%s276 + $0xf8] sm:$0xff]
        %v310 = vld [vmem:[%s4] sm:$0xff]
        %v311 = vld [vmem:[%s4 + $0x8] sm:$0xff]
        %v312 = vld [vmem:[%s4 + $0x10] sm:$0xff]
        %v313 = vld [vmem:[%s4 + $0x18] sm:$0xff]
        %v314 = vld [vmem:[%s4 + $0x20] sm:$0xff]
        %v315 = vld [vmem:[%s4 + $0x28] sm:$0xff]
        %v316 = vld [vmem:[%s4 + $0x30] sm:$0xff]
        %v317 = vld [vmem:[%s4 + $0x38] sm:$0xff]
        %v318 = vld [vmem:[%s4 + $0x40] sm:$0xff]
        %v319 = vld [vmem:[%s4 + $0x48] sm:$0xff]
        %v320 = vld [vmem:[%s4 + $0x50] sm:$0xff]
        %v321 = vld [vmem:[%s4 + $0x58] sm:$0xff]
        %v322 = vld [vmem:[%s4 + $0x60] sm:$0xff]
        %v323 = vld [vmem:[%s4 + $0x68] sm:$0xff]
        %v324 = vld [vmem:[%s4 + $0x70] sm:$0xff]
        %v325 = vld [vmem:[%s4 + $0x78] sm:$0xff]
        %v326 = vld [vmem:[%s4 + $0x80] sm:$0xff]
        %v327 = vld [vmem:[%s4 + $0x88] sm:$0xff]
        %v328 = vld [vmem:[%s4 + $0x90] sm:$0xff]
        %v329 = vld [vmem:[%s4 + $0x98] sm:$0xff]
        %v330 = vld [vmem:[%s4 + $0xa0] sm:$0xff]
        %v331 = vld [vmem:[%s4 + $0xa8] sm:$0xff]
        %v332 = vld [vmem:[%s4 + $0xb0] sm:$0xff]
        %v333 = vld [vmem:[%s4 + $0xb8] sm:$0xff]
        %v334 = vld [vmem:[%s4 + $0xc0] sm:$0xff]
        %v335 = vld [vmem:[%s4 + $0xc8] sm:$0xff]
        %v336 = vld [vmem:[%s4 + $0xd0] sm:$0xff]
        %v337 = vld [vmem:[%s4 + $0xd8] sm:$0xff]
        %v338 = vld [vmem:[%s4 + $0xe0] sm:$0xff]
        %v339 = vld [vmem:[%s4 + $0xe8] sm:$0xff]
        %v340 = vld [vmem:[%s4 + $0xf0] sm:$0xff]
        %v341 = vld [vmem:[%s4 + $0xf8] sm:$0xff]
        %343 = vset.pattern.permute.xlu0 0
        %344 = vperm.xlu0 %343, %v310
        %v345 = vpop.permute.xlu0 %344
        %348 = vset.pattern.permute.xlu0 0
        %349 = vperm.xlu0 %348, %v311
        %v350 = vpop.permute.xlu0 %349
        %353 = vset.pattern.permute.xlu0 0
        %354 = vperm.xlu0 %353, %v312
        %v355 = vpop.permute.xlu0 %354
        %358 = vset.pattern.permute.xlu0 0
        %359 = vperm.xlu0 %358, %v313
        %v360 = vpop.permute.xlu0 %359
        %363 = vset.pattern.permute.xlu0 0
        %364 = vperm.xlu0 %363, %v314
        %v365 = vpop.permute.xlu0 %364
        %368 = vset.pattern.permute.xlu0 0
        %369 = vperm.xlu0 %368, %v315
        %v370 = vpop.permute.xlu0 %369
        %373 = vset.pattern.permute.xlu0 0
        %374 = vperm.xlu0 %373, %v316
        %v375 = vpop.permute.xlu0 %374
        %378 = vset.pattern.permute.xlu0 0
        %379 = vperm.xlu0 %378, %v317
        %v380 = vpop.permute.xlu0 %379
        %383 = vset.pattern.permute.xlu0 0
        %384 = vperm.xlu0 %383, %v318
        %v385 = vpop.permute.xlu0 %384
        %388 = vset.pattern.permute.xlu0 0
        %389 = vperm.xlu0 %388, %v319
        %v390 = vpop.permute.xlu0 %389
        %393 = vset.pattern.permute.xlu0 0
        %394 = vperm.xlu0 %393, %v320
        %v395 = vpop.permute.xlu0 %394
        %398 = vset.pattern.permute.xlu0 0
        %399 = vperm.xlu0 %398, %v321
        %v400 = vpop.permute.xlu0 %399
        %403 = vset.pattern.permute.xlu0 0
        %404 = vperm.xlu0 %403, %v322
        %v405 = vpop.permute.xlu0 %404
        %408 = vset.pattern.permute.xlu0 0
        %409 = vperm.xlu0 %408, %v323
        %v410 = vpop.permute.xlu0 %409
        %413 = vset.pattern.permute.xlu0 0
        %414 = vperm.xlu0 %413, %v324
        %v415 = vpop.permute.xlu0 %414
        %418 = vset.pattern.permute.xlu0 0
        %419 = vperm.xlu0 %418, %v325
        %v420 = vpop.permute.xlu0 %419
        %423 = vset.pattern.permute.xlu0 0
        %424 = vperm.xlu0 %423, %v326
        %v425 = vpop.permute.xlu0 %424
        %428 = vset.pattern.permute.xlu0 0
        %429 = vperm.xlu0 %428, %v327
        %v430 = vpop.permute.xlu0 %429
        %433 = vset.pattern.permute.xlu0 0
        %434 = vperm.xlu0 %433, %v328
        %v435 = vpop.permute.xlu0 %434
        %438 = vset.pattern.permute.xlu0 0
        %439 = vperm.xlu0 %438, %v329
        %v440 = vpop.permute.xlu0 %439
        %443 = vset.pattern.permute.xlu0 0
        %444 = vperm.xlu0 %443, %v330
        %v445 = vpop.permute.xlu0 %444
        %448 = vset.pattern.permute.xlu0 0
        %449 = vperm.xlu0 %448, %v331
        %v450 = vpop.permute.xlu0 %449
        %453 = vset.pattern.permute.xlu0 0
        %454 = vperm.xlu0 %453, %v332
        %v455 = vpop.permute.xlu0 %454
        %458 = vset.pattern.permute.xlu0 0
        %459 = vperm.xlu0 %458, %v333
        %v460 = vpop.permute.xlu0 %459
        %463 = vset.pattern.permute.xlu0 0
        %464 = vperm.xlu0 %463, %v334
        %v465 = vpop.permute.xlu0 %464
        %468 = vset.pattern.permute.xlu0 0
        %469 = vperm.xlu0 %468, %v335
        %v470 = vpop.permute.xlu0 %469
        %473 = vset.pattern.permute.xlu0 0
        %474 = vperm.xlu0 %473, %v336
        %v475 = vpop.permute.xlu0 %474
        %478 = vset.pattern.permute.xlu0 0
        %479 = vperm.xlu0 %478, %v337
        %v480 = vpop.permute.xlu0 %479
        %483 = vset.pattern.permute.xlu0 0
        %484 = vperm.xlu0 %483, %v338
        %v485 = vpop.permute.xlu0 %484
        %488 = vset.pattern.permute.xlu0 0
        %489 = vperm.xlu0 %488, %v339
        %v490 = vpop.permute.xlu0 %489
        %493 = vset.pattern.permute.xlu0 0
        %494 = vperm.xlu0 %493, %v340
        %v495 = vpop.permute.xlu0 %494
        %498 = vset.pattern.permute.xlu0 0
        %499 = vperm.xlu0 %498, %v341
        %v500 = vpop.permute.xlu0 %499
        %v502 = vmul.f32 %v278, %v345
        %v503 = vmul.f32 %v279, %v350
        %v504 = vmul.f32 %v280, %v355
        %v505 = vmul.f32 %v281, %v360
        %v506 = vmul.f32 %v282, %v365
        %v507 = vmul.f32 %v283, %v370
        %v508 = vmul.f32 %v284, %v375
        %v509 = vmul.f32 %v285, %v380
        %v510 = vmul.f32 %v286, %v385
        %v511 = vmul.f32 %v287, %v390
        %v512 = vmul.f32 %v288, %v395
        %v513 = vmul.f32 %v289, %v400
        %v514 = vmul.f32 %v290, %v405
        %v515 = vmul.f32 %v291, %v410
        %v516 = vmul.f32 %v292, %v415
        %v517 = vmul.f32 %v293, %v420
        %v518 = vmul.f32 %v294, %v425
        %v519 = vmul.f32 %v295, %v430
        %v520 = vmul.f32 %v296, %v435
        %v521 = vmul.f32 %v297, %v440
        %v522 = vmul.f32 %v298, %v445
        %v523 = vmul.f32 %v299, %v450
        %v524 = vmul.f32 %v300, %v455
        %v525 = vmul.f32 %v301, %v460
        %v526 = vmul.f32 %v302, %v465
        %v527 = vmul.f32 %v303, %v470
        %v528 = vmul.f32 %v304, %v475
        %v529 = vmul.f32 %v305, %v480
        %v530 = vmul.f32 %v306, %v485
        %v531 = vmul.f32 %v307, %v490
        %v532 = vmul.f32 %v308, %v495
        %v533 = vmul.f32 %v309, %v500
        %v534 = vpack.c.bf16 %v503, %v502
        %v535 = vpack.c.bf16 %v505, %v504
        %v536 = vpack.c.bf16 %v507, %v506
        %v537 = vpack.c.bf16 %v509, %v508
        %v538 = vpack.c.bf16 %v511, %v510
        %v539 = vpack.c.bf16 %v513, %v512
        %v540 = vpack.c.bf16 %v515, %v514
        %v541 = vpack.c.bf16 %v517, %v516
        %v542 = vpack.c.bf16 %v519, %v518
        %v543 = vpack.c.bf16 %v521, %v520
        %v544 = vpack.c.bf16 %v523, %v522
        %v545 = vpack.c.bf16 %v525, %v524
        %v546 = vpack.c.bf16 %v527, %v526
        %v547 = vpack.c.bf16 %v529, %v528
        %v548 = vpack.c.bf16 %v531, %v530
        %v549 = vpack.c.bf16 %v533, %v532
        %v550 = vld [vmem:[%s1] sm:$0xf]
        %v551 = vld [vmem:[%s1 + $0x4] sm:$0xf]
        %v552 = vld [vmem:[%s1 + $0x8] sm:$0xf]
        %v553 = vld [vmem:[%s1 + $0xc] sm:$0xf]
        %v554 = vld [vmem:[%s1 + $0x10] sm:$0xf]
        %v555 = vld [vmem:[%s1 + $0x14] sm:$0xf]
        %v556 = vld [vmem:[%s1 + $0x18] sm:$0xf]
        %v557 = vld [vmem:[%s1 + $0x1c] sm:$0xf]
        %v558 = vld [vmem:[%s1 + $0x20] sm:$0xf]
        %v559 = vld [vmem:[%s1 + $0x24] sm:$0xf]
        %v560 = vld [vmem:[%s1 + $0x28] sm:$0xf]
        %v561 = vld [vmem:[%s1 + $0x2c] sm:$0xf]
        %v562 = vld [vmem:[%s1 + $0x30] sm:$0xf]
        %v563 = vld [vmem:[%s1 + $0x34] sm:$0xf]
        %v564 = vld [vmem:[%s1 + $0x38] sm:$0xf]
        %v565 = vld [vmem:[%s1 + $0x3c] sm:$0xf]
        %v566 = vld [vmem:[%s276 + $0x1] sm:$0xff]
        %v567 = vld [vmem:[%s276 + $0x9] sm:$0xff]
        %v568 = vld [vmem:[%s276 + $0x11] sm:$0xff]
        %v569 = vld [vmem:[%s276 + $0x19] sm:$0xff]
        %v570 = vld [vmem:[%s276 + $0x21] sm:$0xff]
        %v571 = vld [vmem:[%s276 + $0x29] sm:$0xff]
        %v572 = vld [vmem:[%s276 + $0x31] sm:$0xff]
        %v573 = vld [vmem:[%s276 + $0x39] sm:$0xff]
        %v574 = vld [vmem:[%s276 + $0x41] sm:$0xff]
        %v575 = vld [vmem:[%s276 + $0x49] sm:$0xff]
        %v576 = vld [vmem:[%s276 + $0x51] sm:$0xff]
        %v577 = vld [vmem:[%s276 + $0x59] sm:$0xff]
        %v578 = vld [vmem:[%s276 + $0x61] sm:$0xff]
        %v579 = vld [vmem:[%s276 + $0x69] sm:$0xff]
        %v580 = vld [vmem:[%s276 + $0x71] sm:$0xff]
        %v581 = vld [vmem:[%s276 + $0x79] sm:$0xff]
        %v582 = vld [vmem:[%s276 + $0x81] sm:$0xff]
        %v583 = vld [vmem:[%s276 + $0x89] sm:$0xff]
        %v584 = vld [vmem:[%s276 + $0x91] sm:$0xff]
        %v585 = vld [vmem:[%s276 + $0x99] sm:$0xff]
        %v586 = vld [vmem:[%s276 + $0xa1] sm:$0xff]
        %v587 = vld [vmem:[%s276 + $0xa9] sm:$0xff]
        %v588 = vld [vmem:[%s276 + $0xb1] sm:$0xff]
        %v589 = vld [vmem:[%s276 + $0xb9] sm:$0xff]
        %v590 = vld [vmem:[%s276 + $0xc1] sm:$0xff]
        %v591 = vld [vmem:[%s276 + $0xc9] sm:$0xff]
        %v592 = vld [vmem:[%s276 + $0xd1] sm:$0xff]
        %v593 = vld [vmem:[%s276 + $0xd9] sm:$0xff]
        %v594 = vld [vmem:[%s276 + $0xe1] sm:$0xff]
        %v595 = vld [vmem:[%s276 + $0xe9] sm:$0xff]
        %v596 = vld [vmem:[%s276 + $0xf1] sm:$0xff]
        %v597 = vld [vmem:[%s276 + $0xf9] sm:$0xff]
        %v598 = vpack.c.bf16 %v567, %v566
        %v599 = vpack.c.bf16 %v569, %v568
        %v600 = vpack.c.bf16 %v571, %v570
        %v601 = vpack.c.bf16 %v573, %v572
        %v602 = vpack.c.bf16 %v575, %v574
        %v603 = vpack.c.bf16 %v577, %v576
        %v604 = vpack.c.bf16 %v579, %v578
        %v605 = vpack.c.bf16 %v581, %v580
        %v606 = vpack.c.bf16 %v583, %v582
        %v607 = vpack.c.bf16 %v585, %v584
        %v608 = vpack.c.bf16 %v587, %v586
        %v609 = vpack.c.bf16 %v589, %v588
        %v610 = vpack.c.bf16 %v591, %v590
        %v611 = vpack.c.bf16 %v593, %v592
        %v612 = vpack.c.bf16 %v595, %v594
        %v613 = vpack.c.bf16 %v597, %v596
        %s614 = scalar_lea.vmem %s1, 64
        %v615 = vld [vmem:[%s614] sm:$0xf]
        %v616 = vld [vmem:[%s614 + $0x4] sm:$0xf]
        %v617 = vld [vmem:[%s614 + $0x8] sm:$0xf]
        %v618 = vld [vmem:[%s614 + $0xc] sm:$0xf]
        %v619 = vld [vmem:[%s614 + $0x10] sm:$0xf]
        %v620 = vld [vmem:[%s614 + $0x14] sm:$0xf]
        %v621 = vld [vmem:[%s614 + $0x18] sm:$0xf]
        %v622 = vld [vmem:[%s614 + $0x1c] sm:$0xf]
        %v623 = vld [vmem:[%s614 + $0x20] sm:$0xf]
        %v624 = vld [vmem:[%s614 + $0x24] sm:$0xf]
        %v625 = vld [vmem:[%s614 + $0x28] sm:$0xf]
        %v626 = vld [vmem:[%s614 + $0x2c] sm:$0xf]
        %v627 = vld [vmem:[%s614 + $0x30] sm:$0xf]
        %v628 = vld [vmem:[%s614 + $0x34] sm:$0xf]
        %v629 = vld [vmem:[%s614 + $0x38] sm:$0xf]
        %v630 = vld [vmem:[%s614 + $0x3c] sm:$0xf]
        %v647 = vunpack.c.l.b16 %v615
        %v648 = vunpack.c.l.b16 %v616
        %v649 = vunpack.c.l.b16 %v617
        %v650 = vunpack.c.l.b16 %v618
        %v651 = vunpack.c.l.b16 %v619
        %v652 = vunpack.c.l.b16 %v620
        %v653 = vunpack.c.l.b16 %v621
        %v654 = vunpack.c.l.b16 %v622
        %v655 = vunpack.c.l.b16 %v623
        %v656 = vunpack.c.l.b16 %v624
        %v657 = vunpack.c.l.b16 %v625
        %v658 = vunpack.c.l.b16 %v626
        %v659 = vunpack.c.l.b16 %v627
        %v660 = vunpack.c.l.b16 %v628
        %v661 = vunpack.c.l.b16 %v629
        %v662 = vunpack.c.l.b16 %v630
        %v663 = vpack.c.b16 %v648, %v647
        %v664 = vpack.c.b16 %v650, %v649
        %v665 = vpack.c.b16 %v652, %v651
        %v666 = vpack.c.b16 %v654, %v653
        %v667 = vpack.c.b16 %v656, %v655
        %v668 = vpack.c.b16 %v658, %v657
        %v669 = vpack.c.b16 %v660, %v659
        %v670 = vpack.c.b16 %v662, %v661
        %679 = vmatprep.subr.bf16.mxu0 0
        %680 = vmatpush1.bf16.msra.mxu0 %v670
        %681 = vmatprep.subr.bf16.mxu0 0
        %682 = vmatpush1.bf16.msra.mxu0 %v669
        %683 = vmatprep.subr.bf16.mxu0 0
        %684 = vmatpush1.bf16.msra.mxu0 %v668
        %685 = vmatprep.subr.bf16.mxu0 0
        %686 = vmatpush1.bf16.msra.mxu0 %v667
        %687 = vmatprep.subr.bf16.mxu0 0
        %688 = vmatpush1.bf16.msra.mxu0 %v666
        %689 = vmatprep.subr.bf16.mxu0 0
        %690 = vmatpush1.bf16.msra.mxu0 %v665
        %691 = vmatprep.subr.bf16.mxu0 0
        %692 = vmatpush1.bf16.msra.mxu0 %v664
        %693 = vmatprep.subr.bf16.mxu0 0
        %694 = vmatpush1.bf16.msra.mxu0 %v663
        %695 = vmatprep.subr.bf16.mxu0 0
        %696 = vmatpush2.bf16.msra.mxu0 0
        %697 = vmatprep.subr.bf16.mxu0 0
        %698 = vmatpush2.bf16.msra.mxu0 0
        %699 = vmatprep.subr.bf16.mxu0 0
        %700 = vmatpush2.bf16.msra.mxu0 0
        %701 = vmatprep.subr.bf16.mxu0 0
        %702 = vmatpush2.bf16.msra.mxu0 0
        %703 = vmatprep.subr.bf16.mxu0 0
        %704 = vmatpush2.bf16.msra.mxu0 0
        %705 = vmatprep.subr.bf16.mxu0 0
        %706 = vmatpush2.bf16.msra.mxu0 0
        %707 = vmatprep.subr.bf16.mxu0 0
        %708 = vmatpush2.bf16.msra.mxu0 0
        %709 = vmatprep.subr.bf16.mxu0 0
        %710 = vmatpush2.bf16.msra.mxu0 0
        %711 = vmatprep.mubr.bf16.mxu0 0
        %712 = vmatmul.mubr.bf16.gmra.mxu0 %v598
        %v713 = vpop.f32.mrf.mxu0
        %v714 = vadd.f32 0.0, %v713
        %v715 = vpop.f32.mrf.mxu0
        %v716 = vpop.f32.mrf.mxu0
        %v717 = vadd.f32 0.0, %v716
        %v718 = vpop.f32.mrf.mxu0
        %719 = vmatprep.mubr.bf16.mxu0 0
        %720 = vmatmul.mubr.bf16.gmra.mxu0 %v599
        %v721 = vpop.f32.mrf.mxu0
        %v722 = vadd.f32 0.0, %v721
        %v723 = vpop.f32.mrf.mxu0
        %v724 = vpop.f32.mrf.mxu0
        %v725 = vadd.f32 0.0, %v724
        %v726 = vpop.f32.mrf.mxu0
        %727 = vmatprep.mubr.bf16.mxu0 0
        %728 = vmatmul.mubr.bf16.gmra.mxu0 %v600
        %v729 = vpop.f32.mrf.mxu0
        %v730 = vadd.f32 0.0, %v729
        %v731 = vpop.f32.mrf.mxu0
        %v732 = vpop.f32.mrf.mxu0
        %v733 = vadd.f32 0.0, %v732
        %v734 = vpop.f32.mrf.mxu0
        %735 = vmatprep.mubr.bf16.mxu0 0
        %736 = vmatmul.mubr.bf16.gmra.mxu0 %v601
        %v737 = vpop.f32.mrf.mxu0
        %v738 = vadd.f32 0.0, %v737
        %v739 = vpop.f32.mrf.mxu0
        %v740 = vpop.f32.mrf.mxu0
        %v741 = vadd.f32 0.0, %v740
        %v742 = vpop.f32.mrf.mxu0
        %743 = vmatprep.mubr.bf16.mxu0 0
        %744 = vmatmul.mubr.bf16.gmra.mxu0 %v602
        %v745 = vpop.f32.mrf.mxu0
        %v746 = vadd.f32 0.0, %v745
        %v747 = vpop.f32.mrf.mxu0
        %v748 = vpop.f32.mrf.mxu0
        %v749 = vadd.f32 0.0, %v748
        %v750 = vpop.f32.mrf.mxu0
        %751 = vmatprep.mubr.bf16.mxu0 0
        %752 = vmatmul.mubr.bf16.gmra.mxu0 %v603
        %v753 = vpop.f32.mrf.mxu0
        %v754 = vadd.f32 0.0, %v753
        %v755 = vpop.f32.mrf.mxu0
        %v756 = vpop.f32.mrf.mxu0
        %v757 = vadd.f32 0.0, %v756
        %v758 = vpop.f32.mrf.mxu0
        %759 = vmatprep.mubr.bf16.mxu0 0
        %760 = vmatmul.mubr.bf16.gmra.mxu0 %v604
        %v761 = vpop.f32.mrf.mxu0
        %v762 = vadd.f32 0.0, %v761
        %v763 = vpop.f32.mrf.mxu0
        %v764 = vpop.f32.mrf.mxu0
        %v765 = vadd.f32 0.0, %v764
        %v766 = vpop.f32.mrf.mxu0
        %767 = vmatprep.mubr.bf16.mxu0 0
        %768 = vmatmul.mubr.bf16.gmra.mxu0 %v605
        %v769 = vpop.f32.mrf.mxu0
        %v770 = vadd.f32 0.0, %v769
        %v771 = vpop.f32.mrf.mxu0
        %v772 = vpop.f32.mrf.mxu0
        %v773 = vadd.f32 0.0, %v772
        %v774 = vpop.f32.mrf.mxu0
        %775 = vmatprep.mubr.bf16.mxu0 0
        %776 = vmatmul.mubr.bf16.gmra.mxu0 %v606
        %v777 = vpop.f32.mrf.mxu0
        %v778 = vadd.f32 0.0, %v777
        %v779 = vpop.f32.mrf.mxu0
        %v780 = vpop.f32.mrf.mxu0
        %v781 = vadd.f32 0.0, %v780
        %v782 = vpop.f32.mrf.mxu0
        %783 = vmatprep.mubr.bf16.mxu0 0
        %784 = vmatmul.mubr.bf16.gmra.mxu0 %v607
        %v785 = vpop.f32.mrf.mxu0
        %v786 = vadd.f32 0.0, %v785
        %v787 = vpop.f32.mrf.mxu0
        %v788 = vpop.f32.mrf.mxu0
        %v789 = vadd.f32 0.0, %v788
        %v790 = vpop.f32.mrf.mxu0
        %791 = vmatprep.mubr.bf16.mxu0 0
        %792 = vmatmul.mubr.bf16.gmra.mxu0 %v608
        %v793 = vpop.f32.mrf.mxu0
        %v794 = vadd.f32 0.0, %v793
        %v795 = vpop.f32.mrf.mxu0
        %v796 = vpop.f32.mrf.mxu0
        %v797 = vadd.f32 0.0, %v796
        %v798 = vpop.f32.mrf.mxu0
        %799 = vmatprep.mubr.bf16.mxu0 0
        %800 = vmatmul.mubr.bf16.gmra.mxu0 %v609
        %v801 = vpop.f32.mrf.mxu0
        %v802 = vadd.f32 0.0, %v801
        %v803 = vpop.f32.mrf.mxu0
        %v804 = vpop.f32.mrf.mxu0
        %v805 = vadd.f32 0.0, %v804
        %v806 = vpop.f32.mrf.mxu0
        %807 = vmatprep.mubr.bf16.mxu0 0
        %808 = vmatmul.mubr.bf16.gmra.mxu0 %v610
        %v809 = vpop.f32.mrf.mxu0
        %v810 = vadd.f32 0.0, %v809
        %v811 = vpop.f32.mrf.mxu0
        %v812 = vpop.f32.mrf.mxu0
        %v813 = vadd.f32 0.0, %v812
        %v814 = vpop.f32.mrf.mxu0
        %815 = vmatprep.mubr.bf16.mxu0 0
        %816 = vmatmul.mubr.bf16.gmra.mxu0 %v611
        %v817 = vpop.f32.mrf.mxu0
        %v818 = vadd.f32 0.0, %v817
        %v819 = vpop.f32.mrf.mxu0
        %v820 = vpop.f32.mrf.mxu0
        %v821 = vadd.f32 0.0, %v820
        %v822 = vpop.f32.mrf.mxu0
        %823 = vmatprep.mubr.bf16.mxu0 0
        %824 = vmatmul.mubr.bf16.gmra.mxu0 %v612
        %v825 = vpop.f32.mrf.mxu0
        %v826 = vadd.f32 0.0, %v825
        %v827 = vpop.f32.mrf.mxu0
        %v828 = vpop.f32.mrf.mxu0
        %v829 = vadd.f32 0.0, %v828
        %v830 = vpop.f32.mrf.mxu0
        %831 = vmatprep.mubr.bf16.mxu0 0
        %832 = vmatmul.mubr.bf16.gmra.mxu0 %v613
        %v833 = vpop.f32.mrf.mxu0
        %v834 = vadd.f32 0.0, %v833
        %v835 = vpop.f32.mrf.mxu0
        %v836 = vpop.f32.mrf.mxu0
        %v837 = vadd.f32 0.0, %v836
        %v838 = vpop.f32.mrf.mxu0
        %839 = vdwg.mxu0
        %v856 = vunpack.c.l.b16 %v550
        %v857 = vunpack.c.l.b16 %v551
        %v858 = vunpack.c.l.b16 %v552
        %v859 = vunpack.c.l.b16 %v553
        %v860 = vunpack.c.l.b16 %v554
        %v861 = vunpack.c.l.b16 %v555
        %v862 = vunpack.c.l.b16 %v556
        %v863 = vunpack.c.l.b16 %v557
        %v864 = vunpack.c.l.b16 %v558
        %v865 = vunpack.c.l.b16 %v559
        %v866 = vunpack.c.l.b16 %v560
        %v867 = vunpack.c.l.b16 %v561
        %v868 = vunpack.c.l.b16 %v562
        %v869 = vunpack.c.l.b16 %v563
        %v870 = vunpack.c.l.b16 %v564
        %v871 = vunpack.c.l.b16 %v565
        %v872 = vpack.c.b16 %v857, %v856
        %v873 = vpack.c.b16 %v859, %v858
        %v874 = vpack.c.b16 %v861, %v860
        %v875 = vpack.c.b16 %v863, %v862
        %v876 = vpack.c.b16 %v865, %v864
        %v877 = vpack.c.b16 %v867, %v866
        %v878 = vpack.c.b16 %v869, %v868
        %v879 = vpack.c.b16 %v871, %v870
        %888 = vmatprep.subr.bf16.mxu0 0
        %889 = vmatpush1.bf16.msra.mxu0 %v879
        %890 = vmatprep.subr.bf16.mxu0 0
        %891 = vmatpush1.bf16.msra.mxu0 %v878
        %892 = vmatprep.subr.bf16.mxu0 0
        %893 = vmatpush1.bf16.msra.mxu0 %v877
        %894 = vmatprep.subr.bf16.mxu0 0
        %895 = vmatpush1.bf16.msra.mxu0 %v876
        %896 = vmatprep.subr.bf16.mxu0 0
        %897 = vmatpush1.bf16.msra.mxu0 %v875
        %898 = vmatprep.subr.bf16.mxu0 0
        %899 = vmatpush1.bf16.msra.mxu0 %v874
        %900 = vmatprep.subr.bf16.mxu0 0
        %901 = vmatpush1.bf16.msra.mxu0 %v873
        %902 = vmatprep.subr.bf16.mxu0 0
        %903 = vmatpush1.bf16.msra.mxu0 %v872
        %904 = vmatprep.subr.bf16.mxu0 0
        %905 = vmatpush2.bf16.msra.mxu0 0
        %906 = vmatprep.subr.bf16.mxu0 0
        %907 = vmatpush2.bf16.msra.mxu0 0
        %908 = vmatprep.subr.bf16.mxu0 0
        %909 = vmatpush2.bf16.msra.mxu0 0
        %910 = vmatprep.subr.bf16.mxu0 0
        %911 = vmatpush2.bf16.msra.mxu0 0
        %912 = vmatprep.subr.bf16.mxu0 0
        %913 = vmatpush2.bf16.msra.mxu0 0
        %914 = vmatprep.subr.bf16.mxu0 0
        %915 = vmatpush2.bf16.msra.mxu0 0
        %916 = vmatprep.subr.bf16.mxu0 0
        %917 = vmatpush2.bf16.msra.mxu0 0
        %918 = vmatprep.subr.bf16.mxu0 0
        %919 = vmatpush2.bf16.msra.mxu0 0
        %920 = vmatprep.mubr.bf16.mxu0 0
        %921 = vmatmul.mubr.bf16.gmra.mxu0 %v534
        %v922 = vpop.f32.mrf.mxu0
        %v923 = vadd.f32 %v714, %v922
        %v924 = vpop.f32.mrf.mxu0
        %v925 = vpop.f32.mrf.mxu0
        %v926 = vadd.f32 %v717, %v925
        %v927 = vpop.f32.mrf.mxu0
        %928 = vmatprep.mubr.bf16.mxu0 0
        %929 = vmatmul.mubr.bf16.gmra.mxu0 %v535
        %v930 = vpop.f32.mrf.mxu0
        %v931 = vadd.f32 %v722, %v930
        %v932 = vpop.f32.mrf.mxu0
        %v933 = vpop.f32.mrf.mxu0
        %v934 = vadd.f32 %v725, %v933
        %v935 = vpop.f32.mrf.mxu0
        %936 = vmatprep.mubr.bf16.mxu0 0
        %937 = vmatmul.mubr.bf16.gmra.mxu0 %v536
        %v938 = vpop.f32.mrf.mxu0
        %v939 = vadd.f32 %v730, %v938
        %v940 = vpop.f32.mrf.mxu0
        %v941 = vpop.f32.mrf.mxu0
        %v942 = vadd.f32 %v733, %v941
        %v943 = vpop.f32.mrf.mxu0
        %944 = vmatprep.mubr.bf16.mxu0 0
        %945 = vmatmul.mubr.bf16.gmra.mxu0 %v537
        %v946 = vpop.f32.mrf.mxu0
        %v947 = vadd.f32 %v738, %v946
        %v948 = vpop.f32.mrf.mxu0
        %v949 = vpop.f32.mrf.mxu0
        %v950 = vadd.f32 %v741, %v949
        %v951 = vpop.f32.mrf.mxu0
        %952 = vmatprep.mubr.bf16.mxu0 0
        %953 = vmatmul.mubr.bf16.gmra.mxu0 %v538
        %v954 = vpop.f32.mrf.mxu0
        %v955 = vadd.f32 %v746, %v954
        %v956 = vpop.f32.mrf.mxu0
        %v957 = vpop.f32.mrf.mxu0
        %v958 = vadd.f32 %v749, %v957
        %v959 = vpop.f32.mrf.mxu0
        %960 = vmatprep.mubr.bf16.mxu0 0
        %961 = vmatmul.mubr.bf16.gmra.mxu0 %v539
        %v962 = vpop.f32.mrf.mxu0
        %v963 = vadd.f32 %v754, %v962
        %v964 = vpop.f32.mrf.mxu0
        %v965 = vpop.f32.mrf.mxu0
        %v966 = vadd.f32 %v757, %v965
        %v967 = vpop.f32.mrf.mxu0
        %968 = vmatprep.mubr.bf16.mxu0 0
        %969 = vmatmul.mubr.bf16.gmra.mxu0 %v540
        %v970 = vpop.f32.mrf.mxu0
        %v971 = vadd.f32 %v762, %v970
        %v972 = vpop.f32.mrf.mxu0
        %v973 = vpop.f32.mrf.mxu0
        %v974 = vadd.f32 %v765, %v973
        %v975 = vpop.f32.mrf.mxu0
        %976 = vmatprep.mubr.bf16.mxu0 0
        %977 = vmatmul.mubr.bf16.gmra.mxu0 %v541
        %v978 = vpop.f32.mrf.mxu0
        %v979 = vadd.f32 %v770, %v978
        %v980 = vpop.f32.mrf.mxu0
        %v981 = vpop.f32.mrf.mxu0
        %v982 = vadd.f32 %v773, %v981
        %v983 = vpop.f32.mrf.mxu0
        %984 = vmatprep.mubr.bf16.mxu0 0
        %985 = vmatmul.mubr.bf16.gmra.mxu0 %v542
        %v986 = vpop.f32.mrf.mxu0
        %v987 = vadd.f32 %v778, %v986
        %v988 = vpop.f32.mrf.mxu0
        %v989 = vpop.f32.mrf.mxu0
        %v990 = vadd.f32 %v781, %v989
        %v991 = vpop.f32.mrf.mxu0
        %992 = vmatprep.mubr.bf16.mxu0 0
        %993 = vmatmul.mubr.bf16.gmra.mxu0 %v543
        %v994 = vpop.f32.mrf.mxu0
        %v995 = vadd.f32 %v786, %v994
        %v996 = vpop.f32.mrf.mxu0
        %v997 = vpop.f32.mrf.mxu0
        %v998 = vadd.f32 %v789, %v997
        %v999 = vpop.f32.mrf.mxu0
        %1000 = vmatprep.mubr.bf16.mxu0 0
        %1001 = vmatmul.mubr.bf16.gmra.mxu0 %v544
        %v1002 = vpop.f32.mrf.mxu0
        %v1003 = vadd.f32 %v794, %v1002
        %v1004 = vpop.f32.mrf.mxu0
        %v1005 = vpop.f32.mrf.mxu0
        %v1006 = vadd.f32 %v797, %v1005
        %v1007 = vpop.f32.mrf.mxu0
        %1008 = vmatprep.mubr.bf16.mxu0 0
        %1009 = vmatmul.mubr.bf16.gmra.mxu0 %v545
        %v1010 = vpop.f32.mrf.mxu0
        %v1011 = vadd.f32 %v802, %v1010
        %v1012 = vpop.f32.mrf.mxu0
        %v1013 = vpop.f32.mrf.mxu0
        %v1014 = vadd.f32 %v805, %v1013
        %v1015 = vpop.f32.mrf.mxu0
        %1016 = vmatprep.mubr.bf16.mxu0 0
        %1017 = vmatmul.mubr.bf16.gmra.mxu0 %v546
        %v1018 = vpop.f32.mrf.mxu0
        %v1019 = vadd.f32 %v810, %v1018
        %v1020 = vpop.f32.mrf.mxu0
        %v1021 = vpop.f32.mrf.mxu0
        %v1022 = vadd.f32 %v813, %v1021
        %v1023 = vpop.f32.mrf.mxu0
        %1024 = vmatprep.mubr.bf16.mxu0 0
        %1025 = vmatmul.mubr.bf16.gmra.mxu0 %v547
        %v1026 = vpop.f32.mrf.mxu0
        %v1027 = vadd.f32 %v818, %v1026
        %v1028 = vpop.f32.mrf.mxu0
        %v1029 = vpop.f32.mrf.mxu0
        %v1030 = vadd.f32 %v821, %v1029
        %v1031 = vpop.f32.mrf.mxu0
        %1032 = vmatprep.mubr.bf16.mxu0 0
        %1033 = vmatmul.mubr.bf16.gmra.mxu0 %v548
        %v1034 = vpop.f32.mrf.mxu0
        %v1035 = vadd.f32 %v826, %v1034
        %v1036 = vpop.f32.mrf.mxu0
        %v1037 = vpop.f32.mrf.mxu0
        %v1038 = vadd.f32 %v829, %v1037
        %v1039 = vpop.f32.mrf.mxu0
        %1040 = vmatprep.mubr.bf16.mxu0 0
        %1041 = vmatmul.mubr.bf16.gmra.mxu0 %v549
        %v1042 = vpop.f32.mrf.mxu0
        %v1043 = vadd.f32 %v834, %v1042
        %v1044 = vpop.f32.mrf.mxu0
        %v1045 = vpop.f32.mrf.mxu0
        %v1046 = vadd.f32 %v837, %v1045
        %v1047 = vpop.f32.mrf.mxu0
        %1048 = vdwg.mxu0
        %v1049 = vld [vmem:[%s276 + $0x2] sm:$0xff]
        %v1050 = vld [vmem:[%s276 + $0xa] sm:$0xff]
        %v1051 = vld [vmem:[%s276 + $0x12] sm:$0xff]
        %v1052 = vld [vmem:[%s276 + $0x1a] sm:$0xff]
        %v1053 = vld [vmem:[%s276 + $0x22] sm:$0xff]
        %v1054 = vld [vmem:[%s276 + $0x2a] sm:$0xff]
        %v1055 = vld [vmem:[%s276 + $0x32] sm:$0xff]
        %v1056 = vld [vmem:[%s276 + $0x3a] sm:$0xff]
        %v1057 = vld [vmem:[%s276 + $0x42] sm:$0xff]
        %v1058 = vld [vmem:[%s276 + $0x4a] sm:$0xff]
        %v1059 = vld [vmem:[%s276 + $0x52] sm:$0xff]
        %v1060 = vld [vmem:[%s276 + $0x5a] sm:$0xff]
        %v1061 = vld [vmem:[%s276 + $0x62] sm:$0xff]
        %v1062 = vld [vmem:[%s276 + $0x6a] sm:$0xff]
        %v1063 = vld [vmem:[%s276 + $0x72] sm:$0xff]
        %v1064 = vld [vmem:[%s276 + $0x7a] sm:$0xff]
        %v1065 = vld [vmem:[%s276 + $0x82] sm:$0xff]
        %v1066 = vld [vmem:[%s276 + $0x8a] sm:$0xff]
        %v1067 = vld [vmem:[%s276 + $0x92] sm:$0xff]
        %v1068 = vld [vmem:[%s276 + $0x9a] sm:$0xff]
        %v1069 = vld [vmem:[%s276 + $0xa2] sm:$0xff]
        %v1070 = vld [vmem:[%s276 + $0xaa] sm:$0xff]
        %v1071 = vld [vmem:[%s276 + $0xb2] sm:$0xff]
        %v1072 = vld [vmem:[%s276 + $0xba] sm:$0xff]
        %v1073 = vld [vmem:[%s276 + $0xc2] sm:$0xff]
        %v1074 = vld [vmem:[%s276 + $0xca] sm:$0xff]
        %v1075 = vld [vmem:[%s276 + $0xd2] sm:$0xff]
        %v1076 = vld [vmem:[%s276 + $0xda] sm:$0xff]
        %v1077 = vld [vmem:[%s276 + $0xe2] sm:$0xff]
        %v1078 = vld [vmem:[%s276 + $0xea] sm:$0xff]
        %v1079 = vld [vmem:[%s276 + $0xf2] sm:$0xff]
        %v1080 = vld [vmem:[%s276 + $0xfa] sm:$0xff]
        %s1081 = scalar_lea.vmem %s4, 256
        %v1082 = vld [vmem:[%s1081] sm:$0xff]
        %v1083 = vld [vmem:[%s1081 + $0x8] sm:$0xff]
        %v1084 = vld [vmem:[%s1081 + $0x10] sm:$0xff]
        %v1085 = vld [vmem:[%s1081 + $0x18] sm:$0xff]
        %v1086 = vld [vmem:[%s1081 + $0x20] sm:$0xff]
        %v1087 = vld [vmem:[%s1081 + $0x28] sm:$0xff]
        %v1088 = vld [vmem:[%s1081 + $0x30] sm:$0xff]
        %v1089 = vld [vmem:[%s1081 + $0x38] sm:$0xff]
        %v1090 = vld [vmem:[%s1081 + $0x40] sm:$0xff]
        %v1091 = vld [vmem:[%s1081 + $0x48] sm:$0xff]
        %v1092 = vld [vmem:[%s1081 + $0x50] sm:$0xff]
        %v1093 = vld [vmem:[%s1081 + $0x58] sm:$0xff]
        %v1094 = vld [vmem:[%s1081 + $0x60] sm:$0xff]
        %v1095 = vld [vmem:[%s1081 + $0x68] sm:$0xff]
        %v1096 = vld [vmem:[%s1081 + $0x70] sm:$0xff]
        %v1097 = vld [vmem:[%s1081 + $0x78] sm:$0xff]
        %v1098 = vld [vmem:[%s1081 + $0x80] sm:$0xff]
        %v1099 = vld [vmem:[%s1081 + $0x88] sm:$0xff]
        %v1100 = vld [vmem:[%s1081 + $0x90] sm:$0xff]
        %v1101 = vld [vmem:[%s1081 + $0x98] sm:$0xff]
        %v1102 = vld [vmem:[%s1081 + $0xa0] sm:$0xff]
        %v1103 = vld [vmem:[%s1081 + $0xa8] sm:$0xff]
        %v1104 = vld [vmem:[%s1081 + $0xb0] sm:$0xff]
        %v1105 = vld [vmem:[%s1081 + $0xb8] sm:$0xff]
        %v1106 = vld [vmem:[%s1081 + $0xc0] sm:$0xff]
        %v1107 = vld [vmem:[%s1081 + $0xc8] sm:$0xff]
        %v1108 = vld [vmem:[%s1081 + $0xd0] sm:$0xff]
        %v1109 = vld [vmem:[%s1081 + $0xd8] sm:$0xff]
        %v1110 = vld [vmem:[%s1081 + $0xe0] sm:$0xff]
        %v1111 = vld [vmem:[%s1081 + $0xe8] sm:$0xff]
        %v1112 = vld [vmem:[%s1081 + $0xf0] sm:$0xff]
        %v1113 = vld [vmem:[%s1081 + $0xf8] sm:$0xff]
        %1115 = vset.pattern.permute.xlu0 0
        %1116 = vperm.xlu0 %1115, %v1082
        %v1117 = vpop.permute.xlu0 %1116
        %1120 = vset.pattern.permute.xlu0 0
        %1121 = vperm.xlu0 %1120, %v1083
        %v1122 = vpop.permute.xlu0 %1121
        %1125 = vset.pattern.permute.xlu0 0
        %1126 = vperm.xlu0 %1125, %v1084
        %v1127 = vpop.permute.xlu0 %1126
        %1130 = vset.pattern.permute.xlu0 0
        %1131 = vperm.xlu0 %1130, %v1085
        %v1132 = vpop.permute.xlu0 %1131
        %1135 = vset.pattern.permute.xlu0 0
        %1136 = vperm.xlu0 %1135, %v1086
        %v1137 = vpop.permute.xlu0 %1136
        %1140 = vset.pattern.permute.xlu0 0
        %1141 = vperm.xlu0 %1140, %v1087
        %v1142 = vpop.permute.xlu0 %1141
        %1145 = vset.pattern.permute.xlu0 0
        %1146 = vperm.xlu0 %1145, %v1088
        %v1147 = vpop.permute.xlu0 %1146
        %1150 = vset.pattern.permute.xlu0 0
        %1151 = vperm.xlu0 %1150, %v1089
        %v1152 = vpop.permute.xlu0 %1151
        %1155 = vset.pattern.permute.xlu0 0
        %1156 = vperm.xlu0 %1155, %v1090
        %v1157 = vpop.permute.xlu0 %1156
        %1160 = vset.pattern.permute.xlu0 0
        %1161 = vperm.xlu0 %1160, %v1091
        %v1162 = vpop.permute.xlu0 %1161
        %1165 = vset.pattern.permute.xlu0 0
        %1166 = vperm.xlu0 %1165, %v1092
        %v1167 = vpop.permute.xlu0 %1166
        %1170 = vset.pattern.permute.xlu0 0
        %1171 = vperm.xlu0 %1170, %v1093
        %v1172 = vpop.permute.xlu0 %1171
        %1175 = vset.pattern.permute.xlu0 0
        %1176 = vperm.xlu0 %1175, %v1094
        %v1177 = vpop.permute.xlu0 %1176
        %1180 = vset.pattern.permute.xlu0 0
        %1181 = vperm.xlu0 %1180, %v1095
        %v1182 = vpop.permute.xlu0 %1181
        %1185 = vset.pattern.permute.xlu0 0
        %1186 = vperm.xlu0 %1185, %v1096
        %v1187 = vpop.permute.xlu0 %1186
        %1190 = vset.pattern.permute.xlu0 0
        %1191 = vperm.xlu0 %1190, %v1097
        %v1192 = vpop.permute.xlu0 %1191
        %1195 = vset.pattern.permute.xlu0 0
        %1196 = vperm.xlu0 %1195, %v1098
        %v1197 = vpop.permute.xlu0 %1196
        %1200 = vset.pattern.permute.xlu0 0
        %1201 = vperm.xlu0 %1200, %v1099
        %v1202 = vpop.permute.xlu0 %1201
        %1205 = vset.pattern.permute.xlu0 0
        %1206 = vperm.xlu0 %1205, %v1100
        %v1207 = vpop.permute.xlu0 %1206
        %1210 = vset.pattern.permute.xlu0 0
        %1211 = vperm.xlu0 %1210, %v1101
        %v1212 = vpop.permute.xlu0 %1211
        %1215 = vset.pattern.permute.xlu0 0
        %1216 = vperm.xlu0 %1215, %v1102
        %v1217 = vpop.permute.xlu0 %1216
        %1220 = vset.pattern.permute.xlu0 0
        %1221 = vperm.xlu0 %1220, %v1103
        %v1222 = vpop.permute.xlu0 %1221
        %1225 = vset.pattern.permute.xlu0 0
        %1226 = vperm.xlu0 %1225, %v1104
        %v1227 = vpop.permute.xlu0 %1226
        %1230 = vset.pattern.permute.xlu0 0
        %1231 = vperm.xlu0 %1230, %v1105
        %v1232 = vpop.permute.xlu0 %1231
        %1235 = vset.pattern.permute.xlu0 0
        %1236 = vperm.xlu0 %1235, %v1106
        %v1237 = vpop.permute.xlu0 %1236
        %1240 = vset.pattern.permute.xlu0 0
        %1241 = vperm.xlu0 %1240, %v1107
        %v1242 = vpop.permute.xlu0 %1241
        %1245 = vset.pattern.permute.xlu0 0
        %1246 = vperm.xlu0 %1245, %v1108
        %v1247 = vpop.permute.xlu0 %1246
        %1250 = vset.pattern.permute.xlu0 0
        %1251 = vperm.xlu0 %1250, %v1109
        %v1252 = vpop.permute.xlu0 %1251
        %1255 = vset.pattern.permute.xlu0 0
        %1256 = vperm.xlu0 %1255, %v1110
        %v1257 = vpop.permute.xlu0 %1256
        %1260 = vset.pattern.permute.xlu0 0
        %1261 = vperm.xlu0 %1260, %v1111
        %v1262 = vpop.permute.xlu0 %1261
        %1265 = vset.pattern.permute.xlu0 0
        %1266 = vperm.xlu0 %1265, %v1112
        %v1267 = vpop.permute.xlu0 %1266
        %1270 = vset.pattern.permute.xlu0 0
        %1271 = vperm.xlu0 %1270, %v1113
        %v1272 = vpop.permute.xlu0 %1271
        %v1274 = vmul.f32 %v1049, %v1117
        %v1275 = vmul.f32 %v1050, %v1122
        %v1276 = vmul.f32 %v1051, %v1127
        %v1277 = vmul.f32 %v1052, %v1132
        %v1278 = vmul.f32 %v1053, %v1137
        %v1279 = vmul.f32 %v1054, %v1142
        %v1280 = vmul.f32 %v1055, %v1147
        %v1281 = vmul.f32 %v1056, %v1152
        %v1282 = vmul.f32 %v1057, %v1157
        %v1283 = vmul.f32 %v1058, %v1162
        %v1284 = vmul.f32 %v1059, %v1167
        %v1285 = vmul.f32 %v1060, %v1172
        %v1286 = vmul.f32 %v1061, %v1177
        %v1287 = vmul.f32 %v1062, %v1182
        %v1288 = vmul.f32 %v1063, %v1187
        %v1289 = vmul.f32 %v1064, %v1192
        %v1290 = vmul.f32 %v1065, %v1197
        %v1291 = vmul.f32 %v1066, %v1202
        %v1292 = vmul.f32 %v1067, %v1207
        %v1293 = vmul.f32 %v1068, %v1212
        %v1294 = vmul.f32 %v1069, %v1217
        %v1295 = vmul.f32 %v1070, %v1222
        %v1296 = vmul.f32 %v1071, %v1227
        %v1297 = vmul.f32 %v1072, %v1232
        %v1298 = vmul.f32 %v1073, %v1237
        %v1299 = vmul.f32 %v1074, %v1242
        %v1300 = vmul.f32 %v1075, %v1247
        %v1301 = vmul.f32 %v1076, %v1252
        %v1302 = vmul.f32 %v1077, %v1257
        %v1303 = vmul.f32 %v1078, %v1262
        %v1304 = vmul.f32 %v1079, %v1267
        %v1305 = vmul.f32 %v1080, %v1272
        %v1306 = vpack.c.bf16 %v1275, %v1274
        %v1307 = vpack.c.bf16 %v1277, %v1276
        %v1308 = vpack.c.bf16 %v1279, %v1278
        %v1309 = vpack.c.bf16 %v1281, %v1280
        %v1310 = vpack.c.bf16 %v1283, %v1282
        %v1311 = vpack.c.bf16 %v1285, %v1284
        %v1312 = vpack.c.bf16 %v1287, %v1286
        %v1313 = vpack.c.bf16 %v1289, %v1288
        %v1314 = vpack.c.bf16 %v1291, %v1290
        %v1315 = vpack.c.bf16 %v1293, %v1292
        %v1316 = vpack.c.bf16 %v1295, %v1294
        %v1317 = vpack.c.bf16 %v1297, %v1296
        %v1318 = vpack.c.bf16 %v1299, %v1298
        %v1319 = vpack.c.bf16 %v1301, %v1300
        %v1320 = vpack.c.bf16 %v1303, %v1302
        %v1321 = vpack.c.bf16 %v1305, %v1304
        %s1322 = scalar_lea.vmem %s1, 128
        %v1323 = vld [vmem:[%s1322] sm:$0xf]
        %v1324 = vld [vmem:[%s1322 + $0x4] sm:$0xf]
        %v1325 = vld [vmem:[%s1322 + $0x8] sm:$0xf]
        %v1326 = vld [vmem:[%s1322 + $0xc] sm:$0xf]
        %v1327 = vld [vmem:[%s1322 + $0x10] sm:$0xf]
        %v1328 = vld [vmem:[%s1322 + $0x14] sm:$0xf]
        %v1329 = vld [vmem:[%s1322 + $0x18] sm:$0xf]
        %v1330 = vld [vmem:[%s1322 + $0x1c] sm:$0xf]
        %v1331 = vld [vmem:[%s1322 + $0x20] sm:$0xf]
        %v1332 = vld [vmem:[%s1322 + $0x24] sm:$0xf]
        %v1333 = vld [vmem:[%s1322 + $0x28] sm:$0xf]
        %v1334 = vld [vmem:[%s1322 + $0x2c] sm:$0xf]
        %v1335 = vld [vmem:[%s1322 + $0x30] sm:$0xf]
        %v1336 = vld [vmem:[%s1322 + $0x34] sm:$0xf]
        %v1337 = vld [vmem:[%s1322 + $0x38] sm:$0xf]
        %v1338 = vld [vmem:[%s1322 + $0x3c] sm:$0xf]
        %v1355 = vunpack.c.l.b16 %v1323
        %v1356 = vunpack.c.l.b16 %v1324
        %v1357 = vunpack.c.l.b16 %v1325
        %v1358 = vunpack.c.l.b16 %v1326
        %v1359 = vunpack.c.l.b16 %v1327
        %v1360 = vunpack.c.l.b16 %v1328
        %v1361 = vunpack.c.l.b16 %v1329
        %v1362 = vunpack.c.l.b16 %v1330
        %v1363 = vunpack.c.l.b16 %v1331
        %v1364 = vunpack.c.l.b16 %v1332
        %v1365 = vunpack.c.l.b16 %v1333
        %v1366 = vunpack.c.l.b16 %v1334
        %v1367 = vunpack.c.l.b16 %v1335
        %v1368 = vunpack.c.l.b16 %v1336
        %v1369 = vunpack.c.l.b16 %v1337
        %v1370 = vunpack.c.l.b16 %v1338
        %v1371 = vpack.c.b16 %v1356, %v1355
        %v1372 = vpack.c.b16 %v1358, %v1357
        %v1373 = vpack.c.b16 %v1360, %v1359
        %v1374 = vpack.c.b16 %v1362, %v1361
        %v1375 = vpack.c.b16 %v1364, %v1363
        %v1376 = vpack.c.b16 %v1366, %v1365
        %v1377 = vpack.c.b16 %v1368, %v1367
        %v1378 = vpack.c.b16 %v1370, %v1369
        %1387 = vmatprep.subr.bf16.mxu0 0
        %1388 = vmatpush1.bf16.msra.mxu0 %v1378
        %1389 = vmatprep.subr.bf16.mxu0 0
        %1390 = vmatpush1.bf16.msra.mxu0 %v1377
        %1391 = vmatprep.subr.bf16.mxu0 0
        %1392 = vmatpush1.bf16.msra.mxu0 %v1376
        %1393 = vmatprep.subr.bf16.mxu0 0
        %1394 = vmatpush1.bf16.msra.mxu0 %v1375
        %1395 = vmatprep.subr.bf16.mxu0 0
        %1396 = vmatpush1.bf16.msra.mxu0 %v1374
        %1397 = vmatprep.subr.bf16.mxu0 0
        %1398 = vmatpush1.bf16.msra.mxu0 %v1373
        %1399 = vmatprep.subr.bf16.mxu0 0
        %1400 = vmatpush1.bf16.msra.mxu0 %v1372
        %1401 = vmatprep.subr.bf16.mxu0 0
        %1402 = vmatpush1.bf16.msra.mxu0 %v1371
        %1403 = vmatprep.subr.bf16.mxu0 0
        %1404 = vmatpush2.bf16.msra.mxu0 0
        %1405 = vmatprep.subr.bf16.mxu0 0
        %1406 = vmatpush2.bf16.msra.mxu0 0
        %1407 = vmatprep.subr.bf16.mxu0 0
        %1408 = vmatpush2.bf16.msra.mxu0 0
        %1409 = vmatprep.subr.bf16.mxu0 0
        %1410 = vmatpush2.bf16.msra.mxu0 0
        %1411 = vmatprep.subr.bf16.mxu0 0
        %1412 = vmatpush2.bf16.msra.mxu0 0
        %1413 = vmatprep.subr.bf16.mxu0 0
        %1414 = vmatpush2.bf16.msra.mxu0 0
        %1415 = vmatprep.subr.bf16.mxu0 0
        %1416 = vmatpush2.bf16.msra.mxu0 0
        %1417 = vmatprep.subr.bf16.mxu0 0
        %1418 = vmatpush2.bf16.msra.mxu0 0
        %1419 = vmatprep.mubr.bf16.mxu0 0
        %1420 = vmatmul.mubr.bf16.gmra.mxu0 %v1306
        %v1421 = vpop.f32.mrf.mxu0
        %v1422 = vadd.f32 0.0, %v1421
        %v1423 = vpop.f32.mrf.mxu0
        %v1424 = vpop.f32.mrf.mxu0
        %v1425 = vadd.f32 0.0, %v1424
        %v1426 = vpop.f32.mrf.mxu0
        %1427 = vmatprep.mubr.bf16.mxu0 0
        %1428 = vmatmul.mubr.bf16.gmra.mxu0 %v1307
        %v1429 = vpop.f32.mrf.mxu0
        %v1430 = vadd.f32 0.0, %v1429
        %v1431 = vpop.f32.mrf.mxu0
        %v1432 = vpop.f32.mrf.mxu0
        %v1433 = vadd.f32 0.0, %v1432
        %v1434 = vpop.f32.mrf.mxu0
        %1435 = vmatprep.mubr.bf16.mxu0 0
        %1436 = vmatmul.mubr.bf16.gmra.mxu0 %v1308
        %v1437 = vpop.f32.mrf.mxu0
        %v1438 = vadd.f32 0.0, %v1437
        %v1439 = vpop.f32.mrf.mxu0
        %v1440 = vpop.f32.mrf.mxu0
        %v1441 = vadd.f32 0.0, %v1440
        %v1442 = vpop.f32.mrf.mxu0
        %1443 = vmatprep.mubr.bf16.mxu0 0
        %1444 = vmatmul.mubr.bf16.gmra.mxu0 %v1309
        %v1445 = vpop.f32.mrf.mxu0
        %v1446 = vadd.f32 0.0, %v1445
        %v1447 = vpop.f32.mrf.mxu0
        %v1448 = vpop.f32.mrf.mxu0
        %v1449 = vadd.f32 0.0, %v1448
        %v1450 = vpop.f32.mrf.mxu0
        %1451 = vmatprep.mubr.bf16.mxu0 0
        %1452 = vmatmul.mubr.bf16.gmra.mxu0 %v1310
        %v1453 = vpop.f32.mrf.mxu0
        %v1454 = vadd.f32 0.0, %v1453
        %v1455 = vpop.f32.mrf.mxu0
        %v1456 = vpop.f32.mrf.mxu0
        %v1457 = vadd.f32 0.0, %v1456
        %v1458 = vpop.f32.mrf.mxu0
        %1459 = vmatprep.mubr.bf16.mxu0 0
        %1460 = vmatmul.mubr.bf16.gmra.mxu0 %v1311
        %v1461 = vpop.f32.mrf.mxu0
        %v1462 = vadd.f32 0.0, %v1461
        %v1463 = vpop.f32.mrf.mxu0
        %v1464 = vpop.f32.mrf.mxu0
        %v1465 = vadd.f32 0.0, %v1464
        %v1466 = vpop.f32.mrf.mxu0
        %1467 = vmatprep.mubr.bf16.mxu0 0
        %1468 = vmatmul.mubr.bf16.gmra.mxu0 %v1312
        %v1469 = vpop.f32.mrf.mxu0
        %v1470 = vadd.f32 0.0, %v1469
        %v1471 = vpop.f32.mrf.mxu0
        %v1472 = vpop.f32.mrf.mxu0
        %v1473 = vadd.f32 0.0, %v1472
        %v1474 = vpop.f32.mrf.mxu0
        %1475 = vmatprep.mubr.bf16.mxu0 0
        %1476 = vmatmul.mubr.bf16.gmra.mxu0 %v1313
        %v1477 = vpop.f32.mrf.mxu0
        %v1478 = vadd.f32 0.0, %v1477
        %v1479 = vpop.f32.mrf.mxu0
        %v1480 = vpop.f32.mrf.mxu0
        %v1481 = vadd.f32 0.0, %v1480
        %v1482 = vpop.f32.mrf.mxu0
        %1483 = vmatprep.mubr.bf16.mxu0 0
        %1484 = vmatmul.mubr.bf16.gmra.mxu0 %v1314
        %v1485 = vpop.f32.mrf.mxu0
        %v1486 = vadd.f32 0.0, %v1485
        %v1487 = vpop.f32.mrf.mxu0
        %v1488 = vpop.f32.mrf.mxu0
        %v1489 = vadd.f32 0.0, %v1488
        %v1490 = vpop.f32.mrf.mxu0
        %1491 = vmatprep.mubr.bf16.mxu0 0
        %1492 = vmatmul.mubr.bf16.gmra.mxu0 %v1315
        %v1493 = vpop.f32.mrf.mxu0
        %v1494 = vadd.f32 0.0, %v1493
        %v1495 = vpop.f32.mrf.mxu0
        %v1496 = vpop.f32.mrf.mxu0
        %v1497 = vadd.f32 0.0, %v1496
        %v1498 = vpop.f32.mrf.mxu0
        %1499 = vmatprep.mubr.bf16.mxu0 0
        %1500 = vmatmul.mubr.bf16.gmra.mxu0 %v1316
        %v1501 = vpop.f32.mrf.mxu0
        %v1502 = vadd.f32 0.0, %v1501
        %v1503 = vpop.f32.mrf.mxu0
        %v1504 = vpop.f32.mrf.mxu0
        %v1505 = vadd.f32 0.0, %v1504
        %v1506 = vpop.f32.mrf.mxu0
        %1507 = vmatprep.mubr.bf16.mxu0 0
        %1508 = vmatmul.mubr.bf16.gmra.mxu0 %v1317
        %v1509 = vpop.f32.mrf.mxu0
        %v1510 = vadd.f32 0.0, %v1509
        %v1511 = vpop.f32.mrf.mxu0
        %v1512 = vpop.f32.mrf.mxu0
        %v1513 = vadd.f32 0.0, %v1512
        %v1514 = vpop.f32.mrf.mxu0
        %1515 = vmatprep.mubr.bf16.mxu0 0
        %1516 = vmatmul.mubr.bf16.gmra.mxu0 %v1318
        %v1517 = vpop.f32.mrf.mxu0
        %v1518 = vadd.f32 0.0, %v1517
        %v1519 = vpop.f32.mrf.mxu0
        %v1520 = vpop.f32.mrf.mxu0
        %v1521 = vadd.f32 0.0, %v1520
        %v1522 = vpop.f32.mrf.mxu0
        %1523 = vmatprep.mubr.bf16.mxu0 0
        %1524 = vmatmul.mubr.bf16.gmra.mxu0 %v1319
        %v1525 = vpop.f32.mrf.mxu0
        %v1526 = vadd.f32 0.0, %v1525
        %v1527 = vpop.f32.mrf.mxu0
        %v1528 = vpop.f32.mrf.mxu0
        %v1529 = vadd.f32 0.0, %v1528
        %v1530 = vpop.f32.mrf.mxu0
        %1531 = vmatprep.mubr.bf16.mxu0 0
        %1532 = vmatmul.mubr.bf16.gmra.mxu0 %v1320
        %v1533 = vpop.f32.mrf.mxu0
        %v1534 = vadd.f32 0.0, %v1533
        %v1535 = vpop.f32.mrf.mxu0
        %v1536 = vpop.f32.mrf.mxu0
        %v1537 = vadd.f32 0.0, %v1536
        %v1538 = vpop.f32.mrf.mxu0
        %1539 = vmatprep.mubr.bf16.mxu0 0
        %1540 = vmatmul.mubr.bf16.gmra.mxu0 %v1321
        %v1541 = vpop.f32.mrf.mxu0
        %v1542 = vadd.f32 0.0, %v1541
        %v1543 = vpop.f32.mrf.mxu0
        %v1544 = vpop.f32.mrf.mxu0
        %v1545 = vadd.f32 0.0, %v1544
        %v1546 = vpop.f32.mrf.mxu0
        %1547 = vdwg.mxu0
        %v1548 = vadd.f32 %v923, %v1422
        %v1549 = vadd.f32 %v926, %v1425
        %v1550 = vadd.f32 %v931, %v1430
        %v1551 = vadd.f32 %v934, %v1433
        %v1552 = vadd.f32 %v939, %v1438
        %v1553 = vadd.f32 %v942, %v1441
        %v1554 = vadd.f32 %v947, %v1446
        %v1555 = vadd.f32 %v950, %v1449
        %v1556 = vadd.f32 %v955, %v1454
        %v1557 = vadd.f32 %v958, %v1457
        %v1558 = vadd.f32 %v963, %v1462
        %v1559 = vadd.f32 %v966, %v1465
        %v1560 = vadd.f32 %v971, %v1470
        %v1561 = vadd.f32 %v974, %v1473
        %v1562 = vadd.f32 %v979, %v1478
        %v1563 = vadd.f32 %v982, %v1481
        %v1564 = vadd.f32 %v987, %v1486
        %v1565 = vadd.f32 %v990, %v1489
        %v1566 = vadd.f32 %v995, %v1494
        %v1567 = vadd.f32 %v998, %v1497
        %v1568 = vadd.f32 %v1003, %v1502
        %v1569 = vadd.f32 %v1006, %v1505
        %v1570 = vadd.f32 %v1011, %v1510
        %v1571 = vadd.f32 %v1014, %v1513
        %v1572 = vadd.f32 %v1019, %v1518
        %v1573 = vadd.f32 %v1022, %v1521
        %v1574 = vadd.f32 %v1027, %v1526
        %v1575 = vadd.f32 %v1030, %v1529
        %v1576 = vadd.f32 %v1035, %v1534
        %v1577 = vadd.f32 %v1038, %v1537
        %v1578 = vadd.f32 %v1043, %v1542
        %v1579 = vadd.f32 %v1046, %v1545
        %v1580 = vld [vmem:[%s276 + $0x10] sm:$0xff]
        %v1581 = vld [vmem:[%s276 + $0x18] sm:$0xff]
        %v1582 = vld [vmem:[%s276 + $0x20] sm:$0xff]
        %v1583 = vld [vmem:[%s276 + $0x28] sm:$0xff]
        %v1584 = vld [vmem:[%s276 + $0x30] sm:$0xff]
        %v1585 = vld [vmem:[%s276 + $0x38] sm:$0xff]
        %v1586 = vld [vmem:[%s276 + $0x40] sm:$0xff]
        %v1587 = vld [vmem:[%s276 + $0x48] sm:$0xff]
        %v1588 = vld [vmem:[%s276 + $0x50] sm:$0xff]
        %v1589 = vld [vmem:[%s276 + $0x58] sm:$0xff]
        %v1590 = vld [vmem:[%s276 + $0x60] sm:$0xff]
        %v1591 = vld [vmem:[%s276 + $0x68] sm:$0xff]
        %v1592 = vld [vmem:[%s276 + $0x70] sm:$0xff]
        %v1593 = vld [vmem:[%s276 + $0x78] sm:$0xff]
        %v1594 = vld [vmem:[%s276 + $0x80] sm:$0xff]
        %v1595 = vld [vmem:[%s276 + $0x88] sm:$0xff]
        %v1596 = vld [vmem:[%s276 + $0x90] sm:$0xff]
        %v1597 = vld [vmem:[%s276 + $0x98] sm:$0xff]
        %v1598 = vld [vmem:[%s276 + $0xa0] sm:$0xff]
        %v1599 = vld [vmem:[%s276 + $0xa8] sm:$0xff]
        %v1600 = vld [vmem:[%s276 + $0xb0] sm:$0xff]
        %v1601 = vld [vmem:[%s276 + $0xb8] sm:$0xff]
        %v1602 = vld [vmem:[%s276 + $0xc0] sm:$0xff]
        %v1603 = vld [vmem:[%s276 + $0xc8] sm:$0xff]
        %v1604 = vld [vmem:[%s276 + $0xd0] sm:$0xff]
        %v1605 = vld [vmem:[%s276 + $0xd8] sm:$0xff]
        %v1606 = vld [vmem:[%s276 + $0xe0] sm:$0xff]
        %v1607 = vld [vmem:[%s276 + $0xe8] sm:$0xff]
        %v1608 = vld [vmem:[%s276 + $0xf0] sm:$0xff]
        %v1609 = vld [vmem:[%s276 + $0xf8] sm:$0xff]
        %v1610 = vld [vmem:[%s276 + $0x100] sm:$0xff]
        %v1611 = vld [vmem:[%s276 + $0x108] sm:$0xff]
        %v1612 = vmul.f32 %v1580, %v345
        %v1613 = vmul.f32 %v1581, %v350
        %v1614 = vmul.f32 %v1582, %v355
        %v1615 = vmul.f32 %v1583, %v360
        %v1616 = vmul.f32 %v1584, %v365
        %v1617 = vmul.f32 %v1585, %v370
        %v1618 = vmul.f32 %v1586, %v375
        %v1619 = vmul.f32 %v1587, %v380
        %v1620 = vmul.f32 %v1588, %v385
        %v1621 = vmul.f32 %v1589, %v390
        %v1622 = vmul.f32 %v1590, %v395
        %v1623 = vmul.f32 %v1591, %v400
        %v1624 = vmul.f32 %v1592, %v405
        %v1625 = vmul.f32 %v1593, %v410
        %v1626 = vmul.f32 %v1594, %v415
        %v1627 = vmul.f32 %v1595, %v420
        %v1628 = vmul.f32 %v1596, %v425
        %v1629 = vmul.f32 %v1597, %v430
        %v1630 = vmul.f32 %v1598, %v435
        %v1631 = vmul.f32 %v1599, %v440
        %v1632 = vmul.f32 %v1600, %v445
        %v1633 = vmul.f32 %v1601, %v450
        %v1634 = vmul.f32 %v1602, %v455
        %v1635 = vmul.f32 %v1603, %v460
        %v1636 = vmul.f32 %v1604, %v465
        %v1637 = vmul.f32 %v1605, %v470
        %v1638 = vmul.f32 %v1606, %v475
        %v1639 = vmul.f32 %v1607, %v480
        %v1640 = vmul.f32 %v1608, %v485
        %v1641 = vmul.f32 %v1609, %v490
        %v1642 = vmul.f32 %v1610, %v495
        %v1643 = vmul.f32 %v1611, %v500
        %v1644 = vpack.c.bf16 %v1613, %v1612
        %v1645 = vpack.c.bf16 %v1615, %v1614
        %v1646 = vpack.c.bf16 %v1617, %v1616
        %v1647 = vpack.c.bf16 %v1619, %v1618
        %v1648 = vpack.c.bf16 %v1621, %v1620
        %v1649 = vpack.c.bf16 %v1623, %v1622
        %v1650 = vpack.c.bf16 %v1625, %v1624
        %v1651 = vpack.c.bf16 %v1627, %v1626
        %v1652 = vpack.c.bf16 %v1629, %v1628
        %v1653 = vpack.c.bf16 %v1631, %v1630
        %v1654 = vpack.c.bf16 %v1633, %v1632
        %v1655 = vpack.c.bf16 %v1635, %v1634
        %v1656 = vpack.c.bf16 %v1637, %v1636
        %v1657 = vpack.c.bf16 %v1639, %v1638
        %v1658 = vpack.c.bf16 %v1641, %v1640
        %v1659 = vpack.c.bf16 %v1643, %v1642
        %s1660 = scalar_lea.vmem %s1, 192
        %v1661 = vld [vmem:[%s1660] sm:$0xf]
        %v1662 = vld [vmem:[%s1660 + $0x4] sm:$0xf]
        %v1663 = vld [vmem:[%s1660 + $0x8] sm:$0xf]
        %v1664 = vld [vmem:[%s1660 + $0xc] sm:$0xf]
        %v1665 = vld [vmem:[%s1660 + $0x10] sm:$0xf]
        %v1666 = vld [vmem:[%s1660 + $0x14] sm:$0xf]
        %v1667 = vld [vmem:[%s1660 + $0x18] sm:$0xf]
        %v1668 = vld [vmem:[%s1660 + $0x1c] sm:$0xf]
        %v1669 = vld [vmem:[%s1660 + $0x20] sm:$0xf]
        %v1670 = vld [vmem:[%s1660 + $0x24] sm:$0xf]
        %v1671 = vld [vmem:[%s1660 + $0x28] sm:$0xf]
        %v1672 = vld [vmem:[%s1660 + $0x2c] sm:$0xf]
        %v1673 = vld [vmem:[%s1660 + $0x30] sm:$0xf]
        %v1674 = vld [vmem:[%s1660 + $0x34] sm:$0xf]
        %v1675 = vld [vmem:[%s1660 + $0x38] sm:$0xf]
        %v1676 = vld [vmem:[%s1660 + $0x3c] sm:$0xf]
        %v1693 = vunpack.c.l.b16 %v1661
        %v1694 = vunpack.c.l.b16 %v1662
        %v1695 = vunpack.c.l.b16 %v1663
        %v1696 = vunpack.c.l.b16 %v1664
        %v1697 = vunpack.c.l.b16 %v1665
        %v1698 = vunpack.c.l.b16 %v1666
        %v1699 = vunpack.c.l.b16 %v1667
        %v1700 = vunpack.c.l.b16 %v1668
        %v1701 = vunpack.c.l.b16 %v1669
        %v1702 = vunpack.c.l.b16 %v1670
        %v1703 = vunpack.c.l.b16 %v1671
        %v1704 = vunpack.c.l.b16 %v1672
        %v1705 = vunpack.c.l.b16 %v1673
        %v1706 = vunpack.c.l.b16 %v1674
        %v1707 = vunpack.c.l.b16 %v1675
        %v1708 = vunpack.c.l.b16 %v1676
        %v1709 = vpack.c.b16 %v1694, %v1693
        %v1710 = vpack.c.b16 %v1696, %v1695
        %v1711 = vpack.c.b16 %v1698, %v1697
        %v1712 = vpack.c.b16 %v1700, %v1699
        %v1713 = vpack.c.b16 %v1702, %v1701
        %v1714 = vpack.c.b16 %v1704, %v1703
        %v1715 = vpack.c.b16 %v1706, %v1705
        %v1716 = vpack.c.b16 %v1708, %v1707
        %1725 = vmatprep.subr.bf16.mxu0 0
        %1726 = vmatpush1.bf16.msra.mxu0 %v1716
        %1727 = vmatprep.subr.bf16.mxu0 0
        %1728 = vmatpush1.bf16.msra.mxu0 %v1715
        %1729 = vmatprep.subr.bf16.mxu0 0
        %1730 = vmatpush1.bf16.msra.mxu0 %v1714
        %1731 = vmatprep.subr.bf16.mxu0 0
        %1732 = vmatpush1.bf16.msra.mxu0 %v1713
        %1733 = vmatprep.subr.bf16.mxu0 0
        %1734 = vmatpush1.bf16.msra.mxu0 %v1712
        %1735 = vmatprep.subr.bf16.mxu0 0
        %1736 = vmatpush1.bf16.msra.mxu0 %v1711
        %1737 = vmatprep.subr.bf16.mxu0 0
        %1738 = vmatpush1.bf16.msra.mxu0 %v1710
        %1739 = vmatprep.subr.bf16.mxu0 0
        %1740 = vmatpush1.bf16.msra.mxu0 %v1709
        %1741 = vmatprep.subr.bf16.mxu0 0
        %1742 = vmatpush2.bf16.msra.mxu0 0
        %1743 = vmatprep.subr.bf16.mxu0 0
        %1744 = vmatpush2.bf16.msra.mxu0 0
        %1745 = vmatprep.subr.bf16.mxu0 0
        %1746 = vmatpush2.bf16.msra.mxu0 0
        %1747 = vmatprep.subr.bf16.mxu0 0
        %1748 = vmatpush2.bf16.msra.mxu0 0
        %1749 = vmatprep.subr.bf16.mxu0 0
        %1750 = vmatpush2.bf16.msra.mxu0 0
        %1751 = vmatprep.subr.bf16.mxu0 0
        %1752 = vmatpush2.bf16.msra.mxu0 0
        %1753 = vmatprep.subr.bf16.mxu0 0
        %1754 = vmatpush2.bf16.msra.mxu0 0
        %1755 = vmatprep.subr.bf16.mxu0 0
        %1756 = vmatpush2.bf16.msra.mxu0 0
        %1757 = vmatprep.mubr.bf16.mxu0 0
        %1758 = vmatmul.mubr.bf16.gmra.mxu0 %v1644
        %v1759 = vpop.f32.mrf.mxu0
        %v1760 = vadd.f32 0.0, %v1759
        %v1761 = vpop.f32.mrf.mxu0
        %v1762 = vpop.f32.mrf.mxu0
        %v1763 = vadd.f32 0.0, %v1762
        %v1764 = vpop.f32.mrf.mxu0
        %1765 = vmatprep.mubr.bf16.mxu0 0
        %1766 = vmatmul.mubr.bf16.gmra.mxu0 %v1645
        %v1767 = vpop.f32.mrf.mxu0
        %v1768 = vadd.f32 0.0, %v1767
        %v1769 = vpop.f32.mrf.mxu0
        %v1770 = vpop.f32.mrf.mxu0
        %v1771 = vadd.f32 0.0, %v1770
        %v1772 = vpop.f32.mrf.mxu0
        %1773 = vmatprep.mubr.bf16.mxu0 0
        %1774 = vmatmul.mubr.bf16.gmra.mxu0 %v1646
        %v1775 = vpop.f32.mrf.mxu0
        %v1776 = vadd.f32 0.0, %v1775
        %v1777 = vpop.f32.mrf.mxu0
        %v1778 = vpop.f32.mrf.mxu0
        %v1779 = vadd.f32 0.0, %v1778
        %v1780 = vpop.f32.mrf.mxu0
        %1781 = vmatprep.mubr.bf16.mxu0 0
        %1782 = vmatmul.mubr.bf16.gmra.mxu0 %v1647
        %v1783 = vpop.f32.mrf.mxu0
        %v1784 = vadd.f32 0.0, %v1783
        %v1785 = vpop.f32.mrf.mxu0
        %v1786 = vpop.f32.mrf.mxu0
        %v1787 = vadd.f32 0.0, %v1786
        %v1788 = vpop.f32.mrf.mxu0
        %1789 = vmatprep.mubr.bf16.mxu0 0
        %1790 = vmatmul.mubr.bf16.gmra.mxu0 %v1648
        %v1791 = vpop.f32.mrf.mxu0
        %v1792 = vadd.f32 0.0, %v1791
        %v1793 = vpop.f32.mrf.mxu0
        %v1794 = vpop.f32.mrf.mxu0
        %v1795 = vadd.f32 0.0, %v1794
        %v1796 = vpop.f32.mrf.mxu0
        %1797 = vmatprep.mubr.bf16.mxu0 0
        %1798 = vmatmul.mubr.bf16.gmra.mxu0 %v1649
        %v1799 = vpop.f32.mrf.mxu0
        %v1800 = vadd.f32 0.0, %v1799
        %v1801 = vpop.f32.mrf.mxu0
        %v1802 = vpop.f32.mrf.mxu0
        %v1803 = vadd.f32 0.0, %v1802
        %v1804 = vpop.f32.mrf.mxu0
        %1805 = vmatprep.mubr.bf16.mxu0 0
        %1806 = vmatmul.mubr.bf16.gmra.mxu0 %v1650
        %v1807 = vpop.f32.mrf.mxu0
        %v1808 = vadd.f32 0.0, %v1807
        %v1809 = vpop.f32.mrf.mxu0
        %v1810 = vpop.f32.mrf.mxu0
        %v1811 = vadd.f32 0.0, %v1810
        %v1812 = vpop.f32.mrf.mxu0
        %1813 = vmatprep.mubr.bf16.mxu0 0
        %1814 = vmatmul.mubr.bf16.gmra.mxu0 %v1651
        %v1815 = vpop.f32.mrf.mxu0
        %v1816 = vadd.f32 0.0, %v1815
        %v1817 = vpop.f32.mrf.mxu0
        %v1818 = vpop.f32.mrf.mxu0
        %v1819 = vadd.f32 0.0, %v1818
        %v1820 = vpop.f32.mrf.mxu0
        %1821 = vmatprep.mubr.bf16.mxu0 0
        %1822 = vmatmul.mubr.bf16.gmra.mxu0 %v1652
        %v1823 = vpop.f32.mrf.mxu0
        %v1824 = vadd.f32 0.0, %v1823
        %v1825 = vpop.f32.mrf.mxu0
        %v1826 = vpop.f32.mrf.mxu0
        %v1827 = vadd.f32 0.0, %v1826
        %v1828 = vpop.f32.mrf.mxu0
        %1829 = vmatprep.mubr.bf16.mxu0 0
        %1830 = vmatmul.mubr.bf16.gmra.mxu0 %v1653
        %v1831 = vpop.f32.mrf.mxu0
        %v1832 = vadd.f32 0.0, %v1831
        %v1833 = vpop.f32.mrf.mxu0
        %v1834 = vpop.f32.mrf.mxu0
        %v1835 = vadd.f32 0.0, %v1834
        %v1836 = vpop.f32.mrf.mxu0
        %1837 = vmatprep.mubr.bf16.mxu0 0
        %1838 = vmatmul.mubr.bf16.gmra.mxu0 %v1654
        %v1839 = vpop.f32.mrf.mxu0
        %v1840 = vadd.f32 0.0, %v1839
        %v1841 = vpop.f32.mrf.mxu0
        %v1842 = vpop.f32.mrf.mxu0
        %v1843 = vadd.f32 0.0, %v1842
        %v1844 = vpop.f32.mrf.mxu0
        %1845 = vmatprep.mubr.bf16.mxu0 0
        %1846 = vmatmul.mubr.bf16.gmra.mxu0 %v1655
        %v1847 = vpop.f32.mrf.mxu0
        %v1848 = vadd.f32 0.0, %v1847
        %v1849 = vpop.f32.mrf.mxu0
        %v1850 = vpop.f32.mrf.mxu0
        %v1851 = vadd.f32 0.0, %v1850
        %v1852 = vpop.f32.mrf.mxu0
        %1853 = vmatprep.mubr.bf16.mxu0 0
        %1854 = vmatmul.mubr.bf16.gmra.mxu0 %v1656
        %v1855 = vpop.f32.mrf.mxu0
        %v1856 = vadd.f32 0.0, %v1855
        %v1857 = vpop.f32.mrf.mxu0
        %v1858 = vpop.f32.mrf.mxu0
        %v1859 = vadd.f32 0.0, %v1858
        %v1860 = vpop.f32.mrf.mxu0
        %1861 = vmatprep.mubr.bf16.mxu0 0
        %1862 = vmatmul.mubr.bf16.gmra.mxu0 %v1657
        %v1863 = vpop.f32.mrf.mxu0
        %v1864 = vadd.f32 0.0, %v1863
        %v1865 = vpop.f32.mrf.mxu0
        %v1866 = vpop.f32.mrf.mxu0
        %v1867 = vadd.f32 0.0, %v1866
        %v1868 = vpop.f32.mrf.mxu0
        %1869 = vmatprep.mubr.bf16.mxu0 0
        %1870 = vmatmul.mubr.bf16.gmra.mxu0 %v1658
        %v1871 = vpop.f32.mrf.mxu0
        %v1872 = vadd.f32 0.0, %v1871
        %v1873 = vpop.f32.mrf.mxu0
        %v1874 = vpop.f32.mrf.mxu0
        %v1875 = vadd.f32 0.0, %v1874
        %v1876 = vpop.f32.mrf.mxu0
        %1877 = vmatprep.mubr.bf16.mxu0 0
        %1878 = vmatmul.mubr.bf16.gmra.mxu0 %v1659
        %v1879 = vpop.f32.mrf.mxu0
        %v1880 = vadd.f32 0.0, %v1879
        %v1881 = vpop.f32.mrf.mxu0
        %v1882 = vpop.f32.mrf.mxu0
        %v1883 = vadd.f32 0.0, %v1882
        %v1884 = vpop.f32.mrf.mxu0
        %1885 = vdwg.mxu0
        %v1886 = vadd.f32 %v1548, %v1760
        %v1887 = vadd.f32 %v1549, %v1763
        %v1888 = vadd.f32 %v1550, %v1768
        %v1889 = vadd.f32 %v1551, %v1771
        %v1890 = vadd.f32 %v1552, %v1776
        %v1891 = vadd.f32 %v1553, %v1779
        %v1892 = vadd.f32 %v1554, %v1784
        %v1893 = vadd.f32 %v1555, %v1787
        %v1894 = vadd.f32 %v1556, %v1792
        %v1895 = vadd.f32 %v1557, %v1795
        %v1896 = vadd.f32 %v1558, %v1800
        %v1897 = vadd.f32 %v1559, %v1803
        %v1898 = vadd.f32 %v1560, %v1808
        %v1899 = vadd.f32 %v1561, %v1811
        %v1900 = vadd.f32 %v1562, %v1816
        %v1901 = vadd.f32 %v1563, %v1819
        %v1902 = vadd.f32 %v1564, %v1824
        %v1903 = vadd.f32 %v1565, %v1827
        %v1904 = vadd.f32 %v1566, %v1832
        %v1905 = vadd.f32 %v1567, %v1835
        %v1906 = vadd.f32 %v1568, %v1840
        %v1907 = vadd.f32 %v1569, %v1843
        %v1908 = vadd.f32 %v1570, %v1848
        %v1909 = vadd.f32 %v1571, %v1851
        %v1910 = vadd.f32 %v1572, %v1856
        %v1911 = vadd.f32 %v1573, %v1859
        %v1912 = vadd.f32 %v1574, %v1864
        %v1913 = vadd.f32 %v1575, %v1867
        %v1914 = vadd.f32 %v1576, %v1872
        %v1915 = vadd.f32 %v1577, %v1875
        %v1916 = vadd.f32 %v1578, %v1880
        %v1917 = vadd.f32 %v1579, %v1883
        %v1918 = vld [vmem:[%s276 + $0x11] sm:$0xff]
        %v1919 = vld [vmem:[%s276 + $0x19] sm:$0xff]
        %v1920 = vld [vmem:[%s276 + $0x21] sm:$0xff]
        %v1921 = vld [vmem:[%s276 + $0x29] sm:$0xff]
        %v1922 = vld [vmem:[%s276 + $0x31] sm:$0xff]
        %v1923 = vld [vmem:[%s276 + $0x39] sm:$0xff]
        %v1924 = vld [vmem:[%s276 + $0x41] sm:$0xff]
        %v1925 = vld [vmem:[%s276 + $0x49] sm:$0xff]
        %v1926 = vld [vmem:[%s276 + $0x51] sm:$0xff]
        %v1927 = vld [vmem:[%s276 + $0x59] sm:$0xff]
        %v1928 = vld [vmem:[%s276 + $0x61] sm:$0xff]
        %v1929 = vld [vmem:[%s276 + $0x69] sm:$0xff]
        %v1930 = vld [vmem:[%s276 + $0x71] sm:$0xff]
        %v1931 = vld [vmem:[%s276 + $0x79] sm:$0xff]
        %v1932 = vld [vmem:[%s276 + $0x81] sm:$0xff]
        %v1933 = vld [vmem:[%s276 + $0x89] sm:$0xff]
        %v1934 = vld [vmem:[%s276 + $0x91] sm:$0xff]
        %v1935 = vld [vmem:[%s276 + $0x99] sm:$0xff]
        %v1936 = vld [vmem:[%s276 + $0xa1] sm:$0xff]
        %v1937 = vld [vmem:[%s276 + $0xa9] sm:$0xff]
        %v1938 = vld [vmem:[%s276 + $0xb1] sm:$0xff]
        %v1939 = vld [vmem:[%s276 + $0xb9] sm:$0xff]
        %v1940 = vld [vmem:[%s276 + $0xc1] sm:$0xff]
        %v1941 = vld [vmem:[%s276 + $0xc9] sm:$0xff]
        %v1942 = vld [vmem:[%s276 + $0xd1] sm:$0xff]
        %v1943 = vld [vmem:[%s276 + $0xd9] sm:$0xff]
        %v1944 = vld [vmem:[%s276 + $0xe1] sm:$0xff]
        %v1945 = vld [vmem:[%s276 + $0xe9] sm:$0xff]
        %v1946 = vld [vmem:[%s276 + $0xf1] sm:$0xff]
        %v1947 = vld [vmem:[%s276 + $0xf9] sm:$0xff]
        %v1948 = vld [vmem:[%s276 + $0x101] sm:$0xff]
        %v1949 = vld [vmem:[%s276 + $0x109] sm:$0xff]
        %v1950 = vpack.c.bf16 %v1919, %v1918
        %v1951 = vpack.c.bf16 %v1921, %v1920
        %v1952 = vpack.c.bf16 %v1923, %v1922
        %v1953 = vpack.c.bf16 %v1925, %v1924
        %v1954 = vpack.c.bf16 %v1927, %v1926
        %v1955 = vpack.c.bf16 %v1929, %v1928
        %v1956 = vpack.c.bf16 %v1931, %v1930
        %v1957 = vpack.c.bf16 %v1933, %v1932
        %v1958 = vpack.c.bf16 %v1935, %v1934
        %v1959 = vpack.c.bf16 %v1937, %v1936
        %v1960 = vpack.c.bf16 %v1939, %v1938
        %v1961 = vpack.c.bf16 %v1941, %v1940
        %v1962 = vpack.c.bf16 %v1943, %v1942
        %v1963 = vpack.c.bf16 %v1945, %v1944
        %v1964 = vpack.c.bf16 %v1947, %v1946
        %v1965 = vpack.c.bf16 %v1949, %v1948
        %s1966 = scalar_lea.vmem %s1, 256
        %v1967 = vld [vmem:[%s1966] sm:$0xf]
        %v1968 = vld [vmem:[%s1966 + $0x4] sm:$0xf]
        %v1969 = vld [vmem:[%s1966 + $0x8] sm:$0xf]
        %v1970 = vld [vmem:[%s1966 + $0xc] sm:$0xf]
        %v1971 = vld [vmem:[%s1966 + $0x10] sm:$0xf]
        %v1972 = vld [vmem:[%s1966 + $0x14] sm:$0xf]
        %v1973 = vld [vmem:[%s1966 + $0x18] sm:$0xf]
        %v1974 = vld [vmem:[%s1966 + $0x1c] sm:$0xf]
        %v1975 = vld [vmem:[%s1966 + $0x20] sm:$0xf]
        %v1976 = vld [vmem:[%s1966 + $0x24] sm:$0xf]
        %v1977 = vld [vmem:[%s1966 + $0x28] sm:$0xf]
        %v1978 = vld [vmem:[%s1966 + $0x2c] sm:$0xf]
        %v1979 = vld [vmem:[%s1966 + $0x30] sm:$0xf]
        %v1980 = vld [vmem:[%s1966 + $0x34] sm:$0xf]
        %v1981 = vld [vmem:[%s1966 + $0x38] sm:$0xf]
        %v1982 = vld [vmem:[%s1966 + $0x3c] sm:$0xf]
        %v1999 = vunpack.c.l.b16 %v1967
        %v2000 = vunpack.c.l.b16 %v1968
        %v2001 = vunpack.c.l.b16 %v1969
        %v2002 = vunpack.c.l.b16 %v1970
        %v2003 = vunpack.c.l.b16 %v1971
        %v2004 = vunpack.c.l.b16 %v1972
        %v2005 = vunpack.c.l.b16 %v1973
        %v2006 = vunpack.c.l.b16 %v1974
        %v2007 = vunpack.c.l.b16 %v1975
        %v2008 = vunpack.c.l.b16 %v1976
        %v2009 = vunpack.c.l.b16 %v1977
        %v2010 = vunpack.c.l.b16 %v1978
        %v2011 = vunpack.c.l.b16 %v1979
        %v2012 = vunpack.c.l.b16 %v1980
        %v2013 = vunpack.c.l.b16 %v1981
        %v2014 = vunpack.c.l.b16 %v1982
        %v2015 = vpack.c.b16 %v2000, %v1999
        %v2016 = vpack.c.b16 %v2002, %v2001
        %v2017 = vpack.c.b16 %v2004, %v2003
        %v2018 = vpack.c.b16 %v2006, %v2005
        %v2019 = vpack.c.b16 %v2008, %v2007
        %v2020 = vpack.c.b16 %v2010, %v2009
        %v2021 = vpack.c.b16 %v2012, %v2011
        %v2022 = vpack.c.b16 %v2014, %v2013
        %2031 = vmatprep.subr.bf16.mxu0 0
        %2032 = vmatpush1.bf16.msra.mxu0 %v2022
        %2033 = vmatprep.subr.bf16.mxu0 0
        %2034 = vmatpush1.bf16.msra.mxu0 %v2021
        %2035 = vmatprep.subr.bf16.mxu0 0
        %2036 = vmatpush1.bf16.msra.mxu0 %v2020
        %2037 = vmatprep.subr.bf16.mxu0 0
        %2038 = vmatpush1.bf16.msra.mxu0 %v2019
        %2039 = vmatprep.subr.bf16.mxu0 0
        %2040 = vmatpush1.bf16.msra.mxu0 %v2018
        %2041 = vmatprep.subr.bf16.mxu0 0
        %2042 = vmatpush1.bf16.msra.mxu0 %v2017
        %2043 = vmatprep.subr.bf16.mxu0 0
        %2044 = vmatpush1.bf16.msra.mxu0 %v2016
        %2045 = vmatprep.subr.bf16.mxu0 0
        %2046 = vmatpush1.bf16.msra.mxu0 %v2015
        %2047 = vmatprep.subr.bf16.mxu0 0
        %2048 = vmatpush2.bf16.msra.mxu0 0
        %2049 = vmatprep.subr.bf16.mxu0 0
        %2050 = vmatpush2.bf16.msra.mxu0 0
        %2051 = vmatprep.subr.bf16.mxu0 0
        %2052 = vmatpush2.bf16.msra.mxu0 0
        %2053 = vmatprep.subr.bf16.mxu0 0
        %2054 = vmatpush2.bf16.msra.mxu0 0
        %2055 = vmatprep.subr.bf16.mxu0 0
        %2056 = vmatpush2.bf16.msra.mxu0 0
        %2057 = vmatprep.subr.bf16.mxu0 0
        %2058 = vmatpush2.bf16.msra.mxu0 0
        %2059 = vmatprep.subr.bf16.mxu0 0
        %2060 = vmatpush2.bf16.msra.mxu0 0
        %2061 = vmatprep.subr.bf16.mxu0 0
        %2062 = vmatpush2.bf16.msra.mxu0 0
        %2063 = vmatprep.mubr.bf16.mxu0 0
        %2064 = vmatmul.mubr.bf16.gmra.mxu0 %v1950
        %v2065 = vpop.f32.mrf.mxu0
        %v2066 = vadd.f32 0.0, %v2065
        %v2067 = vpop.f32.mrf.mxu0
        %v2068 = vpop.f32.mrf.mxu0
        %v2069 = vadd.f32 0.0, %v2068
        %v2070 = vpop.f32.mrf.mxu0
        %2071 = vmatprep.mubr.bf16.mxu0 0
        %2072 = vmatmul.mubr.bf16.gmra.mxu0 %v1951
        %v2073 = vpop.f32.mrf.mxu0
        %v2074 = vadd.f32 0.0, %v2073
        %v2075 = vpop.f32.mrf.mxu0
        %v2076 = vpop.f32.mrf.mxu0
        %v2077 = vadd.f32 0.0, %v2076
        %v2078 = vpop.f32.mrf.mxu0
        %2079 = vmatprep.mubr.bf16.mxu0 0
        %2080 = vmatmul.mubr.bf16.gmra.mxu0 %v1952
        %v2081 = vpop.f32.mrf.mxu0
        %v2082 = vadd.f32 0.0, %v2081
        %v2083 = vpop.f32.mrf.mxu0
        %v2084 = vpop.f32.mrf.mxu0
        %v2085 = vadd.f32 0.0, %v2084
        %v2086 = vpop.f32.mrf.mxu0
        %2087 = vmatprep.mubr.bf16.mxu0 0
        %2088 = vmatmul.mubr.bf16.gmra.mxu0 %v1953
        %v2089 = vpop.f32.mrf.mxu0
        %v2090 = vadd.f32 0.0, %v2089
        %v2091 = vpop.f32.mrf.mxu0
        %v2092 = vpop.f32.mrf.mxu0
        %v2093 = vadd.f32 0.0, %v2092
        %v2094 = vpop.f32.mrf.mxu0
        %2095 = vmatprep.mubr.bf16.mxu0 0
        %2096 = vmatmul.mubr.bf16.gmra.mxu0 %v1954
        %v2097 = vpop.f32.mrf.mxu0
        %v2098 = vadd.f32 0.0, %v2097
        %v2099 = vpop.f32.mrf.mxu0
        %v2100 = vpop.f32.mrf.mxu0
        %v2101 = vadd.f32 0.0, %v2100
        %v2102 = vpop.f32.mrf.mxu0
        %2103 = vmatprep.mubr.bf16.mxu0 0
        %2104 = vmatmul.mubr.bf16.gmra.mxu0 %v1955
        %v2105 = vpop.f32.mrf.mxu0
        %v2106 = vadd.f32 0.0, %v2105
        %v2107 = vpop.f32.mrf.mxu0
        %v2108 = vpop.f32.mrf.mxu0
        %v2109 = vadd.f32 0.0, %v2108
        %v2110 = vpop.f32.mrf.mxu0
        %2111 = vmatprep.mubr.bf16.mxu0 0
        %2112 = vmatmul.mubr.bf16.gmra.mxu0 %v1956
        %v2113 = vpop.f32.mrf.mxu0
        %v2114 = vadd.f32 0.0, %v2113
        %v2115 = vpop.f32.mrf.mxu0
        %v2116 = vpop.f32.mrf.mxu0
        %v2117 = vadd.f32 0.0, %v2116
        %v2118 = vpop.f32.mrf.mxu0
        %2119 = vmatprep.mubr.bf16.mxu0 0
        %2120 = vmatmul.mubr.bf16.gmra.mxu0 %v1957
        %v2121 = vpop.f32.mrf.mxu0
        %v2122 = vadd.f32 0.0, %v2121
        %v2123 = vpop.f32.mrf.mxu0
        %v2124 = vpop.f32.mrf.mxu0
        %v2125 = vadd.f32 0.0, %v2124
        %v2126 = vpop.f32.mrf.mxu0
        %2127 = vmatprep.mubr.bf16.mxu0 0
        %2128 = vmatmul.mubr.bf16.gmra.mxu0 %v1958
        %v2129 = vpop.f32.mrf.mxu0
        %v2130 = vadd.f32 0.0, %v2129
        %v2131 = vpop.f32.mrf.mxu0
        %v2132 = vpop.f32.mrf.mxu0
        %v2133 = vadd.f32 0.0, %v2132
        %v2134 = vpop.f32.mrf.mxu0
        %2135 = vmatprep.mubr.bf16.mxu0 0
        %2136 = vmatmul.mubr.bf16.gmra.mxu0 %v1959
        %v2137 = vpop.f32.mrf.mxu0
        %v2138 = vadd.f32 0.0, %v2137
        %v2139 = vpop.f32.mrf.mxu0
        %v2140 = vpop.f32.mrf.mxu0
        %v2141 = vadd.f32 0.0, %v2140
        %v2142 = vpop.f32.mrf.mxu0
        %2143 = vmatprep.mubr.bf16.mxu0 0
        %2144 = vmatmul.mubr.bf16.gmra.mxu0 %v1960
        %v2145 = vpop.f32.mrf.mxu0
        %v2146 = vadd.f32 0.0, %v2145
        %v2147 = vpop.f32.mrf.mxu0
        %v2148 = vpop.f32.mrf.mxu0
        %v2149 = vadd.f32 0.0, %v2148
        %v2150 = vpop.f32.mrf.mxu0
        %2151 = vmatprep.mubr.bf16.mxu0 0
        %2152 = vmatmul.mubr.bf16.gmra.mxu0 %v1961
        %v2153 = vpop.f32.mrf.mxu0
        %v2154 = vadd.f32 0.0, %v2153
        %v2155 = vpop.f32.mrf.mxu0
        %v2156 = vpop.f32.mrf.mxu0
        %v2157 = vadd.f32 0.0, %v2156
        %v2158 = vpop.f32.mrf.mxu0
        %2159 = vmatprep.mubr.bf16.mxu0 0
        %2160 = vmatmul.mubr.bf16.gmra.mxu0 %v1962
        %v2161 = vpop.f32.mrf.mxu0
        %v2162 = vadd.f32 0.0, %v2161
        %v2163 = vpop.f32.mrf.mxu0
        %v2164 = vpop.f32.mrf.mxu0
        %v2165 = vadd.f32 0.0, %v2164
        %v2166 = vpop.f32.mrf.mxu0
        %2167 = vmatprep.mubr.bf16.mxu0 0
        %2168 = vmatmul.mubr.bf16.gmra.mxu0 %v1963
        %v2169 = vpop.f32.mrf.mxu0
        %v2170 = vadd.f32 0.0, %v2169
        %v2171 = vpop.f32.mrf.mxu0
        %v2172 = vpop.f32.mrf.mxu0
        %v2173 = vadd.f32 0.0, %v2172
        %v2174 = vpop.f32.mrf.mxu0
        %2175 = vmatprep.mubr.bf16.mxu0 0
        %2176 = vmatmul.mubr.bf16.gmra.mxu0 %v1964
        %v2177 = vpop.f32.mrf.mxu0
        %v2178 = vadd.f32 0.0, %v2177
        %v2179 = vpop.f32.mrf.mxu0
        %v2180 = vpop.f32.mrf.mxu0
        %v2181 = vadd.f32 0.0, %v2180
        %v2182 = vpop.f32.mrf.mxu0
        %2183 = vmatprep.mubr.bf16.mxu0 0
        %2184 = vmatmul.mubr.bf16.gmra.mxu0 %v1965
        %v2185 = vpop.f32.mrf.mxu0
        %v2186 = vadd.f32 0.0, %v2185
        %v2187 = vpop.f32.mrf.mxu0
        %v2188 = vpop.f32.mrf.mxu0
        %v2189 = vadd.f32 0.0, %v2188
        %v2190 = vpop.f32.mrf.mxu0
        %2191 = vdwg.mxu0
        %v2192 = vadd.f32 %v1886, %v2066
        %v2193 = vadd.f32 %v1887, %v2069
        %v2194 = vadd.f32 %v1888, %v2074
        %v2195 = vadd.f32 %v1889, %v2077
        %v2196 = vadd.f32 %v1890, %v2082
        %v2197 = vadd.f32 %v1891, %v2085
        %v2198 = vadd.f32 %v1892, %v2090
        %v2199 = vadd.f32 %v1893, %v2093
        %v2200 = vadd.f32 %v1894, %v2098
        %v2201 = vadd.f32 %v1895, %v2101
        %v2202 = vadd.f32 %v1896, %v2106
        %v2203 = vadd.f32 %v1897, %v2109
        %v2204 = vadd.f32 %v1898, %v2114
        %v2205 = vadd.f32 %v1899, %v2117
        %v2206 = vadd.f32 %v1900, %v2122
        %v2207 = vadd.f32 %v1901, %v2125
        %v2208 = vadd.f32 %v1902, %v2130
        %v2209 = vadd.f32 %v1903, %v2133
        %v2210 = vadd.f32 %v1904, %v2138
        %v2211 = vadd.f32 %v1905, %v2141
        %v2212 = vadd.f32 %v1906, %v2146
        %v2213 = vadd.f32 %v1907, %v2149
        %v2214 = vadd.f32 %v1908, %v2154
        %v2215 = vadd.f32 %v1909, %v2157
        %v2216 = vadd.f32 %v1910, %v2162
        %v2217 = vadd.f32 %v1911, %v2165
        %v2218 = vadd.f32 %v1912, %v2170
        %v2219 = vadd.f32 %v1913, %v2173
        %v2220 = vadd.f32 %v1914, %v2178
        %v2221 = vadd.f32 %v1915, %v2181
        %v2222 = vadd.f32 %v1916, %v2186
        %v2223 = vadd.f32 %v1917, %v2189
        %v2224 = vld [vmem:[%s276 + $0x12] sm:$0xff]
        %v2225 = vld [vmem:[%s276 + $0x1a] sm:$0xff]
        %v2226 = vld [vmem:[%s276 + $0x22] sm:$0xff]
        %v2227 = vld [vmem:[%s276 + $0x2a] sm:$0xff]
        %v2228 = vld [vmem:[%s276 + $0x32] sm:$0xff]
        %v2229 = vld [vmem:[%s276 + $0x3a] sm:$0xff]
        %v2230 = vld [vmem:[%s276 + $0x42] sm:$0xff]
        %v2231 = vld [vmem:[%s276 + $0x4a] sm:$0xff]
        %v2232 = vld [vmem:[%s276 + $0x52] sm:$0xff]
        %v2233 = vld [vmem:[%s276 + $0x5a] sm:$0xff]
        %v2234 = vld [vmem:[%s276 + $0x62] sm:$0xff]
        %v2235 = vld [vmem:[%s276 + $0x6a] sm:$0xff]
        %v2236 = vld [vmem:[%s276 + $0x72] sm:$0xff]
        %v2237 = vld [vmem:[%s276 + $0x7a] sm:$0xff]
        %v2238 = vld [vmem:[%s276 + $0x82] sm:$0xff]
        %v2239 = vld [vmem:[%s276 + $0x8a] sm:$0xff]
        %v2240 = vld [vmem:[%s276 + $0x92] sm:$0xff]
        %v2241 = vld [vmem:[%s276 + $0x9a] sm:$0xff]
        %v2242 = vld [vmem:[%s276 + $0xa2] sm:$0xff]
        %v2243 = vld [vmem:[%s276 + $0xaa] sm:$0xff]
        %v2244 = vld [vmem:[%s276 + $0xb2] sm:$0xff]
        %v2245 = vld [vmem:[%s276 + $0xba] sm:$0xff]
        %v2246 = vld [vmem:[%s276 + $0xc2] sm:$0xff]
        %v2247 = vld [vmem:[%s276 + $0xca] sm:$0xff]
        %v2248 = vld [vmem:[%s276 + $0xd2] sm:$0xff]
        %v2249 = vld [vmem:[%s276 + $0xda] sm:$0xff]
        %v2250 = vld [vmem:[%s276 + $0xe2] sm:$0xff]
        %v2251 = vld [vmem:[%s276 + $0xea] sm:$0xff]
        %v2252 = vld [vmem:[%s276 + $0xf2] sm:$0xff]
        %v2253 = vld [vmem:[%s276 + $0xfa] sm:$0xff]
        %v2254 = vld [vmem:[%s276 + $0x102] sm:$0xff]
        %v2255 = vld [vmem:[%s276 + $0x10a] sm:$0xff]
        %v2256 = vmul.f32 %v2224, %v1117
        %v2257 = vmul.f32 %v2225, %v1122
        %v2258 = vmul.f32 %v2226, %v1127
        %v2259 = vmul.f32 %v2227, %v1132
        %v2260 = vmul.f32 %v2228, %v1137
        %v2261 = vmul.f32 %v2229, %v1142
        %v2262 = vmul.f32 %v2230, %v1147
        %v2263 = vmul.f32 %v2231, %v1152
        %v2264 = vmul.f32 %v2232, %v1157
        %v2265 = vmul.f32 %v2233, %v1162
        %v2266 = vmul.f32 %v2234, %v1167
        %v2267 = vmul.f32 %v2235, %v1172
        %v2268 = vmul.f32 %v2236, %v1177
        %v2269 = vmul.f32 %v2237, %v1182
        %v2270 = vmul.f32 %v2238, %v1187
        %v2271 = vmul.f32 %v2239, %v1192
        %v2272 = vmul.f32 %v2240, %v1197
        %v2273 = vmul.f32 %v2241, %v1202
        %v2274 = vmul.f32 %v2242, %v1207
        %v2275 = vmul.f32 %v2243, %v1212
        %v2276 = vmul.f32 %v2244, %v1217
        %v2277 = vmul.f32 %v2245, %v1222
        %v2278 = vmul.f32 %v2246, %v1227
        %v2279 = vmul.f32 %v2247, %v1232
        %v2280 = vmul.f32 %v2248, %v1237
        %v2281 = vmul.f32 %v2249, %v1242
        %v2282 = vmul.f32 %v2250, %v1247
        %v2283 = vmul.f32 %v2251, %v1252
        %v2284 = vmul.f32 %v2252, %v1257
        %v2285 = vmul.f32 %v2253, %v1262
        %v2286 = vmul.f32 %v2254, %v1267
        %v2287 = vmul.f32 %v2255, %v1272
        %v2288 = vpack.c.bf16 %v2257, %v2256
        %v2289 = vpack.c.bf16 %v2259, %v2258
        %v2290 = vpack.c.bf16 %v2261, %v2260
        %v2291 = vpack.c.bf16 %v2263, %v2262
        %v2292 = vpack.c.bf16 %v2265, %v2264
        %v2293 = vpack.c.bf16 %v2267, %v2266
        %v2294 = vpack.c.bf16 %v2269, %v2268
        %v2295 = vpack.c.bf16 %v2271, %v2270
        %v2296 = vpack.c.bf16 %v2273, %v2272
        %v2297 = vpack.c.bf16 %v2275, %v2274
        %v2298 = vpack.c.bf16 %v2277, %v2276
        %v2299 = vpack.c.bf16 %v2279, %v2278
        %v2300 = vpack.c.bf16 %v2281, %v2280
        %v2301 = vpack.c.bf16 %v2283, %v2282
        %v2302 = vpack.c.bf16 %v2285, %v2284
        %v2303 = vpack.c.bf16 %v2287, %v2286
        %s2304 = scalar_lea.vmem %s1, 320
        %v2305 = vld [vmem:[%s2304] sm:$0xf]
        %v2306 = vld [vmem:[%s2304 + $0x4] sm:$0xf]
        %v2307 = vld [vmem:[%s2304 + $0x8] sm:$0xf]
        %v2308 = vld [vmem:[%s2304 + $0xc] sm:$0xf]
        %v2309 = vld [vmem:[%s2304 + $0x10] sm:$0xf]
        %v2310 = vld [vmem:[%s2304 + $0x14] sm:$0xf]
        %v2311 = vld [vmem:[%s2304 + $0x18] sm:$0xf]
        %v2312 = vld [vmem:[%s2304 + $0x1c] sm:$0xf]
        %v2313 = vld [vmem:[%s2304 + $0x20] sm:$0xf]
        %v2314 = vld [vmem:[%s2304 + $0x24] sm:$0xf]
        %v2315 = vld [vmem:[%s2304 + $0x28] sm:$0xf]
        %v2316 = vld [vmem:[%s2304 + $0x2c] sm:$0xf]
        %v2317 = vld [vmem:[%s2304 + $0x30] sm:$0xf]
        %v2318 = vld [vmem:[%s2304 + $0x34] sm:$0xf]
        %v2319 = vld [vmem:[%s2304 + $0x38] sm:$0xf]
        %v2320 = vld [vmem:[%s2304 + $0x3c] sm:$0xf]
        %v2337 = vunpack.c.l.b16 %v2305
        %v2338 = vunpack.c.l.b16 %v2306
        %v2339 = vunpack.c.l.b16 %v2307
        %v2340 = vunpack.c.l.b16 %v2308
        %v2341 = vunpack.c.l.b16 %v2309
        %v2342 = vunpack.c.l.b16 %v2310
        %v2343 = vunpack.c.l.b16 %v2311
        %v2344 = vunpack.c.l.b16 %v2312
        %v2345 = vunpack.c.l.b16 %v2313
        %v2346 = vunpack.c.l.b16 %v2314
        %v2347 = vunpack.c.l.b16 %v2315
        %v2348 = vunpack.c.l.b16 %v2316
        %v2349 = vunpack.c.l.b16 %v2317
        %v2350 = vunpack.c.l.b16 %v2318
        %v2351 = vunpack.c.l.b16 %v2319
        %v2352 = vunpack.c.l.b16 %v2320
        %v2353 = vpack.c.b16 %v2338, %v2337
        %v2354 = vpack.c.b16 %v2340, %v2339
        %v2355 = vpack.c.b16 %v2342, %v2341
        %v2356 = vpack.c.b16 %v2344, %v2343
        %v2357 = vpack.c.b16 %v2346, %v2345
        %v2358 = vpack.c.b16 %v2348, %v2347
        %v2359 = vpack.c.b16 %v2350, %v2349
        %v2360 = vpack.c.b16 %v2352, %v2351
        %2369 = vmatprep.subr.bf16.mxu0 0
        %2370 = vmatpush1.bf16.msra.mxu0 %v2360
        %2371 = vmatprep.subr.bf16.mxu0 0
        %2372 = vmatpush1.bf16.msra.mxu0 %v2359
        %2373 = vmatprep.subr.bf16.mxu0 0
        %2374 = vmatpush1.bf16.msra.mxu0 %v2358
        %2375 = vmatprep.subr.bf16.mxu0 0
        %2376 = vmatpush1.bf16.msra.mxu0 %v2357
        %2377 = vmatprep.subr.bf16.mxu0 0
        %2378 = vmatpush1.bf16.msra.mxu0 %v2356
        %2379 = vmatprep.subr.bf16.mxu0 0
        %2380 = vmatpush1.bf16.msra.mxu0 %v2355
        %2381 = vmatprep.subr.bf16.mxu0 0
        %2382 = vmatpush1.bf16.msra.mxu0 %v2354
        %2383 = vmatprep.subr.bf16.mxu0 0
        %2384 = vmatpush1.bf16.msra.mxu0 %v2353
        %2385 = vmatprep.subr.bf16.mxu0 0
        %2386 = vmatpush2.bf16.msra.mxu0 0
        %2387 = vmatprep.subr.bf16.mxu0 0
        %2388 = vmatpush2.bf16.msra.mxu0 0
        %2389 = vmatprep.subr.bf16.mxu0 0
        %2390 = vmatpush2.bf16.msra.mxu0 0
        %2391 = vmatprep.subr.bf16.mxu0 0
        %2392 = vmatpush2.bf16.msra.mxu0 0
        %2393 = vmatprep.subr.bf16.mxu0 0
        %2394 = vmatpush2.bf16.msra.mxu0 0
        %2395 = vmatprep.subr.bf16.mxu0 0
        %2396 = vmatpush2.bf16.msra.mxu0 0
        %2397 = vmatprep.subr.bf16.mxu0 0
        %2398 = vmatpush2.bf16.msra.mxu0 0
        %2399 = vmatprep.subr.bf16.mxu0 0
        %2400 = vmatpush2.bf16.msra.mxu0 0
        %2401 = vmatprep.mubr.bf16.mxu0 0
        %2402 = vmatmul.mubr.bf16.gmra.mxu0 %v2288
        %v2403 = vpop.f32.mrf.mxu0
        %v2404 = vadd.f32 0.0, %v2403
        %v2405 = vpop.f32.mrf.mxu0
        %v2406 = vpop.f32.mrf.mxu0
        %v2407 = vadd.f32 0.0, %v2406
        %v2408 = vpop.f32.mrf.mxu0
        %2409 = vmatprep.mubr.bf16.mxu0 0
        %2410 = vmatmul.mubr.bf16.gmra.mxu0 %v2289
        %v2411 = vpop.f32.mrf.mxu0
        %v2412 = vadd.f32 0.0, %v2411
        %v2413 = vpop.f32.mrf.mxu0
        %v2414 = vpop.f32.mrf.mxu0
        %v2415 = vadd.f32 0.0, %v2414
        %v2416 = vpop.f32.mrf.mxu0
        %2417 = vmatprep.mubr.bf16.mxu0 0
        %2418 = vmatmul.mubr.bf16.gmra.mxu0 %v2290
        %v2419 = vpop.f32.mrf.mxu0
        %v2420 = vadd.f32 0.0, %v2419
        %v2421 = vpop.f32.mrf.mxu0
        %v2422 = vpop.f32.mrf.mxu0
        %v2423 = vadd.f32 0.0, %v2422
        %v2424 = vpop.f32.mrf.mxu0
        %2425 = vmatprep.mubr.bf16.mxu0 0
        %2426 = vmatmul.mubr.bf16.gmra.mxu0 %v2291
        %v2427 = vpop.f32.mrf.mxu0
        %v2428 = vadd.f32 0.0, %v2427
        %v2429 = vpop.f32.mrf.mxu0
        %v2430 = vpop.f32.mrf.mxu0
        %v2431 = vadd.f32 0.0, %v2430
        %v2432 = vpop.f32.mrf.mxu0
        %2433 = vmatprep.mubr.bf16.mxu0 0
        %2434 = vmatmul.mubr.bf16.gmra.mxu0 %v2292
        %v2435 = vpop.f32.mrf.mxu0
        %v2436 = vadd.f32 0.0, %v2435
        %v2437 = vpop.f32.mrf.mxu0
        %v2438 = vpop.f32.mrf.mxu0
        %v2439 = vadd.f32 0.0, %v2438
        %v2440 = vpop.f32.mrf.mxu0
        %2441 = vmatprep.mubr.bf16.mxu0 0
        %2442 = vmatmul.mubr.bf16.gmra.mxu0 %v2293
        %v2443 = vpop.f32.mrf.mxu0
        %v2444 = vadd.f32 0.0, %v2443
        %v2445 = vpop.f32.mrf.mxu0
        %v2446 = vpop.f32.mrf.mxu0
        %v2447 = vadd.f32 0.0, %v2446
        %v2448 = vpop.f32.mrf.mxu0
        %2449 = vmatprep.mubr.bf16.mxu0 0
        %2450 = vmatmul.mubr.bf16.gmra.mxu0 %v2294
        %v2451 = vpop.f32.mrf.mxu0
        %v2452 = vadd.f32 0.0, %v2451
        %v2453 = vpop.f32.mrf.mxu0
        %v2454 = vpop.f32.mrf.mxu0
        %v2455 = vadd.f32 0.0, %v2454
        %v2456 = vpop.f32.mrf.mxu0
        %2457 = vmatprep.mubr.bf16.mxu0 0
        %2458 = vmatmul.mubr.bf16.gmra.mxu0 %v2295
        %v2459 = vpop.f32.mrf.mxu0
        %v2460 = vadd.f32 0.0, %v2459
        %v2461 = vpop.f32.mrf.mxu0
        %v2462 = vpop.f32.mrf.mxu0
        %v2463 = vadd.f32 0.0, %v2462
        %v2464 = vpop.f32.mrf.mxu0
        %2465 = vmatprep.mubr.bf16.mxu0 0
        %2466 = vmatmul.mubr.bf16.gmra.mxu0 %v2296
        %v2467 = vpop.f32.mrf.mxu0
        %v2468 = vadd.f32 0.0, %v2467
        %v2469 = vpop.f32.mrf.mxu0
        %v2470 = vpop.f32.mrf.mxu0
        %v2471 = vadd.f32 0.0, %v2470
        %v2472 = vpop.f32.mrf.mxu0
        %2473 = vmatprep.mubr.bf16.mxu0 0
        %2474 = vmatmul.mubr.bf16.gmra.mxu0 %v2297
        %v2475 = vpop.f32.mrf.mxu0
        %v2476 = vadd.f32 0.0, %v2475
        %v2477 = vpop.f32.mrf.mxu0
        %v2478 = vpop.f32.mrf.mxu0
        %v2479 = vadd.f32 0.0, %v2478
        %v2480 = vpop.f32.mrf.mxu0
        %2481 = vmatprep.mubr.bf16.mxu0 0
        %2482 = vmatmul.mubr.bf16.gmra.mxu0 %v2298
        %v2483 = vpop.f32.mrf.mxu0
        %v2484 = vadd.f32 0.0, %v2483
        %v2485 = vpop.f32.mrf.mxu0
        %v2486 = vpop.f32.mrf.mxu0
        %v2487 = vadd.f32 0.0, %v2486
        %v2488 = vpop.f32.mrf.mxu0
        %2489 = vmatprep.mubr.bf16.mxu0 0
        %2490 = vmatmul.mubr.bf16.gmra.mxu0 %v2299
        %v2491 = vpop.f32.mrf.mxu0
        %v2492 = vadd.f32 0.0, %v2491
        %v2493 = vpop.f32.mrf.mxu0
        %v2494 = vpop.f32.mrf.mxu0
        %v2495 = vadd.f32 0.0, %v2494
        %v2496 = vpop.f32.mrf.mxu0
        %2497 = vmatprep.mubr.bf16.mxu0 0
        %2498 = vmatmul.mubr.bf16.gmra.mxu0 %v2300
        %v2499 = vpop.f32.mrf.mxu0
        %v2500 = vadd.f32 0.0, %v2499
        %v2501 = vpop.f32.mrf.mxu0
        %v2502 = vpop.f32.mrf.mxu0
        %v2503 = vadd.f32 0.0, %v2502
        %v2504 = vpop.f32.mrf.mxu0
        %2505 = vmatprep.mubr.bf16.mxu0 0
        %2506 = vmatmul.mubr.bf16.gmra.mxu0 %v2301
        %v2507 = vpop.f32.mrf.mxu0
        %v2508 = vadd.f32 0.0, %v2507
        %v2509 = vpop.f32.mrf.mxu0
        %v2510 = vpop.f32.mrf.mxu0
        %v2511 = vadd.f32 0.0, %v2510
        %v2512 = vpop.f32.mrf.mxu0
        %2513 = vmatprep.mubr.bf16.mxu0 0
        %2514 = vmatmul.mubr.bf16.gmra.mxu0 %v2302
        %v2515 = vpop.f32.mrf.mxu0
        %v2516 = vadd.f32 0.0, %v2515
        %v2517 = vpop.f32.mrf.mxu0
        %v2518 = vpop.f32.mrf.mxu0
        %v2519 = vadd.f32 0.0, %v2518
        %v2520 = vpop.f32.mrf.mxu0
        %2521 = vmatprep.mubr.bf16.mxu0 0
        %2522 = vmatmul.mubr.bf16.gmra.mxu0 %v2303
        %v2523 = vpop.f32.mrf.mxu0
        %v2524 = vadd.f32 0.0, %v2523
        %v2525 = vpop.f32.mrf.mxu0
        %v2526 = vpop.f32.mrf.mxu0
        %v2527 = vadd.f32 0.0, %v2526
        %v2528 = vpop.f32.mrf.mxu0
        %2529 = vdwg.mxu0
        %v2530 = vadd.f32 %v2192, %v2404
        %v2531 = vadd.f32 %v2193, %v2407
        %v2532 = vadd.f32 %v2194, %v2412
        %v2533 = vadd.f32 %v2195, %v2415
        %v2534 = vadd.f32 %v2196, %v2420
        %v2535 = vadd.f32 %v2197, %v2423
        %v2536 = vadd.f32 %v2198, %v2428
        %v2537 = vadd.f32 %v2199, %v2431
        %v2538 = vadd.f32 %v2200, %v2436
        %v2539 = vadd.f32 %v2201, %v2439
        %v2540 = vadd.f32 %v2202, %v2444
        %v2541 = vadd.f32 %v2203, %v2447
        %v2542 = vadd.f32 %v2204, %v2452
        %v2543 = vadd.f32 %v2205, %v2455
        %v2544 = vadd.f32 %v2206, %v2460
        %v2545 = vadd.f32 %v2207, %v2463
        %v2546 = vadd.f32 %v2208, %v2468
        %v2547 = vadd.f32 %v2209, %v2471
        %v2548 = vadd.f32 %v2210, %v2476
        %v2549 = vadd.f32 %v2211, %v2479
        %v2550 = vadd.f32 %v2212, %v2484
        %v2551 = vadd.f32 %v2213, %v2487
        %v2552 = vadd.f32 %v2214, %v2492
        %v2553 = vadd.f32 %v2215, %v2495
        %v2554 = vadd.f32 %v2216, %v2500
        %v2555 = vadd.f32 %v2217, %v2503
        %v2556 = vadd.f32 %v2218, %v2508
        %v2557 = vadd.f32 %v2219, %v2511
        %v2558 = vadd.f32 %v2220, %v2516
        %v2559 = vadd.f32 %v2221, %v2519
        %v2560 = vadd.f32 %v2222, %v2524
        %v2561 = vadd.f32 %v2223, %v2527
        %v2562 = vld [vmem:[%s276 + $0x20] sm:$0xff]
        %v2563 = vld [vmem:[%s276 + $0x28] sm:$0xff]
        %v2564 = vld [vmem:[%s276 + $0x30] sm:$0xff]
        %v2565 = vld [vmem:[%s276 + $0x38] sm:$0xff]
        %v2566 = vld [vmem:[%s276 + $0x40] sm:$0xff]
        %v2567 = vld [vmem:[%s276 + $0x48] sm:$0xff]
        %v2568 = vld [vmem:[%s276 + $0x50] sm:$0xff]
        %v2569 = vld [vmem:[%s276 + $0x58] sm:$0xff]
        %v2570 = vld [vmem:[%s276 + $0x60] sm:$0xff]
        %v2571 = vld [vmem:[%s276 + $0x68] sm:$0xff]
        %v2572 = vld [vmem:[%s276 + $0x70] sm:$0xff]
        %v2573 = vld [vmem:[%s276 + $0x78] sm:$0xff]
        %v2574 = vld [vmem:[%s276 + $0x80] sm:$0xff]
        %v2575 = vld [vmem:[%s276 + $0x88] sm:$0xff]
        %v2576 = vld [vmem:[%s276 + $0x90] sm:$0xff]
        %v2577 = vld [vmem:[%s276 + $0x98] sm:$0xff]
        %v2578 = vld [vmem:[%s276 + $0xa0] sm:$0xff]
        %v2579 = vld [vmem:[%s276 + $0xa8] sm:$0xff]
        %v2580 = vld [vmem:[%s276 + $0xb0] sm:$0xff]
        %v2581 = vld [vmem:[%s276 + $0xb8] sm:$0xff]
        %v2582 = vld [vmem:[%s276 + $0xc0] sm:$0xff]
        %v2583 = vld [vmem:[%s276 + $0xc8] sm:$0xff]
        %v2584 = vld [vmem:[%s276 + $0xd0] sm:$0xff]
        %v2585 = vld [vmem:[%s276 + $0xd8] sm:$0xff]
        %v2586 = vld [vmem:[%s276 + $0xe0] sm:$0xff]
        %v2587 = vld [vmem:[%s276 + $0xe8] sm:$0xff]
        %v2588 = vld [vmem:[%s276 + $0xf0] sm:$0xff]
        %v2589 = vld [vmem:[%s276 + $0xf8] sm:$0xff]
        %v2590 = vld [vmem:[%s276 + $0x100] sm:$0xff]
        %v2591 = vld [vmem:[%s276 + $0x108] sm:$0xff]
        %v2592 = vld [vmem:[%s276 + $0x110] sm:$0xff]
        %v2593 = vld [vmem:[%s276 + $0x118] sm:$0xff]
        %v2594 = vmul.f32 %v2562, %v345
        %v2595 = vmul.f32 %v2563, %v350
        %v2596 = vmul.f32 %v2564, %v355
        %v2597 = vmul.f32 %v2565, %v360
        %v2598 = vmul.f32 %v2566, %v365
        %v2599 = vmul.f32 %v2567, %v370
        %v2600 = vmul.f32 %v2568, %v375
        %v2601 = vmul.f32 %v2569, %v380
        %v2602 = vmul.f32 %v2570, %v385
        %v2603 = vmul.f32 %v2571, %v390
        %v2604 = vmul.f32 %v2572, %v395
        %v2605 = vmul.f32 %v2573, %v400
        %v2606 = vmul.f32 %v2574, %v405
        %v2607 = vmul.f32 %v2575, %v410
        %v2608 = vmul.f32 %v2576, %v415
        %v2609 = vmul.f32 %v2577, %v420
        %v2610 = vmul.f32 %v2578, %v425
        %v2611 = vmul.f32 %v2579, %v430
        %v2612 = vmul.f32 %v2580, %v435
        %v2613 = vmul.f32 %v2581, %v440
        %v2614 = vmul.f32 %v2582, %v445
        %v2615 = vmul.f32 %v2583, %v450
        %v2616 = vmul.f32 %v2584, %v455
        %v2617 = vmul.f32 %v2585, %v460
        %v2618 = vmul.f32 %v2586, %v465
        %v2619 = vmul.f32 %v2587, %v470
        %v2620 = vmul.f32 %v2588, %v475
        %v2621 = vmul.f32 %v2589, %v480
        %v2622 = vmul.f32 %v2590, %v485
        %v2623 = vmul.f32 %v2591, %v490
        %v2624 = vmul.f32 %v2592, %v495
        %v2625 = vmul.f32 %v2593, %v500
        %v2626 = vpack.c.bf16 %v2595, %v2594
        %v2627 = vpack.c.bf16 %v2597, %v2596
        %v2628 = vpack.c.bf16 %v2599, %v2598
        %v2629 = vpack.c.bf16 %v2601, %v2600
        %v2630 = vpack.c.bf16 %v2603, %v2602
        %v2631 = vpack.c.bf16 %v2605, %v2604
        %v2632 = vpack.c.bf16 %v2607, %v2606
        %v2633 = vpack.c.bf16 %v2609, %v2608
        %v2634 = vpack.c.bf16 %v2611, %v2610
        %v2635 = vpack.c.bf16 %v2613, %v2612
        %v2636 = vpack.c.bf16 %v2615, %v2614
        %v2637 = vpack.c.bf16 %v2617, %v2616
        %v2638 = vpack.c.bf16 %v2619, %v2618
        %v2639 = vpack.c.bf16 %v2621, %v2620
        %v2640 = vpack.c.bf16 %v2623, %v2622
        %v2641 = vpack.c.bf16 %v2625, %v2624
        %s2642 = scalar_lea.vmem %s1, 384
        %v2643 = vld [vmem:[%s2642] sm:$0xf]
        %v2644 = vld [vmem:[%s2642 + $0x4] sm:$0xf]
        %v2645 = vld [vmem:[%s2642 + $0x8] sm:$0xf]
        %v2646 = vld [vmem:[%s2642 + $0xc] sm:$0xf]
        %v2647 = vld [vmem:[%s2642 + $0x10] sm:$0xf]
        %v2648 = vld [vmem:[%s2642 + $0x14] sm:$0xf]
        %v2649 = vld [vmem:[%s2642 + $0x18] sm:$0xf]
        %v2650 = vld [vmem:[%s2642 + $0x1c] sm:$0xf]
        %v2651 = vld [vmem:[%s2642 + $0x20] sm:$0xf]
        %v2652 = vld [vmem:[%s2642 + $0x24] sm:$0xf]
        %v2653 = vld [vmem:[%s2642 + $0x28] sm:$0xf]
        %v2654 = vld [vmem:[%s2642 + $0x2c] sm:$0xf]
        %v2655 = vld [vmem:[%s2642 + $0x30] sm:$0xf]
        %v2656 = vld [vmem:[%s2642 + $0x34] sm:$0xf]
        %v2657 = vld [vmem:[%s2642 + $0x38] sm:$0xf]
        %v2658 = vld [vmem:[%s2642 + $0x3c] sm:$0xf]
        %v2675 = vunpack.c.l.b16 %v2643
        %v2676 = vunpack.c.l.b16 %v2644
        %v2677 = vunpack.c.l.b16 %v2645
        %v2678 = vunpack.c.l.b16 %v2646
        %v2679 = vunpack.c.l.b16 %v2647
        %v2680 = vunpack.c.l.b16 %v2648
        %v2681 = vunpack.c.l.b16 %v2649
        %v2682 = vunpack.c.l.b16 %v2650
        %v2683 = vunpack.c.l.b16 %v2651
        %v2684 = vunpack.c.l.b16 %v2652
        %v2685 = vunpack.c.l.b16 %v2653
        %v2686 = vunpack.c.l.b16 %v2654
        %v2687 = vunpack.c.l.b16 %v2655
        %v2688 = vunpack.c.l.b16 %v2656
        %v2689 = vunpack.c.l.b16 %v2657
        %v2690 = vunpack.c.l.b16 %v2658
        %v2691 = vpack.c.b16 %v2676, %v2675
        %v2692 = vpack.c.b16 %v2678, %v2677
        %v2693 = vpack.c.b16 %v2680, %v2679
        %v2694 = vpack.c.b16 %v2682, %v2681
        %v2695 = vpack.c.b16 %v2684, %v2683
        %v2696 = vpack.c.b16 %v2686, %v2685
        %v2697 = vpack.c.b16 %v2688, %v2687
        %v2698 = vpack.c.b16 %v2690, %v2689
        %2707 = vmatprep.subr.bf16.mxu0 0
        %2708 = vmatpush1.bf16.msra.mxu0 %v2698
        %2709 = vmatprep.subr.bf16.mxu0 0
        %2710 = vmatpush1.bf16.msra.mxu0 %v2697
        %2711 = vmatprep.subr.bf16.mxu0 0
        %2712 = vmatpush1.bf16.msra.mxu0 %v2696
        %2713 = vmatprep.subr.bf16.mxu0 0
        %2714 = vmatpush1.bf16.msra.mxu0 %v2695
        %2715 = vmatprep.subr.bf16.mxu0 0
        %2716 = vmatpush1.bf16.msra.mxu0 %v2694
        %2717 = vmatprep.subr.bf16.mxu0 0
        %2718 = vmatpush1.bf16.msra.mxu0 %v2693
        %2719 = vmatprep.subr.bf16.mxu0 0
        %2720 = vmatpush1.bf16.msra.mxu0 %v2692
        %2721 = vmatprep.subr.bf16.mxu0 0
        %2722 = vmatpush1.bf16.msra.mxu0 %v2691
        %2723 = vmatprep.subr.bf16.mxu0 0
        %2724 = vmatpush2.bf16.msra.mxu0 0
        %2725 = vmatprep.subr.bf16.mxu0 0
        %2726 = vmatpush2.bf16.msra.mxu0 0
        %2727 = vmatprep.subr.bf16.mxu0 0
        %2728 = vmatpush2.bf16.msra.mxu0 0
        %2729 = vmatprep.subr.bf16.mxu0 0
        %2730 = vmatpush2.bf16.msra.mxu0 0
        %2731 = vmatprep.subr.bf16.mxu0 0
        %2732 = vmatpush2.bf16.msra.mxu0 0
        %2733 = vmatprep.subr.bf16.mxu0 0
        %2734 = vmatpush2.bf16.msra.mxu0 0
        %2735 = vmatprep.subr.bf16.mxu0 0
        %2736 = vmatpush2.bf16.msra.mxu0 0
        %2737 = vmatprep.subr.bf16.mxu0 0
        %2738 = vmatpush2.bf16.msra.mxu0 0
        %2739 = vmatprep.mubr.bf16.mxu0 0
        %2740 = vmatmul.mubr.bf16.gmra.mxu0 %v2626
        %v2741 = vpop.f32.mrf.mxu0
        %v2742 = vadd.f32 0.0, %v2741
        %v2743 = vpop.f32.mrf.mxu0
        %v2744 = vpop.f32.mrf.mxu0
        %v2745 = vadd.f32 0.0, %v2744
        %v2746 = vpop.f32.mrf.mxu0
        %2747 = vmatprep.mubr.bf16.mxu0 0
        %2748 = vmatmul.mubr.bf16.gmra.mxu0 %v2627
        %v2749 = vpop.f32.mrf.mxu0
        %v2750 = vadd.f32 0.0, %v2749
        %v2751 = vpop.f32.mrf.mxu0
        %v2752 = vpop.f32.mrf.mxu0
        %v2753 = vadd.f32 0.0, %v2752
        %v2754 = vpop.f32.mrf.mxu0
        %2755 = vmatprep.mubr.bf16.mxu0 0
        %2756 = vmatmul.mubr.bf16.gmra.mxu0 %v2628
        %v2757 = vpop.f32.mrf.mxu0
        %v2758 = vadd.f32 0.0, %v2757
        %v2759 = vpop.f32.mrf.mxu0
        %v2760 = vpop.f32.mrf.mxu0
        %v2761 = vadd.f32 0.0, %v2760
        %v2762 = vpop.f32.mrf.mxu0
        %2763 = vmatprep.mubr.bf16.mxu0 0
        %2764 = vmatmul.mubr.bf16.gmra.mxu0 %v2629
        %v2765 = vpop.f32.mrf.mxu0
        %v2766 = vadd.f32 0.0, %v2765
        %v2767 = vpop.f32.mrf.mxu0
        %v2768 = vpop.f32.mrf.mxu0
        %v2769 = vadd.f32 0.0, %v2768
        %v2770 = vpop.f32.mrf.mxu0
        %2771 = vmatprep.mubr.bf16.mxu0 0
        %2772 = vmatmul.mubr.bf16.gmra.mxu0 %v2630
        %v2773 = vpop.f32.mrf.mxu0
        %v2774 = vadd.f32 0.0, %v2773
        %v2775 = vpop.f32.mrf.mxu0
        %v2776 = vpop.f32.mrf.mxu0
        %v2777 = vadd.f32 0.0, %v2776
        %v2778 = vpop.f32.mrf.mxu0
        %2779 = vmatprep.mubr.bf16.mxu0 0
        %2780 = vmatmul.mubr.bf16.gmra.mxu0 %v2631
        %v2781 = vpop.f32.mrf.mxu0
        %v2782 = vadd.f32 0.0, %v2781
        %v2783 = vpop.f32.mrf.mxu0
        %v2784 = vpop.f32.mrf.mxu0
        %v2785 = vadd.f32 0.0, %v2784
        %v2786 = vpop.f32.mrf.mxu0
        %2787 = vmatprep.mubr.bf16.mxu0 0
        %2788 = vmatmul.mubr.bf16.gmra.mxu0 %v2632
        %v2789 = vpop.f32.mrf.mxu0
        %v2790 = vadd.f32 0.0, %v2789
        %v2791 = vpop.f32.mrf.mxu0
        %v2792 = vpop.f32.mrf.mxu0
        %v2793 = vadd.f32 0.0, %v2792
        %v2794 = vpop.f32.mrf.mxu0
        %2795 = vmatprep.mubr.bf16.mxu0 0
        %2796 = vmatmul.mubr.bf16.gmra.mxu0 %v2633
        %v2797 = vpop.f32.mrf.mxu0
        %v2798 = vadd.f32 0.0, %v2797
        %v2799 = vpop.f32.mrf.mxu0
        %v2800 = vpop.f32.mrf.mxu0
        %v2801 = vadd.f32 0.0, %v2800
        %v2802 = vpop.f32.mrf.mxu0
        %2803 = vmatprep.mubr.bf16.mxu0 0
        %2804 = vmatmul.mubr.bf16.gmra.mxu0 %v2634
        %v2805 = vpop.f32.mrf.mxu0
        %v2806 = vadd.f32 0.0, %v2805
        %v2807 = vpop.f32.mrf.mxu0
        %v2808 = vpop.f32.mrf.mxu0
        %v2809 = vadd.f32 0.0, %v2808
        %v2810 = vpop.f32.mrf.mxu0
        %2811 = vmatprep.mubr.bf16.mxu0 0
        %2812 = vmatmul.mubr.bf16.gmra.mxu0 %v2635
        %v2813 = vpop.f32.mrf.mxu0
        %v2814 = vadd.f32 0.0, %v2813
        %v2815 = vpop.f32.mrf.mxu0
        %v2816 = vpop.f32.mrf.mxu0
        %v2817 = vadd.f32 0.0, %v2816
        %v2818 = vpop.f32.mrf.mxu0
        %2819 = vmatprep.mubr.bf16.mxu0 0
        %2820 = vmatmul.mubr.bf16.gmra.mxu0 %v2636
        %v2821 = vpop.f32.mrf.mxu0
        %v2822 = vadd.f32 0.0, %v2821
        %v2823 = vpop.f32.mrf.mxu0
        %v2824 = vpop.f32.mrf.mxu0
        %v2825 = vadd.f32 0.0, %v2824
        %v2826 = vpop.f32.mrf.mxu0
        %2827 = vmatprep.mubr.bf16.mxu0 0
        %2828 = vmatmul.mubr.bf16.gmra.mxu0 %v2637
        %v2829 = vpop.f32.mrf.mxu0
        %v2830 = vadd.f32 0.0, %v2829
        %v2831 = vpop.f32.mrf.mxu0
        %v2832 = vpop.f32.mrf.mxu0
        %v2833 = vadd.f32 0.0, %v2832
        %v2834 = vpop.f32.mrf.mxu0
        %2835 = vmatprep.mubr.bf16.mxu0 0
        %2836 = vmatmul.mubr.bf16.gmra.mxu0 %v2638
        %v2837 = vpop.f32.mrf.mxu0
        %v2838 = vadd.f32 0.0, %v2837
        %v2839 = vpop.f32.mrf.mxu0
        %v2840 = vpop.f32.mrf.mxu0
        %v2841 = vadd.f32 0.0, %v2840
        %v2842 = vpop.f32.mrf.mxu0
        %2843 = vmatprep.mubr.bf16.mxu0 0
        %2844 = vmatmul.mubr.bf16.gmra.mxu0 %v2639
        %v2845 = vpop.f32.mrf.mxu0
        %v2846 = vadd.f32 0.0, %v2845
        %v2847 = vpop.f32.mrf.mxu0
        %v2848 = vpop.f32.mrf.mxu0
        %v2849 = vadd.f32 0.0, %v2848
        %v2850 = vpop.f32.mrf.mxu0
        %2851 = vmatprep.mubr.bf16.mxu0 0
        %2852 = vmatmul.mubr.bf16.gmra.mxu0 %v2640
        %v2853 = vpop.f32.mrf.mxu0
        %v2854 = vadd.f32 0.0, %v2853
        %v2855 = vpop.f32.mrf.mxu0
        %v2856 = vpop.f32.mrf.mxu0
        %v2857 = vadd.f32 0.0, %v2856
        %v2858 = vpop.f32.mrf.mxu0
        %2859 = vmatprep.mubr.bf16.mxu0 0
        %2860 = vmatmul.mubr.bf16.gmra.mxu0 %v2641
        %v2861 = vpop.f32.mrf.mxu0
        %v2862 = vadd.f32 0.0, %v2861
        %v2863 = vpop.f32.mrf.mxu0
        %v2864 = vpop.f32.mrf.mxu0
        %v2865 = vadd.f32 0.0, %v2864
        %v2866 = vpop.f32.mrf.mxu0
        %2867 = vdwg.mxu0
        %v2868 = vadd.f32 %v2530, %v2742
        %v2869 = vadd.f32 %v2531, %v2745
        %v2870 = vadd.f32 %v2532, %v2750
        %v2871 = vadd.f32 %v2533, %v2753
        %v2872 = vadd.f32 %v2534, %v2758
        %v2873 = vadd.f32 %v2535, %v2761
        %v2874 = vadd.f32 %v2536, %v2766
        %v2875 = vadd.f32 %v2537, %v2769
        %v2876 = vadd.f32 %v2538, %v2774
        %v2877 = vadd.f32 %v2539, %v2777
        %v2878 = vadd.f32 %v2540, %v2782
        %v2879 = vadd.f32 %v2541, %v2785
        %v2880 = vadd.f32 %v2542, %v2790
        %v2881 = vadd.f32 %v2543, %v2793
        %v2882 = vadd.f32 %v2544, %v2798
        %v2883 = vadd.f32 %v2545, %v2801
        %v2884 = vadd.f32 %v2546, %v2806
        %v2885 = vadd.f32 %v2547, %v2809
        %v2886 = vadd.f32 %v2548, %v2814
        %v2887 = vadd.f32 %v2549, %v2817
        %v2888 = vadd.f32 %v2550, %v2822
        %v2889 = vadd.f32 %v2551, %v2825
        %v2890 = vadd.f32 %v2552, %v2830
        %v2891 = vadd.f32 %v2553, %v2833
        %v2892 = vadd.f32 %v2554, %v2838
        %v2893 = vadd.f32 %v2555, %v2841
        %v2894 = vadd.f32 %v2556, %v2846
        %v2895 = vadd.f32 %v2557, %v2849
        %v2896 = vadd.f32 %v2558, %v2854
        %v2897 = vadd.f32 %v2559, %v2857
        %v2898 = vadd.f32 %v2560, %v2862
        %v2899 = vadd.f32 %v2561, %v2865
        %v2900 = vld [vmem:[%s276 + $0x21] sm:$0xff]
        %v2901 = vld [vmem:[%s276 + $0x29] sm:$0xff]
        %v2902 = vld [vmem:[%s276 + $0x31] sm:$0xff]
        %v2903 = vld [vmem:[%s276 + $0x39] sm:$0xff]
        %v2904 = vld [vmem:[%s276 + $0x41] sm:$0xff]
        %v2905 = vld [vmem:[%s276 + $0x49] sm:$0xff]
        %v2906 = vld [vmem:[%s276 + $0x51] sm:$0xff]
        %v2907 = vld [vmem:[%s276 + $0x59] sm:$0xff]
        %v2908 = vld [vmem:[%s276 + $0x61] sm:$0xff]
        %v2909 = vld [vmem:[%s276 + $0x69] sm:$0xff]
        %v2910 = vld [vmem:[%s276 + $0x71] sm:$0xff]
        %v2911 = vld [vmem:[%s276 + $0x79] sm:$0xff]
        %v2912 = vld [vmem:[%s276 + $0x81] sm:$0xff]
        %v2913 = vld [vmem:[%s276 + $0x89] sm:$0xff]
        %v2914 = vld [vmem:[%s276 + $0x91] sm:$0xff]
        %v2915 = vld [vmem:[%s276 + $0x99] sm:$0xff]
        %v2916 = vld [vmem:[%s276 + $0xa1] sm:$0xff]
        %v2917 = vld [vmem:[%s276 + $0xa9] sm:$0xff]
        %v2918 = vld [vmem:[%s276 + $0xb1] sm:$0xff]
        %v2919 = vld [vmem:[%s276 + $0xb9] sm:$0xff]
        %v2920 = vld [vmem:[%s276 + $0xc1] sm:$0xff]
        %v2921 = vld [vmem:[%s276 + $0xc9] sm:$0xff]
        %v2922 = vld [vmem:[%s276 + $0xd1] sm:$0xff]
        %v2923 = vld [vmem:[%s276 + $0xd9] sm:$0xff]
        %v2924 = vld [vmem:[%s276 + $0xe1] sm:$0xff]
        %v2925 = vld [vmem:[%s276 + $0xe9] sm:$0xff]
        %v2926 = vld [vmem:[%s276 + $0xf1] sm:$0xff]
        %v2927 = vld [vmem:[%s276 + $0xf9] sm:$0xff]
        %v2928 = vld [vmem:[%s276 + $0x101] sm:$0xff]
        %v2929 = vld [vmem:[%s276 + $0x109] sm:$0xff]
        %v2930 = vld [vmem:[%s276 + $0x111] sm:$0xff]
        %v2931 = vld [vmem:[%s276 + $0x119] sm:$0xff]
        %v2932 = vpack.c.bf16 %v2901, %v2900
        %v2933 = vpack.c.bf16 %v2903, %v2902
        %v2934 = vpack.c.bf16 %v2905, %v2904
        %v2935 = vpack.c.bf16 %v2907, %v2906
        %v2936 = vpack.c.bf16 %v2909, %v2908
        %v2937 = vpack.c.bf16 %v2911, %v2910
        %v2938 = vpack.c.bf16 %v2913, %v2912
        %v2939 = vpack.c.bf16 %v2915, %v2914
        %v2940 = vpack.c.bf16 %v2917, %v2916
        %v2941 = vpack.c.bf16 %v2919, %v2918
        %v2942 = vpack.c.bf16 %v2921, %v2920
        %v2943 = vpack.c.bf16 %v2923, %v2922
        %v2944 = vpack.c.bf16 %v2925, %v2924
        %v2945 = vpack.c.bf16 %v2927, %v2926
        %v2946 = vpack.c.bf16 %v2929, %v2928
        %v2947 = vpack.c.bf16 %v2931, %v2930
        %s2948 = scalar_lea.vmem %s1, 448
        %v2949 = vld [vmem:[%s2948] sm:$0xf]
        %v2950 = vld [vmem:[%s2948 + $0x4] sm:$0xf]
        %v2951 = vld [vmem:[%s2948 + $0x8] sm:$0xf]
        %v2952 = vld [vmem:[%s2948 + $0xc] sm:$0xf]
        %v2953 = vld [vmem:[%s2948 + $0x10] sm:$0xf]
        %v2954 = vld [vmem:[%s2948 + $0x14] sm:$0xf]
        %v2955 = vld [vmem:[%s2948 + $0x18] sm:$0xf]
        %v2956 = vld [vmem:[%s2948 + $0x1c] sm:$0xf]
        %v2957 = vld [vmem:[%s2948 + $0x20] sm:$0xf]
        %v2958 = vld [vmem:[%s2948 + $0x24] sm:$0xf]
        %v2959 = vld [vmem:[%s2948 + $0x28] sm:$0xf]
        %v2960 = vld [vmem:[%s2948 + $0x2c] sm:$0xf]
        %v2961 = vld [vmem:[%s2948 + $0x30] sm:$0xf]
        %v2962 = vld [vmem:[%s2948 + $0x34] sm:$0xf]
        %v2963 = vld [vmem:[%s2948 + $0x38] sm:$0xf]
        %v2964 = vld [vmem:[%s2948 + $0x3c] sm:$0xf]
        %v2981 = vunpack.c.l.b16 %v2949
        %v2982 = vunpack.c.l.b16 %v2950
        %v2983 = vunpack.c.l.b16 %v2951
        %v2984 = vunpack.c.l.b16 %v2952
        %v2985 = vunpack.c.l.b16 %v2953
        %v2986 = vunpack.c.l.b16 %v2954
        %v2987 = vunpack.c.l.b16 %v2955
        %v2988 = vunpack.c.l.b16 %v2956
        %v2989 = vunpack.c.l.b16 %v2957
        %v2990 = vunpack.c.l.b16 %v2958
        %v2991 = vunpack.c.l.b16 %v2959
        %v2992 = vunpack.c.l.b16 %v2960
        %v2993 = vunpack.c.l.b16 %v2961
        %v2994 = vunpack.c.l.b16 %v2962
        %v2995 = vunpack.c.l.b16 %v2963
        %v2996 = vunpack.c.l.b16 %v2964
        %v2997 = vpack.c.b16 %v2982, %v2981
        %v2998 = vpack.c.b16 %v2984, %v2983
        %v2999 = vpack.c.b16 %v2986, %v2985
        %v3000 = vpack.c.b16 %v2988, %v2987
        %v3001 = vpack.c.b16 %v2990, %v2989
        %v3002 = vpack.c.b16 %v2992, %v2991
        %v3003 = vpack.c.b16 %v2994, %v2993
        %v3004 = vpack.c.b16 %v2996, %v2995
        %3013 = vmatprep.subr.bf16.mxu0 0
        %3014 = vmatpush1.bf16.msra.mxu0 %v3004
        %3015 = vmatprep.subr.bf16.mxu0 0
        %3016 = vmatpush1.bf16.msra.mxu0 %v3003
        %3017 = vmatprep.subr.bf16.mxu0 0
        %3018 = vmatpush1.bf16.msra.mxu0 %v3002
        %3019 = vmatprep.subr.bf16.mxu0 0
        %3020 = vmatpush1.bf16.msra.mxu0 %v3001
        %3021 = vmatprep.subr.bf16.mxu0 0
        %3022 = vmatpush1.bf16.msra.mxu0 %v3000
        %3023 = vmatprep.subr.bf16.mxu0 0
        %3024 = vmatpush1.bf16.msra.mxu0 %v2999
        %3025 = vmatprep.subr.bf16.mxu0 0
        %3026 = vmatpush1.bf16.msra.mxu0 %v2998
        %3027 = vmatprep.subr.bf16.mxu0 0
        %3028 = vmatpush1.bf16.msra.mxu0 %v2997
        %3029 = vmatprep.subr.bf16.mxu0 0
        %3030 = vmatpush2.bf16.msra.mxu0 0
        %3031 = vmatprep.subr.bf16.mxu0 0
        %3032 = vmatpush2.bf16.msra.mxu0 0
        %3033 = vmatprep.subr.bf16.mxu0 0
        %3034 = vmatpush2.bf16.msra.mxu0 0
        %3035 = vmatprep.subr.bf16.mxu0 0
        %3036 = vmatpush2.bf16.msra.mxu0 0
        %3037 = vmatprep.subr.bf16.mxu0 0
        %3038 = vmatpush2.bf16.msra.mxu0 0
        %3039 = vmatprep.subr.bf16.mxu0 0
        %3040 = vmatpush2.bf16.msra.mxu0 0
        %3041 = vmatprep.subr.bf16.mxu0 0
        %3042 = vmatpush2.bf16.msra.mxu0 0
        %3043 = vmatprep.subr.bf16.mxu0 0
        %3044 = vmatpush2.bf16.msra.mxu0 0
        %3045 = vmatprep.mubr.bf16.mxu0 0
        %3046 = vmatmul.mubr.bf16.gmra.mxu0 %v2932
        %v3047 = vpop.f32.mrf.mxu0
        %v3048 = vadd.f32 0.0, %v3047
        %v3049 = vpop.f32.mrf.mxu0
        %v3050 = vpop.f32.mrf.mxu0
        %v3051 = vadd.f32 0.0, %v3050
        %v3052 = vpop.f32.mrf.mxu0
        %3053 = vmatprep.mubr.bf16.mxu0 0
        %3054 = vmatmul.mubr.bf16.gmra.mxu0 %v2933
        %v3055 = vpop.f32.mrf.mxu0
        %v3056 = vadd.f32 0.0, %v3055
        %v3057 = vpop.f32.mrf.mxu0
        %v3058 = vpop.f32.mrf.mxu0
        %v3059 = vadd.f32 0.0, %v3058
        %v3060 = vpop.f32.mrf.mxu0
        %3061 = vmatprep.mubr.bf16.mxu0 0
        %3062 = vmatmul.mubr.bf16.gmra.mxu0 %v2934
        %v3063 = vpop.f32.mrf.mxu0
        %v3064 = vadd.f32 0.0, %v3063
        %v3065 = vpop.f32.mrf.mxu0
        %v3066 = vpop.f32.mrf.mxu0
        %v3067 = vadd.f32 0.0, %v3066
        %v3068 = vpop.f32.mrf.mxu0
        %3069 = vmatprep.mubr.bf16.mxu0 0
        %3070 = vmatmul.mubr.bf16.gmra.mxu0 %v2935
        %v3071 = vpop.f32.mrf.mxu0
        %v3072 = vadd.f32 0.0, %v3071
        %v3073 = vpop.f32.mrf.mxu0
        %v3074 = vpop.f32.mrf.mxu0
        %v3075 = vadd.f32 0.0, %v3074
        %v3076 = vpop.f32.mrf.mxu0
        %3077 = vmatprep.mubr.bf16.mxu0 0
        %3078 = vmatmul.mubr.bf16.gmra.mxu0 %v2936
        %v3079 = vpop.f32.mrf.mxu0
        %v3080 = vadd.f32 0.0, %v3079
        %v3081 = vpop.f32.mrf.mxu0
        %v3082 = vpop.f32.mrf.mxu0
        %v3083 = vadd.f32 0.0, %v3082
        %v3084 = vpop.f32.mrf.mxu0
        %3085 = vmatprep.mubr.bf16.mxu0 0
        %3086 = vmatmul.mubr.bf16.gmra.mxu0 %v2937
        %v3087 = vpop.f32.mrf.mxu0
        %v3088 = vadd.f32 0.0, %v3087
        %v3089 = vpop.f32.mrf.mxu0
        %v3090 = vpop.f32.mrf.mxu0
        %v3091 = vadd.f32 0.0, %v3090
        %v3092 = vpop.f32.mrf.mxu0
        %3093 = vmatprep.mubr.bf16.mxu0 0
        %3094 = vmatmul.mubr.bf16.gmra.mxu0 %v2938
        %v3095 = vpop.f32.mrf.mxu0
        %v3096 = vadd.f32 0.0, %v3095
        %v3097 = vpop.f32.mrf.mxu0
        %v3098 = vpop.f32.mrf.mxu0
        %v3099 = vadd.f32 0.0, %v3098
        %v3100 = vpop.f32.mrf.mxu0
        %3101 = vmatprep.mubr.bf16.mxu0 0
        %3102 = vmatmul.mubr.bf16.gmra.mxu0 %v2939
        %v3103 = vpop.f32.mrf.mxu0
        %v3104 = vadd.f32 0.0, %v3103
        %v3105 = vpop.f32.mrf.mxu0
        %v3106 = vpop.f32.mrf.mxu0
        %v3107 = vadd.f32 0.0, %v3106
        %v3108 = vpop.f32.mrf.mxu0
        %3109 = vmatprep.mubr.bf16.mxu0 0
        %3110 = vmatmul.mubr.bf16.gmra.mxu0 %v2940
        %v3111 = vpop.f32.mrf.mxu0
        %v3112 = vadd.f32 0.0, %v3111
        %v3113 = vpop.f32.mrf.mxu0
        %v3114 = vpop.f32.mrf.mxu0
        %v3115 = vadd.f32 0.0, %v3114
        %v3116 = vpop.f32.mrf.mxu0
        %3117 = vmatprep.mubr.bf16.mxu0 0
        %3118 = vmatmul.mubr.bf16.gmra.mxu0 %v2941
        %v3119 = vpop.f32.mrf.mxu0
        %v3120 = vadd.f32 0.0, %v3119
        %v3121 = vpop.f32.mrf.mxu0
        %v3122 = vpop.f32.mrf.mxu0
        %v3123 = vadd.f32 0.0, %v3122
        %v3124 = vpop.f32.mrf.mxu0
        %3125 = vmatprep.mubr.bf16.mxu0 0
        %3126 = vmatmul.mubr.bf16.gmra.mxu0 %v2942
        %v3127 = vpop.f32.mrf.mxu0
        %v3128 = vadd.f32 0.0, %v3127
        %v3129 = vpop.f32.mrf.mxu0
        %v3130 = vpop.f32.mrf.mxu0
        %v3131 = vadd.f32 0.0, %v3130
        %v3132 = vpop.f32.mrf.mxu0
        %3133 = vmatprep.mubr.bf16.mxu0 0
        %3134 = vmatmul.mubr.bf16.gmra.mxu0 %v2943
        %v3135 = vpop.f32.mrf.mxu0
        %v3136 = vadd.f32 0.0, %v3135
        %v3137 = vpop.f32.mrf.mxu0
        %v3138 = vpop.f32.mrf.mxu0
        %v3139 = vadd.f32 0.0, %v3138
        %v3140 = vpop.f32.mrf.mxu0
        %3141 = vmatprep.mubr.bf16.mxu0 0
        %3142 = vmatmul.mubr.bf16.gmra.mxu0 %v2944
        %v3143 = vpop.f32.mrf.mxu0
        %v3144 = vadd.f32 0.0, %v3143
        %v3145 = vpop.f32.mrf.mxu0
        %v3146 = vpop.f32.mrf.mxu0
        %v3147 = vadd.f32 0.0, %v3146
        %v3148 = vpop.f32.mrf.mxu0
        %3149 = vmatprep.mubr.bf16.mxu0 0
        %3150 = vmatmul.mubr.bf16.gmra.mxu0 %v2945
        %v3151 = vpop.f32.mrf.mxu0
        %v3152 = vadd.f32 0.0, %v3151
        %v3153 = vpop.f32.mrf.mxu0
        %v3154 = vpop.f32.mrf.mxu0
        %v3155 = vadd.f32 0.0, %v3154
        %v3156 = vpop.f32.mrf.mxu0
        %3157 = vmatprep.mubr.bf16.mxu0 0
        %3158 = vmatmul.mubr.bf16.gmra.mxu0 %v2946
        %v3159 = vpop.f32.mrf.mxu0
        %v3160 = vadd.f32 0.0, %v3159
        %v3161 = vpop.f32.mrf.mxu0
        %v3162 = vpop.f32.mrf.mxu0
        %v3163 = vadd.f32 0.0, %v3162
        %v3164 = vpop.f32.mrf.mxu0
        %3165 = vmatprep.mubr.bf16.mxu0 0
        %3166 = vmatmul.mubr.bf16.gmra.mxu0 %v2947
        %v3167 = vpop.f32.mrf.mxu0
        %v3168 = vadd.f32 0.0, %v3167
        %v3169 = vpop.f32.mrf.mxu0
        %v3170 = vpop.f32.mrf.mxu0
        %v3171 = vadd.f32 0.0, %v3170
        %v3172 = vpop.f32.mrf.mxu0
        %3173 = vdwg.mxu0
        %v3174 = vadd.f32 %v2868, %v3048
        %v3175 = vadd.f32 %v2869, %v3051
        %v3176 = vadd.f32 %v2870, %v3056
        %v3177 = vadd.f32 %v2871, %v3059
        %v3178 = vadd.f32 %v2872, %v3064
        %v3179 = vadd.f32 %v2873, %v3067
        %v3180 = vadd.f32 %v2874, %v3072
        %v3181 = vadd.f32 %v2875, %v3075
        %v3182 = vadd.f32 %v2876, %v3080
        %v3183 = vadd.f32 %v2877, %v3083
        %v3184 = vadd.f32 %v2878, %v3088
        %v3185 = vadd.f32 %v2879, %v3091
        %v3186 = vadd.f32 %v2880, %v3096
        %v3187 = vadd.f32 %v2881, %v3099
        %v3188 = vadd.f32 %v2882, %v3104
        %v3189 = vadd.f32 %v2883, %v3107
        %v3190 = vadd.f32 %v2884, %v3112
        %v3191 = vadd.f32 %v2885, %v3115
        %v3192 = vadd.f32 %v2886, %v3120
        %v3193 = vadd.f32 %v2887, %v3123
        %v3194 = vadd.f32 %v2888, %v3128
        %v3195 = vadd.f32 %v2889, %v3131
        %v3196 = vadd.f32 %v2890, %v3136
        %v3197 = vadd.f32 %v2891, %v3139
        %v3198 = vadd.f32 %v2892, %v3144
        %v3199 = vadd.f32 %v2893, %v3147
        %v3200 = vadd.f32 %v2894, %v3152
        %v3201 = vadd.f32 %v2895, %v3155
        %v3202 = vadd.f32 %v2896, %v3160
        %v3203 = vadd.f32 %v2897, %v3163
        %v3204 = vadd.f32 %v2898, %v3168
        %v3205 = vadd.f32 %v2899, %v3171
        %v3206 = vld [vmem:[%s276 + $0x22] sm:$0xff]
        %v3207 = vld [vmem:[%s276 + $0x2a] sm:$0xff]
        %v3208 = vld [vmem:[%s276 + $0x32] sm:$0xff]
        %v3209 = vld [vmem:[%s276 + $0x3a] sm:$0xff]
        %v3210 = vld [vmem:[%s276 + $0x42] sm:$0xff]
        %v3211 = vld [vmem:[%s276 + $0x4a] sm:$0xff]
        %v3212 = vld [vmem:[%s276 + $0x52] sm:$0xff]
        %v3213 = vld [vmem:[%s276 + $0x5a] sm:$0xff]
        %v3214 = vld [vmem:[%s276 + $0x62] sm:$0xff]
        %v3215 = vld [vmem:[%s276 + $0x6a] sm:$0xff]
        %v3216 = vld [vmem:[%s276 + $0x72] sm:$0xff]
        %v3217 = vld [vmem:[%s276 + $0x7a] sm:$0xff]
        %v3218 = vld [vmem:[%s276 + $0x82] sm:$0xff]
        %v3219 = vld [vmem:[%s276 + $0x8a] sm:$0xff]
        %v3220 = vld [vmem:[%s276 + $0x92] sm:$0xff]
        %v3221 = vld [vmem:[%s276 + $0x9a] sm:$0xff]
        %v3222 = vld [vmem:[%s276 + $0xa2] sm:$0xff]
        %v3223 = vld [vmem:[%s276 + $0xaa] sm:$0xff]
        %v3224 = vld [vmem:[%s276 + $0xb2] sm:$0xff]
        %v3225 = vld [vmem:[%s276 + $0xba] sm:$0xff]
        %v3226 = vld [vmem:[%s276 + $0xc2] sm:$0xff]
        %v3227 = vld [vmem:[%s276 + $0xca] sm:$0xff]
        %v3228 = vld [vmem:[%s276 + $0xd2] sm:$0xff]
        %v3229 = vld [vmem:[%s276 + $0xda] sm:$0xff]
        %v3230 = vld [vmem:[%s276 + $0xe2] sm:$0xff]
        %v3231 = vld [vmem:[%s276 + $0xea] sm:$0xff]
        %v3232 = vld [vmem:[%s276 + $0xf2] sm:$0xff]
        %v3233 = vld [vmem:[%s276 + $0xfa] sm:$0xff]
        %v3234 = vld [vmem:[%s276 + $0x102] sm:$0xff]
        %v3235 = vld [vmem:[%s276 + $0x10a] sm:$0xff]
        %v3236 = vld [vmem:[%s276 + $0x112] sm:$0xff]
        %v3237 = vld [vmem:[%s276 + $0x11a] sm:$0xff]
        %v3238 = vmul.f32 %v3206, %v1117
        %v3239 = vmul.f32 %v3207, %v1122
        %v3240 = vmul.f32 %v3208, %v1127
        %v3241 = vmul.f32 %v3209, %v1132
        %v3242 = vmul.f32 %v3210, %v1137
        %v3243 = vmul.f32 %v3211, %v1142
        %v3244 = vmul.f32 %v3212, %v1147
        %v3245 = vmul.f32 %v3213, %v1152
        %v3246 = vmul.f32 %v3214, %v1157
        %v3247 = vmul.f32 %v3215, %v1162
        %v3248 = vmul.f32 %v3216, %v1167
        %v3249 = vmul.f32 %v3217, %v1172
        %v3250 = vmul.f32 %v3218, %v1177
        %v3251 = vmul.f32 %v3219, %v1182
        %v3252 = vmul.f32 %v3220, %v1187
        %v3253 = vmul.f32 %v3221, %v1192
        %v3254 = vmul.f32 %v3222, %v1197
        %v3255 = vmul.f32 %v3223, %v1202
        %v3256 = vmul.f32 %v3224, %v1207
        %v3257 = vmul.f32 %v3225, %v1212
        %v3258 = vmul.f32 %v3226, %v1217
        %v3259 = vmul.f32 %v3227, %v1222
        %v3260 = vmul.f32 %v3228, %v1227
        %v3261 = vmul.f32 %v3229, %v1232
        %v3262 = vmul.f32 %v3230, %v1237
        %v3263 = vmul.f32 %v3231, %v1242
        %v3264 = vmul.f32 %v3232, %v1247
        %v3265 = vmul.f32 %v3233, %v1252
        %v3266 = vmul.f32 %v3234, %v1257
        %v3267 = vmul.f32 %v3235, %v1262
        %v3268 = vmul.f32 %v3236, %v1267
        %v3269 = vmul.f32 %v3237, %v1272
        %v3270 = vpack.c.bf16 %v3239, %v3238
        %v3271 = vpack.c.bf16 %v3241, %v3240
        %v3272 = vpack.c.bf16 %v3243, %v3242
        %v3273 = vpack.c.bf16 %v3245, %v3244
        %v3274 = vpack.c.bf16 %v3247, %v3246
        %v3275 = vpack.c.bf16 %v3249, %v3248
        %v3276 = vpack.c.bf16 %v3251, %v3250
        %v3277 = vpack.c.bf16 %v3253, %v3252
        %v3278 = vpack.c.bf16 %v3255, %v3254
        %v3279 = vpack.c.bf16 %v3257, %v3256
        %v3280 = vpack.c.bf16 %v3259, %v3258
        %v3281 = vpack.c.bf16 %v3261, %v3260
        %v3282 = vpack.c.bf16 %v3263, %v3262
        %v3283 = vpack.c.bf16 %v3265, %v3264
        %v3284 = vpack.c.bf16 %v3267, %v3266
        %v3285 = vpack.c.bf16 %v3269, %v3268
        %s3286 = scalar_lea.vmem %s1, 512
        %v3287 = vld [vmem:[%s3286] sm:$0xf]
        %v3288 = vld [vmem:[%s3286 + $0x4] sm:$0xf]
        %v3289 = vld [vmem:[%s3286 + $0x8] sm:$0xf]
        %v3290 = vld [vmem:[%s3286 + $0xc] sm:$0xf]
        %v3291 = vld [vmem:[%s3286 + $0x10] sm:$0xf]
        %v3292 = vld [vmem:[%s3286 + $0x14] sm:$0xf]
        %v3293 = vld [vmem:[%s3286 + $0x18] sm:$0xf]
        %v3294 = vld [vmem:[%s3286 + $0x1c] sm:$0xf]
        %v3295 = vld [vmem:[%s3286 + $0x20] sm:$0xf]
        %v3296 = vld [vmem:[%s3286 + $0x24] sm:$0xf]
        %v3297 = vld [vmem:[%s3286 + $0x28] sm:$0xf]
        %v3298 = vld [vmem:[%s3286 + $0x2c] sm:$0xf]
        %v3299 = vld [vmem:[%s3286 + $0x30] sm:$0xf]
        %v3300 = vld [vmem:[%s3286 + $0x34] sm:$0xf]
        %v3301 = vld [vmem:[%s3286 + $0x38] sm:$0xf]
        %v3302 = vld [vmem:[%s3286 + $0x3c] sm:$0xf]
        %v3319 = vunpack.c.l.b16 %v3287
        %v3320 = vunpack.c.l.b16 %v3288
        %v3321 = vunpack.c.l.b16 %v3289
        %v3322 = vunpack.c.l.b16 %v3290
        %v3323 = vunpack.c.l.b16 %v3291
        %v3324 = vunpack.c.l.b16 %v3292
        %v3325 = vunpack.c.l.b16 %v3293
        %v3326 = vunpack.c.l.b16 %v3294
        %v3327 = vunpack.c.l.b16 %v3295
        %v3328 = vunpack.c.l.b16 %v3296
        %v3329 = vunpack.c.l.b16 %v3297
        %v3330 = vunpack.c.l.b16 %v3298
        %v3331 = vunpack.c.l.b16 %v3299
        %v3332 = vunpack.c.l.b16 %v3300
        %v3333 = vunpack.c.l.b16 %v3301
        %v3334 = vunpack.c.l.b16 %v3302
        %v3335 = vpack.c.b16 %v3320, %v3319
        %v3336 = vpack.c.b16 %v3322, %v3321
        %v3337 = vpack.c.b16 %v3324, %v3323
        %v3338 = vpack.c.b16 %v3326, %v3325
        %v3339 = vpack.c.b16 %v3328, %v3327
        %v3340 = vpack.c.b16 %v3330, %v3329
        %v3341 = vpack.c.b16 %v3332, %v3331
        %v3342 = vpack.c.b16 %v3334, %v3333
        %3351 = vmatprep.subr.bf16.mxu0 0
        %3352 = vmatpush1.bf16.msra.mxu0 %v3342
        %3353 = vmatprep.subr.bf16.mxu0 0
        %3354 = vmatpush1.bf16.msra.mxu0 %v3341
        %3355 = vmatprep.subr.bf16.mxu0 0
        %3356 = vmatpush1.bf16.msra.mxu0 %v3340
        %3357 = vmatprep.subr.bf16.mxu0 0
        %3358 = vmatpush1.bf16.msra.mxu0 %v3339
        %3359 = vmatprep.subr.bf16.mxu0 0
        %3360 = vmatpush1.bf16.msra.mxu0 %v3338
        %3361 = vmatprep.subr.bf16.mxu0 0
        %3362 = vmatpush1.bf16.msra.mxu0 %v3337
        %3363 = vmatprep.subr.bf16.mxu0 0
        %3364 = vmatpush1.bf16.msra.mxu0 %v3336
        %3365 = vmatprep.subr.bf16.mxu0 0
        %3366 = vmatpush1.bf16.msra.mxu0 %v3335
        %3367 = vmatprep.subr.bf16.mxu0 0
        %3368 = vmatpush2.bf16.msra.mxu0 0
        %3369 = vmatprep.subr.bf16.mxu0 0
        %3370 = vmatpush2.bf16.msra.mxu0 0
        %3371 = vmatprep.subr.bf16.mxu0 0
        %3372 = vmatpush2.bf16.msra.mxu0 0
        %3373 = vmatprep.subr.bf16.mxu0 0
        %3374 = vmatpush2.bf16.msra.mxu0 0
        %3375 = vmatprep.subr.bf16.mxu0 0
        %3376 = vmatpush2.bf16.msra.mxu0 0
        %3377 = vmatprep.subr.bf16.mxu0 0
        %3378 = vmatpush2.bf16.msra.mxu0 0
        %3379 = vmatprep.subr.bf16.mxu0 0
        %3380 = vmatpush2.bf16.msra.mxu0 0
        %3381 = vmatprep.subr.bf16.mxu0 0
        %3382 = vmatpush2.bf16.msra.mxu0 0
        %3383 = vmatprep.mubr.bf16.mxu0 0
        %3384 = vmatmul.mubr.bf16.gmra.mxu0 %v3270
        %v3385 = vpop.f32.mrf.mxu0
        %v3386 = vadd.f32 0.0, %v3385
        %v3387 = vpop.f32.mrf.mxu0
        %v3388 = vpop.f32.mrf.mxu0
        %v3389 = vadd.f32 0.0, %v3388
        %v3390 = vpop.f32.mrf.mxu0
        %3391 = vmatprep.mubr.bf16.mxu0 0
        %3392 = vmatmul.mubr.bf16.gmra.mxu0 %v3271
        %v3393 = vpop.f32.mrf.mxu0
        %v3394 = vadd.f32 0.0, %v3393
        %v3395 = vpop.f32.mrf.mxu0
        %v3396 = vpop.f32.mrf.mxu0
        %v3397 = vadd.f32 0.0, %v3396
        %v3398 = vpop.f32.mrf.mxu0
        %3399 = vmatprep.mubr.bf16.mxu0 0
        %3400 = vmatmul.mubr.bf16.gmra.mxu0 %v3272
        %v3401 = vpop.f32.mrf.mxu0
        %v3402 = vadd.f32 0.0, %v3401
        %v3403 = vpop.f32.mrf.mxu0
        %v3404 = vpop.f32.mrf.mxu0
        %v3405 = vadd.f32 0.0, %v3404
        %v3406 = vpop.f32.mrf.mxu0
        %3407 = vmatprep.mubr.bf16.mxu0 0
        %3408 = vmatmul.mubr.bf16.gmra.mxu0 %v3273
        %v3409 = vpop.f32.mrf.mxu0
        %v3410 = vadd.f32 0.0, %v3409
        %v3411 = vpop.f32.mrf.mxu0
        %v3412 = vpop.f32.mrf.mxu0
        %v3413 = vadd.f32 0.0, %v3412
        %v3414 = vpop.f32.mrf.mxu0
        %3415 = vmatprep.mubr.bf16.mxu0 0
        %3416 = vmatmul.mubr.bf16.gmra.mxu0 %v3274
        %v3417 = vpop.f32.mrf.mxu0
        %v3418 = vadd.f32 0.0, %v3417
        %v3419 = vpop.f32.mrf.mxu0
        %v3420 = vpop.f32.mrf.mxu0
        %v3421 = vadd.f32 0.0, %v3420
        %v3422 = vpop.f32.mrf.mxu0
        %3423 = vmatprep.mubr.bf16.mxu0 0
        %3424 = vmatmul.mubr.bf16.gmra.mxu0 %v3275
        %v3425 = vpop.f32.mrf.mxu0
        %v3426 = vadd.f32 0.0, %v3425
        %v3427 = vpop.f32.mrf.mxu0
        %v3428 = vpop.f32.mrf.mxu0
        %v3429 = vadd.f32 0.0, %v3428
        %v3430 = vpop.f32.mrf.mxu0
        %3431 = vmatprep.mubr.bf16.mxu0 0
        %3432 = vmatmul.mubr.bf16.gmra.mxu0 %v3276
        %v3433 = vpop.f32.mrf.mxu0
        %v3434 = vadd.f32 0.0, %v3433
        %v3435 = vpop.f32.mrf.mxu0
        %v3436 = vpop.f32.mrf.mxu0
        %v3437 = vadd.f32 0.0, %v3436
        %v3438 = vpop.f32.mrf.mxu0
        %3439 = vmatprep.mubr.bf16.mxu0 0
        %3440 = vmatmul.mubr.bf16.gmra.mxu0 %v3277
        %v3441 = vpop.f32.mrf.mxu0
        %v3442 = vadd.f32 0.0, %v3441
        %v3443 = vpop.f32.mrf.mxu0
        %v3444 = vpop.f32.mrf.mxu0
        %v3445 = vadd.f32 0.0, %v3444
        %v3446 = vpop.f32.mrf.mxu0
        %3447 = vmatprep.mubr.bf16.mxu0 0
        %3448 = vmatmul.mubr.bf16.gmra.mxu0 %v3278
        %v3449 = vpop.f32.mrf.mxu0
        %v3450 = vadd.f32 0.0, %v3449
        %v3451 = vpop.f32.mrf.mxu0
        %v3452 = vpop.f32.mrf.mxu0
        %v3453 = vadd.f32 0.0, %v3452
        %v3454 = vpop.f32.mrf.mxu0
        %3455 = vmatprep.mubr.bf16.mxu0 0
        %3456 = vmatmul.mubr.bf16.gmra.mxu0 %v3279
        %v3457 = vpop.f32.mrf.mxu0
        %v3458 = vadd.f32 0.0, %v3457
        %v3459 = vpop.f32.mrf.mxu0
        %v3460 = vpop.f32.mrf.mxu0
        %v3461 = vadd.f32 0.0, %v3460
        %v3462 = vpop.f32.mrf.mxu0
        %3463 = vmatprep.mubr.bf16.mxu0 0
        %3464 = vmatmul.mubr.bf16.gmra.mxu0 %v3280
        %v3465 = vpop.f32.mrf.mxu0
        %v3466 = vadd.f32 0.0, %v3465
        %v3467 = vpop.f32.mrf.mxu0
        %v3468 = vpop.f32.mrf.mxu0
        %v3469 = vadd.f32 0.0, %v3468
        %v3470 = vpop.f32.mrf.mxu0
        %3471 = vmatprep.mubr.bf16.mxu0 0
        %3472 = vmatmul.mubr.bf16.gmra.mxu0 %v3281
        %v3473 = vpop.f32.mrf.mxu0
        %v3474 = vadd.f32 0.0, %v3473
        %v3475 = vpop.f32.mrf.mxu0
        %v3476 = vpop.f32.mrf.mxu0
        %v3477 = vadd.f32 0.0, %v3476
        %v3478 = vpop.f32.mrf.mxu0
        %3479 = vmatprep.mubr.bf16.mxu0 0
        %3480 = vmatmul.mubr.bf16.gmra.mxu0 %v3282
        %v3481 = vpop.f32.mrf.mxu0
        %v3482 = vadd.f32 0.0, %v3481
        %v3483 = vpop.f32.mrf.mxu0
        %v3484 = vpop.f32.mrf.mxu0
        %v3485 = vadd.f32 0.0, %v3484
        %v3486 = vpop.f32.mrf.mxu0
        %3487 = vmatprep.mubr.bf16.mxu0 0
        %3488 = vmatmul.mubr.bf16.gmra.mxu0 %v3283
        %v3489 = vpop.f32.mrf.mxu0
        %v3490 = vadd.f32 0.0, %v3489
        %v3491 = vpop.f32.mrf.mxu0
        %v3492 = vpop.f32.mrf.mxu0
        %v3493 = vadd.f32 0.0, %v3492
        %v3494 = vpop.f32.mrf.mxu0
        %3495 = vmatprep.mubr.bf16.mxu0 0
        %3496 = vmatmul.mubr.bf16.gmra.mxu0 %v3284
        %v3497 = vpop.f32.mrf.mxu0
        %v3498 = vadd.f32 0.0, %v3497
        %v3499 = vpop.f32.mrf.mxu0
        %v3500 = vpop.f32.mrf.mxu0
        %v3501 = vadd.f32 0.0, %v3500
        %v3502 = vpop.f32.mrf.mxu0
        %3503 = vmatprep.mubr.bf16.mxu0 0
        %3504 = vmatmul.mubr.bf16.gmra.mxu0 %v3285
        %v3505 = vpop.f32.mrf.mxu0
        %v3506 = vadd.f32 0.0, %v3505
        %v3507 = vpop.f32.mrf.mxu0
        %v3508 = vpop.f32.mrf.mxu0
        %v3509 = vadd.f32 0.0, %v3508
        %v3510 = vpop.f32.mrf.mxu0
        %3511 = vdwg.mxu0
        %v3512 = vadd.f32 %v3174, %v3386
        %v3513 = vadd.f32 %v3175, %v3389
        %v3514 = vadd.f32 %v3176, %v3394
        %v3515 = vadd.f32 %v3177, %v3397
        %v3516 = vadd.f32 %v3178, %v3402
        %v3517 = vadd.f32 %v3179, %v3405
        %v3518 = vadd.f32 %v3180, %v3410
        %v3519 = vadd.f32 %v3181, %v3413
        %v3520 = vadd.f32 %v3182, %v3418
        %v3521 = vadd.f32 %v3183, %v3421
        %v3522 = vadd.f32 %v3184, %v3426
        %v3523 = vadd.f32 %v3185, %v3429
        %v3524 = vadd.f32 %v3186, %v3434
        %v3525 = vadd.f32 %v3187, %v3437
        %v3526 = vadd.f32 %v3188, %v3442
        %v3527 = vadd.f32 %v3189, %v3445
        %v3528 = vadd.f32 %v3190, %v3450
        %v3529 = vadd.f32 %v3191, %v3453
        %v3530 = vadd.f32 %v3192, %v3458
        %v3531 = vadd.f32 %v3193, %v3461
        %v3532 = vadd.f32 %v3194, %v3466
        %v3533 = vadd.f32 %v3195, %v3469
        %v3534 = vadd.f32 %v3196, %v3474
        %v3535 = vadd.f32 %v3197, %v3477
        %v3536 = vadd.f32 %v3198, %v3482
        %v3537 = vadd.f32 %v3199, %v3485
        %v3538 = vadd.f32 %v3200, %v3490
        %v3539 = vadd.f32 %v3201, %v3493
        %v3540 = vadd.f32 %v3202, %v3498
        %v3541 = vadd.f32 %v3203, %v3501
        %v3542 = vadd.f32 %v3204, %v3506
        %v3543 = vadd.f32 %v3205, %v3509
        %v3544 = vadd.f32 %v3512, %v3513
        %v3545 = vadd.f32 %v3544, %v3514
        %v3546 = vadd.f32 %v3545, %v3515
        %v3547 = vadd.f32 %v3546, %v3516
        %v3548 = vadd.f32 %v3547, %v3517
        %v3549 = vadd.f32 %v3548, %v3518
        %v3550 = vadd.f32 %v3549, %v3519
        %v3551 = vadd.f32 %v3550, %v3520
        %v3552 = vadd.f32 %v3551, %v3521
        %v3553 = vadd.f32 %v3552, %v3522
        %v3554 = vadd.f32 %v3553, %v3523
        %v3555 = vadd.f32 %v3554, %v3524
        %v3556 = vadd.f32 %v3555, %v3525
        %v3557 = vadd.f32 %v3556, %v3526
        %v3558 = vadd.f32 %v3557, %v3527
        %v3559 = vadd.f32 %v3558, %v3528
        %v3560 = vadd.f32 %v3559, %v3529
        %v3561 = vadd.f32 %v3560, %v3530
        %v3562 = vadd.f32 %v3561, %v3531
        %v3563 = vadd.f32 %v3562, %v3532
        %v3564 = vadd.f32 %v3563, %v3533
        %v3565 = vadd.f32 %v3564, %v3534
        %v3566 = vadd.f32 %v3565, %v3535
        %v3567 = vadd.f32 %v3566, %v3536
        %v3568 = vadd.f32 %v3567, %v3537
        %v3569 = vadd.f32 %v3568, %v3538
        %v3570 = vadd.f32 %v3569, %v3539
        %v3571 = vadd.f32 %v3570, %v3540
        %v3572 = vadd.f32 %v3571, %v3541
        %v3573 = vadd.f32 %v3572, %v3542
        %v3574 = vadd.f32 %v3573, %v3543
        %v3575 = vrot.slane %v3574, 4
        %v3576 = vadd.f32 %v3574, %v3575
        %v3577 = vrot.slane %v3576, 2
        %v3578 = vadd.f32 %v3576, %v3577
        %v3579 = vrot.slane %v3578, 1
        %v3580 = vadd.f32 %v3578, %v3579
        %v3581 = vmul.f32 %v3512, %v3512
        %v3582 = vmul.f32 %v3513, %v3513
        %v3583 = vmul.f32 %v3514, %v3514
        %v3584 = vmul.f32 %v3515, %v3515
        %v3585 = vmul.f32 %v3516, %v3516
        %v3586 = vmul.f32 %v3517, %v3517
        %v3587 = vmul.f32 %v3518, %v3518
        %v3588 = vmul.f32 %v3519, %v3519
        %v3589 = vmul.f32 %v3520, %v3520
        %v3590 = vmul.f32 %v3521, %v3521
        %v3591 = vmul.f32 %v3522, %v3522
        %v3592 = vmul.f32 %v3523, %v3523
        %v3593 = vmul.f32 %v3524, %v3524
        %v3594 = vmul.f32 %v3525, %v3525
        %v3595 = vmul.f32 %v3526, %v3526
        %v3596 = vmul.f32 %v3527, %v3527
        %v3597 = vmul.f32 %v3528, %v3528
        %v3598 = vmul.f32 %v3529, %v3529
        %v3599 = vmul.f32 %v3530, %v3530
        %v3600 = vmul.f32 %v3531, %v3531
        %v3601 = vmul.f32 %v3532, %v3532
        %v3602 = vmul.f32 %v3533, %v3533
        %v3603 = vmul.f32 %v3534, %v3534
        %v3604 = vmul.f32 %v3535, %v3535
        %v3605 = vmul.f32 %v3536, %v3536
        %v3606 = vmul.f32 %v3537, %v3537
        %v3607 = vmul.f32 %v3538, %v3538
        %v3608 = vmul.f32 %v3539, %v3539
        %v3609 = vmul.f32 %v3540, %v3540
        %v3610 = vmul.f32 %v3541, %v3541
        %v3611 = vmul.f32 %v3542, %v3542
        %v3612 = vmul.f32 %v3543, %v3543
        %v3613 = vadd.f32 %v3581, %v3582
        %v3614 = vadd.f32 %v3613, %v3583
        %v3615 = vadd.f32 %v3614, %v3584
        %v3616 = vadd.f32 %v3615, %v3585
        %v3617 = vadd.f32 %v3616, %v3586
        %v3618 = vadd.f32 %v3617, %v3587
        %v3619 = vadd.f32 %v3618, %v3588
        %v3620 = vadd.f32 %v3619, %v3589
        %v3621 = vadd.f32 %v3620, %v3590
        %v3622 = vadd.f32 %v3621, %v3591
        %v3623 = vadd.f32 %v3622, %v3592
        %v3624 = vadd.f32 %v3623, %v3593
        %v3625 = vadd.f32 %v3624, %v3594
        %v3626 = vadd.f32 %v3625, %v3595
        %v3627 = vadd.f32 %v3626, %v3596
        %v3628 = vadd.f32 %v3627, %v3597
        %v3629 = vadd.f32 %v3628, %v3598
        %v3630 = vadd.f32 %v3629, %v3599
        %v3631 = vadd.f32 %v3630, %v3600
        %v3632 = vadd.f32 %v3631, %v3601
        %v3633 = vadd.f32 %v3632, %v3602
        %v3634 = vadd.f32 %v3633, %v3603
        %v3635 = vadd.f32 %v3634, %v3604
        %v3636 = vadd.f32 %v3635, %v3605
        %v3637 = vadd.f32 %v3636, %v3606
        %v3638 = vadd.f32 %v3637, %v3607
        %v3639 = vadd.f32 %v3638, %v3608
        %v3640 = vadd.f32 %v3639, %v3609
        %v3641 = vadd.f32 %v3640, %v3610
        %v3642 = vadd.f32 %v3641, %v3611
        %v3643 = vadd.f32 %v3642, %v3612
        %v3644 = vrot.slane %v3643, 4
        %v3645 = vadd.f32 %v3643, %v3644
        %v3646 = vrot.slane %v3645, 2
        %v3647 = vadd.f32 %v3645, %v3646
        %v3648 = vrot.slane %v3647, 1
        %v3649 = vadd.f32 %v3647, %v3648
        %v3650 = vld [vmem:[%s5] sm:$0xff]
        %v3651 = vld [vmem:[%s5 + $0x8] sm:$0xff]
        %v3652 = vld [vmem:[%s5 + $0x10] sm:$0xff]
        %v3653 = vld [vmem:[%s5 + $0x18] sm:$0xff]
        %v3654 = vld [vmem:[%s5 + $0x20] sm:$0xff]
        %v3655 = vld [vmem:[%s5 + $0x28] sm:$0xff]
        %v3656 = vld [vmem:[%s5 + $0x30] sm:$0xff]
        %v3657 = vld [vmem:[%s5 + $0x38] sm:$0xff]
        %v3658 = vld [vmem:[%s5 + $0x40] sm:$0xff]
        %v3659 = vld [vmem:[%s5 + $0x48] sm:$0xff]
        %v3660 = vld [vmem:[%s5 + $0x50] sm:$0xff]
        %v3661 = vld [vmem:[%s5 + $0x58] sm:$0xff]
        %v3662 = vld [vmem:[%s5 + $0x60] sm:$0xff]
        %v3663 = vld [vmem:[%s5 + $0x68] sm:$0xff]
        %v3664 = vld [vmem:[%s5 + $0x70] sm:$0xff]
        %v3665 = vld [vmem:[%s5 + $0x78] sm:$0xff]
        %3666 = vmatprep.subr.mxu0 0.0
        %3667 = vmatpush1.msra.mxu0 %v3665
        %3668 = vmatprep.subr.mxu0 0.0
        %3669 = vmatpush1.msra.mxu0 %v3664
        %3670 = vmatprep.subr.mxu0 0.0
        %3671 = vmatpush1.msra.mxu0 %v3663
        %3672 = vmatprep.subr.mxu0 0.0
        %3673 = vmatpush1.msra.mxu0 %v3662
        %3674 = vmatprep.subr.mxu0 0.0
        %3675 = vmatpush1.msra.mxu0 %v3661
        %3676 = vmatprep.subr.mxu0 0.0
        %3677 = vmatpush1.msra.mxu0 %v3660
        %3678 = vmatprep.subr.mxu0 0.0
        %3679 = vmatpush1.msra.mxu0 %v3659
        %3680 = vmatprep.subr.mxu0 0.0
        %3681 = vmatpush1.msra.mxu0 %v3658
        %3682 = vmatprep.subr.mxu0 0.0
        %3683 = vmatpush1.msra.mxu0 %v3657
        %3684 = vmatprep.subr.mxu0 0.0
        %3685 = vmatpush1.msra.mxu0 %v3656
        %3686 = vmatprep.subr.mxu0 0.0
        %3687 = vmatpush1.msra.mxu0 %v3655
        %3688 = vmatprep.subr.mxu0 0.0
        %3689 = vmatpush1.msra.mxu0 %v3654
        %3690 = vmatprep.subr.mxu0 0.0
        %3691 = vmatpush1.msra.mxu0 %v3653
        %3692 = vmatprep.subr.mxu0 0.0
        %3693 = vmatpush1.msra.mxu0 %v3652
        %3694 = vmatprep.subr.mxu0 0.0
        %3695 = vmatpush1.msra.mxu0 %v3651
        %3696 = vmatprep.subr.mxu0 0.0
        %3697 = vmatpush1.msra.mxu0 %v3650
        %3698 = vmatprep.subr.mxu0 0.0
        %3699 = vmatpush2.msra.mxu0 0.0
        %3700 = vmatprep.subr.mxu0 0.0
        %3701 = vmatpush2.msra.mxu0 0.0
        %3702 = vmatprep.subr.mxu0 0.0
        %3703 = vmatpush2.msra.mxu0 0.0
        %3704 = vmatprep.subr.mxu0 0.0
        %3705 = vmatpush2.msra.mxu0 0.0
        %3706 = vmatprep.subr.mxu0 0.0
        %3707 = vmatpush2.msra.mxu0 0.0
        %3708 = vmatprep.subr.mxu0 0.0
        %3709 = vmatpush2.msra.mxu0 0.0
        %3710 = vmatprep.subr.mxu0 0.0
        %3711 = vmatpush2.msra.mxu0 0.0
        %3712 = vmatprep.subr.mxu0 0.0
        %3713 = vmatpush2.msra.mxu0 0.0
        %3714 = vmatprep.subr.mxu0 0.0
        %3715 = vmatpush2.msra.mxu0 0.0
        %3716 = vmatprep.subr.mxu0 0.0
        %3717 = vmatpush2.msra.mxu0 0.0
        %3718 = vmatprep.subr.mxu0 0.0
        %3719 = vmatpush2.msra.mxu0 0.0
        %3720 = vmatprep.subr.mxu0 0.0
        %3721 = vmatpush2.msra.mxu0 0.0
        %3722 = vmatprep.subr.mxu0 0.0
        %3723 = vmatpush2.msra.mxu0 0.0
        %3724 = vmatprep.subr.mxu0 0.0
        %3725 = vmatpush2.msra.mxu0 0.0
        %3726 = vmatprep.subr.mxu0 0.0
        %3727 = vmatpush2.msra.mxu0 0.0
        %3728 = vmatprep.subr.mxu0 0.0
        %3729 = vmatpush2.msra.mxu0 0.0
        %3730 = vmatprep.mubr.f32.mxu0 0.0
        %3731 = vmatmul.mubr.f32.gmra.mxu0 %v3580
        %v3732 = vpop.f32.mrf.mxu0
        %v3733 = vadd.f32 0.0, %v3732
        %v3734 = vpop.f32.mrf.mxu0
        %3735 = vdwg.mxu0
        %3736 = vmatprep.subr.mxu0 0.0
        %3737 = vmatpush1.msra.mxu0 %v3665
        %3738 = vmatprep.subr.mxu0 0.0
        %3739 = vmatpush1.msra.mxu0 %v3664
        %3740 = vmatprep.subr.mxu0 0.0
        %3741 = vmatpush1.msra.mxu0 %v3663
        %3742 = vmatprep.subr.mxu0 0.0
        %3743 = vmatpush1.msra.mxu0 %v3662
        %3744 = vmatprep.subr.mxu0 0.0
        %3745 = vmatpush1.msra.mxu0 %v3661
        %3746 = vmatprep.subr.mxu0 0.0
        %3747 = vmatpush1.msra.mxu0 %v3660
        %3748 = vmatprep.subr.mxu0 0.0
        %3749 = vmatpush1.msra.mxu0 %v3659
        %3750 = vmatprep.subr.mxu0 0.0
        %3751 = vmatpush1.msra.mxu0 %v3658
        %3752 = vmatprep.subr.mxu0 0.0
        %3753 = vmatpush1.msra.mxu0 %v3657
        %3754 = vmatprep.subr.mxu0 0.0
        %3755 = vmatpush1.msra.mxu0 %v3656
        %3756 = vmatprep.subr.mxu0 0.0
        %3757 = vmatpush1.msra.mxu0 %v3655
        %3758 = vmatprep.subr.mxu0 0.0
        %3759 = vmatpush1.msra.mxu0 %v3654
        %3760 = vmatprep.subr.mxu0 0.0
        %3761 = vmatpush1.msra.mxu0 %v3653
        %3762 = vmatprep.subr.mxu0 0.0
        %3763 = vmatpush1.msra.mxu0 %v3652
        %3764 = vmatprep.subr.mxu0 0.0
        %3765 = vmatpush1.msra.mxu0 %v3651
        %3766 = vmatprep.subr.mxu0 0.0
        %3767 = vmatpush1.msra.mxu0 %v3650
        %3768 = vmatprep.subr.mxu0 0.0
        %3769 = vmatpush2.msra.mxu0 0.0
        %3770 = vmatprep.subr.mxu0 0.0
        %3771 = vmatpush2.msra.mxu0 0.0
        %3772 = vmatprep.subr.mxu0 0.0
        %3773 = vmatpush2.msra.mxu0 0.0
        %3774 = vmatprep.subr.mxu0 0.0
        %3775 = vmatpush2.msra.mxu0 0.0
        %3776 = vmatprep.subr.mxu0 0.0
        %3777 = vmatpush2.msra.mxu0 0.0
        %3778 = vmatprep.subr.mxu0 0.0
        %3779 = vmatpush2.msra.mxu0 0.0
        %3780 = vmatprep.subr.mxu0 0.0
        %3781 = vmatpush2.msra.mxu0 0.0
        %3782 = vmatprep.subr.mxu0 0.0
        %3783 = vmatpush2.msra.mxu0 0.0
        %3784 = vmatprep.subr.mxu0 0.0
        %3785 = vmatpush2.msra.mxu0 0.0
        %3786 = vmatprep.subr.mxu0 0.0
        %3787 = vmatpush2.msra.mxu0 0.0
        %3788 = vmatprep.subr.mxu0 0.0
        %3789 = vmatpush2.msra.mxu0 0.0
        %3790 = vmatprep.subr.mxu0 0.0
        %3791 = vmatpush2.msra.mxu0 0.0
        %3792 = vmatprep.subr.mxu0 0.0
        %3793 = vmatpush2.msra.mxu0 0.0
        %3794 = vmatprep.subr.mxu0 0.0
        %3795 = vmatpush2.msra.mxu0 0.0
        %3796 = vmatprep.subr.mxu0 0.0
        %3797 = vmatpush2.msra.mxu0 0.0
        %3798 = vmatprep.subr.mxu0 0.0
        %3799 = vmatpush2.msra.mxu0 0.0
        %3800 = vmatprep.mubr.f32.mxu0 0.0
        %3801 = vmatmul.mubr.f32.gmra.mxu0 %v3649
        %v3802 = vpop.f32.mrf.mxu0
        %v3803 = vadd.f32 0.0, %v3802
        %v3804 = vpop.f32.mrf.mxu0
        %3805 = vdwg.mxu0
        %v3806 = vmul.f32 %v3733, 0.0009765625
        %v3807 = vmul.f32 %v3803, 0.0009765625
        %v3808 = vmul.f32 %v3806, %v3806
        %v3809 = vsub.f32 %v3807, %v3808
        %v3810 = vmax.f32 %v3809, 0.0
        %v3811 = vadd.f32 %v3810, 1e-05
        %v3812 = vrsqrt.pop %v3811
        %v3813 = vld [vmem:[%s6] sm:$0xff]
        %vm3814 = vcmask 64512
        %v3816 = vsel %vm3814, %v3806, 0
        %3818 = vmatprep.subr.mxu0 0.0
        %3819 = vmatpush1.msra.mxu0 0.0
        %3820 = vmatprep.subr.mxu0 0.0
        %3821 = vmatpush1.msra.mxu0 0.0
        %3822 = vmatprep.subr.mxu0 0.0
        %3823 = vmatpush1.msra.mxu0 0.0
        %3824 = vmatprep.subr.mxu0 0.0
        %3825 = vmatpush1.msra.mxu0 0.0
        %3826 = vmatprep.subr.mxu0 0.0
        %3827 = vmatpush1.msra.mxu0 0.0
        %3828 = vmatprep.subr.mxu0 0.0
        %3829 = vmatpush1.msra.mxu0 0.0
        %3830 = vmatprep.subr.mxu0 0.0
        %3831 = vmatpush1.msra.mxu0 0.0
        %3832 = vmatprep.subr.mxu0 0.0
        %3833 = vmatpush1.msra.mxu0 0.0
        %3834 = vmatprep.subr.mxu0 0.0
        %3835 = vmatpush1.msra.mxu0 0.0
        %3836 = vmatprep.subr.mxu0 0.0
        %3837 = vmatpush1.msra.mxu0 0.0
        %3838 = vmatprep.subr.mxu0 0.0
        %3839 = vmatpush1.msra.mxu0 0.0
        %3840 = vmatprep.subr.mxu0 0.0
        %3841 = vmatpush1.msra.mxu0 0.0
        %3842 = vmatprep.subr.mxu0 0.0
        %3843 = vmatpush1.msra.mxu0 0.0
        %3844 = vmatprep.subr.mxu0 0.0
        %3845 = vmatpush1.msra.mxu0 0.0
        %3846 = vmatprep.subr.mxu0 0.0
        %3847 = vmatpush1.msra.mxu0 0.0
        %3848 = vmatprep.subr.mxu0 0.0
        %3849 = vmatpush1.msra.mxu0 %v3813
        %3850 = vmatprep.subr.mxu0 0.0
        %3851 = vmatpush2.msra.mxu0 0.0
        %3852 = vmatprep.subr.mxu0 0.0
        %3853 = vmatpush2.msra.mxu0 0.0
        %3854 = vmatprep.subr.mxu0 0.0
        %3855 = vmatpush2.msra.mxu0 0.0
        %3856 = vmatprep.subr.mxu0 0.0
        %3857 = vmatpush2.msra.mxu0 0.0
        %3858 = vmatprep.subr.mxu0 0.0
        %3859 = vmatpush2.msra.mxu0 0.0
        %3860 = vmatprep.subr.mxu0 0.0
        %3861 = vmatpush2.msra.mxu0 0.0
        %3862 = vmatprep.subr.mxu0 0.0
        %3863 = vmatpush2.msra.mxu0 0.0
        %3864 = vmatprep.subr.mxu0 0.0
        %3865 = vmatpush2.msra.mxu0 0.0
        %3866 = vmatprep.subr.mxu0 0.0
        %3867 = vmatpush2.msra.mxu0 0.0
        %3868 = vmatprep.subr.mxu0 0.0
        %3869 = vmatpush2.msra.mxu0 0.0
        %3870 = vmatprep.subr.mxu0 0.0
        %3871 = vmatpush2.msra.mxu0 0.0
        %3872 = vmatprep.subr.mxu0 0.0
        %3873 = vmatpush2.msra.mxu0 0.0
        %3874 = vmatprep.subr.mxu0 0.0
        %3875 = vmatpush2.msra.mxu0 0.0
        %3876 = vmatprep.subr.mxu0 0.0
        %3877 = vmatpush2.msra.mxu0 0.0
        %3878 = vmatprep.subr.mxu0 0.0
        %3879 = vmatpush2.msra.mxu0 0.0
        %3880 = vmatprep.subr.mxu0 0.0
        %3881 = vmatpush2.msra.mxu0 0.0
        %3882 = vmatprep.mubr.f32.mxu0 0.0
        %3883 = vmatmul.mubr.f32.gmra.mxu0 %v3816
        %v3884 = vpop.f32.mrf.mxu0
        %v3885 = vadd.f32 0.0, %v3884
        %v3886 = vpop.f32.mrf.mxu0
        %3887 = vdwg.mxu0
        %v3889 = vsel %vm3814, %v3812, 0
        %3891 = vmatprep.subr.mxu0 0.0
        %3892 = vmatpush1.msra.mxu0 0.0
        %3893 = vmatprep.subr.mxu0 0.0
        %3894 = vmatpush1.msra.mxu0 0.0
        %3895 = vmatprep.subr.mxu0 0.0
        %3896 = vmatpush1.msra.mxu0 0.0
        %3897 = vmatprep.subr.mxu0 0.0
        %3898 = vmatpush1.msra.mxu0 0.0
        %3899 = vmatprep.subr.mxu0 0.0
        %3900 = vmatpush1.msra.mxu0 0.0
        %3901 = vmatprep.subr.mxu0 0.0
        %3902 = vmatpush1.msra.mxu0 0.0
        %3903 = vmatprep.subr.mxu0 0.0
        %3904 = vmatpush1.msra.mxu0 0.0
        %3905 = vmatprep.subr.mxu0 0.0
        %3906 = vmatpush1.msra.mxu0 0.0
        %3907 = vmatprep.subr.mxu0 0.0
        %3908 = vmatpush1.msra.mxu0 0.0
        %3909 = vmatprep.subr.mxu0 0.0
        %3910 = vmatpush1.msra.mxu0 0.0
        %3911 = vmatprep.subr.mxu0 0.0
        %3912 = vmatpush1.msra.mxu0 0.0
        %3913 = vmatprep.subr.mxu0 0.0
        %3914 = vmatpush1.msra.mxu0 0.0
        %3915 = vmatprep.subr.mxu0 0.0
        %3916 = vmatpush1.msra.mxu0 0.0
        %3917 = vmatprep.subr.mxu0 0.0
        %3918 = vmatpush1.msra.mxu0 0.0
        %3919 = vmatprep.subr.mxu0 0.0
        %3920 = vmatpush1.msra.mxu0 0.0
        %3921 = vmatprep.subr.mxu0 0.0
        %3922 = vmatpush1.msra.mxu0 %v3813
        %3923 = vmatprep.subr.mxu0 0.0
        %3924 = vmatpush2.msra.mxu0 0.0
        %3925 = vmatprep.subr.mxu0 0.0
        %3926 = vmatpush2.msra.mxu0 0.0
        %3927 = vmatprep.subr.mxu0 0.0
        %3928 = vmatpush2.msra.mxu0 0.0
        %3929 = vmatprep.subr.mxu0 0.0
        %3930 = vmatpush2.msra.mxu0 0.0
        %3931 = vmatprep.subr.mxu0 0.0
        %3932 = vmatpush2.msra.mxu0 0.0
        %3933 = vmatprep.subr.mxu0 0.0
        %3934 = vmatpush2.msra.mxu0 0.0
        %3935 = vmatprep.subr.mxu0 0.0
        %3936 = vmatpush2.msra.mxu0 0.0
        %3937 = vmatprep.subr.mxu0 0.0
        %3938 = vmatpush2.msra.mxu0 0.0
        %3939 = vmatprep.subr.mxu0 0.0
        %3940 = vmatpush2.msra.mxu0 0.0
        %3941 = vmatprep.subr.mxu0 0.0
        %3942 = vmatpush2.msra.mxu0 0.0
        %3943 = vmatprep.subr.mxu0 0.0
        %3944 = vmatpush2.msra.mxu0 0.0
        %3945 = vmatprep.subr.mxu0 0.0
        %3946 = vmatpush2.msra.mxu0 0.0
        %3947 = vmatprep.subr.mxu0 0.0
        %3948 = vmatpush2.msra.mxu0 0.0
        %3949 = vmatprep.subr.mxu0 0.0
        %3950 = vmatpush2.msra.mxu0 0.0
        %3951 = vmatprep.subr.mxu0 0.0
        %3952 = vmatpush2.msra.mxu0 0.0
        %3953 = vmatprep.subr.mxu0 0.0
        %3954 = vmatpush2.msra.mxu0 0.0
        %3955 = vmatprep.mubr.f32.mxu0 0.0
        %3956 = vmatmul.mubr.f32.gmra.mxu0 %v3889
        %v3957 = vpop.f32.mrf.mxu0
        %v3958 = vadd.f32 0.0, %v3957
        %v3959 = vpop.f32.mrf.mxu0
        %3960 = vdwg.mxu0
        %v3961 = vld [vmem:[%s2] sm:$0x1]
        %v3962 = vmul.f32 %v3958, %v3961
        %v3963 = vld [vmem:[%s3] sm:$0x1]
        %v3964 = vmul.f32 %v3885, %v3962
        %v3965 = vsub.f32 %v3963, %v3964
        %v3966 = vlaneseq
        %v3967 = vshrl.u32 %v3966, 7
        %v3968 = vsub.s32 0, %v3967
        %v3969 = vrot.slane %v3962, %v3968
        %v3970 = vmul.f32 %v3512, %v3969
        %v3971 = vmul.f32 %v3513, %v3969
        %v3972 = vmul.f32 %v3514, %v3969
        %v3973 = vmul.f32 %v3515, %v3969
        %v3974 = vmul.f32 %v3516, %v3969
        %v3975 = vmul.f32 %v3517, %v3969
        %v3976 = vmul.f32 %v3518, %v3969
        %v3977 = vmul.f32 %v3519, %v3969
        %v3978 = vmul.f32 %v3520, %v3969
        %v3979 = vmul.f32 %v3521, %v3969
        %v3980 = vmul.f32 %v3522, %v3969
        %v3981 = vmul.f32 %v3523, %v3969
        %v3982 = vmul.f32 %v3524, %v3969
        %v3983 = vmul.f32 %v3525, %v3969
        %v3984 = vmul.f32 %v3526, %v3969
        %v3985 = vmul.f32 %v3527, %v3969
        %v3986 = vmul.f32 %v3528, %v3969
        %v3987 = vmul.f32 %v3529, %v3969
        %v3988 = vmul.f32 %v3530, %v3969
        %v3989 = vmul.f32 %v3531, %v3969
        %v3990 = vmul.f32 %v3532, %v3969
        %v3991 = vmul.f32 %v3533, %v3969
        %v3992 = vmul.f32 %v3534, %v3969
        %v3993 = vmul.f32 %v3535, %v3969
        %v3994 = vmul.f32 %v3536, %v3969
        %v3995 = vmul.f32 %v3537, %v3969
        %v3996 = vmul.f32 %v3538, %v3969
        %v3997 = vmul.f32 %v3539, %v3969
        %v3998 = vmul.f32 %v3540, %v3969
        %v3999 = vmul.f32 %v3541, %v3969
        %v4000 = vmul.f32 %v3542, %v3969
        %v4001 = vmul.f32 %v3543, %v3969
        %v4003 = vlaneseq
        %v4004 = vshrl.u32 %v4003, 7
        %v4005 = vsub.s32 0, %v4004
        %v4006 = vrot.slane %v3965, %v4005
        %v4008 = vadd.f32 %v3970, %v4006
        %v4009 = vadd.f32 %v3971, %v4006
        %v4010 = vadd.f32 %v3972, %v4006
        %v4011 = vadd.f32 %v3973, %v4006
        %v4012 = vadd.f32 %v3974, %v4006
        %v4013 = vadd.f32 %v3975, %v4006
        %v4014 = vadd.f32 %v3976, %v4006
        %v4015 = vadd.f32 %v3977, %v4006
        %v4016 = vadd.f32 %v3978, %v4006
        %v4017 = vadd.f32 %v3979, %v4006
        %v4018 = vadd.f32 %v3980, %v4006
        %v4019 = vadd.f32 %v3981, %v4006
        %v4020 = vadd.f32 %v3982, %v4006
        %v4021 = vadd.f32 %v3983, %v4006
        %v4022 = vadd.f32 %v3984, %v4006
        %v4023 = vadd.f32 %v3985, %v4006
        %v4024 = vadd.f32 %v3986, %v4006
        %v4025 = vadd.f32 %v3987, %v4006
        %v4026 = vadd.f32 %v3988, %v4006
        %v4027 = vadd.f32 %v3989, %v4006
        %v4028 = vadd.f32 %v3990, %v4006
        %v4029 = vadd.f32 %v3991, %v4006
        %v4030 = vadd.f32 %v3992, %v4006
        %v4031 = vadd.f32 %v3993, %v4006
        %v4032 = vadd.f32 %v3994, %v4006
        %v4033 = vadd.f32 %v3995, %v4006
        %v4034 = vadd.f32 %v3996, %v4006
        %v4035 = vadd.f32 %v3997, %v4006
        %v4036 = vadd.f32 %v3998, %v4006
        %v4037 = vadd.f32 %v3999, %v4006
        %v4038 = vadd.f32 %v4000, %v4006
        %v4039 = vadd.f32 %v4001, %v4006
        %v4040 = vsub.f32 0.0, %v4008
        %v4041 = vsub.f32 0.0, %v4009
        %v4042 = vsub.f32 0.0, %v4010
        %v4043 = vsub.f32 0.0, %v4011
        %v4044 = vsub.f32 0.0, %v4012
        %v4045 = vsub.f32 0.0, %v4013
        %v4046 = vsub.f32 0.0, %v4014
        %v4047 = vsub.f32 0.0, %v4015
        %v4048 = vsub.f32 0.0, %v4016
        %v4049 = vsub.f32 0.0, %v4017
        %v4050 = vsub.f32 0.0, %v4018
        %v4051 = vsub.f32 0.0, %v4019
        %v4052 = vsub.f32 0.0, %v4020
        %v4053 = vsub.f32 0.0, %v4021
        %v4054 = vsub.f32 0.0, %v4022
        %v4055 = vsub.f32 0.0, %v4023
        %v4056 = vsub.f32 0.0, %v4024
        %v4057 = vsub.f32 0.0, %v4025
        %v4058 = vsub.f32 0.0, %v4026
        %v4059 = vsub.f32 0.0, %v4027
        %v4060 = vsub.f32 0.0, %v4028
        %v4061 = vsub.f32 0.0, %v4029
        %v4062 = vsub.f32 0.0, %v4030
        %v4063 = vsub.f32 0.0, %v4031
        %v4064 = vsub.f32 0.0, %v4032
        %v4065 = vsub.f32 0.0, %v4033
        %v4066 = vsub.f32 0.0, %v4034
        %v4067 = vsub.f32 0.0, %v4035
        %v4068 = vsub.f32 0.0, %v4036
        %v4069 = vsub.f32 0.0, %v4037
        %v4070 = vsub.f32 0.0, %v4038
        %v4071 = vsub.f32 0.0, %v4039
        %v4072 = vmul.f32 %v4040, 1.442695
        %v4073 = vpow.pop %v4072
        %v4074 = vmul.f32 %v4041, 1.442695
        %v4075 = vpow.pop %v4074
        %v4076 = vmul.f32 %v4042, 1.442695
        %v4077 = vpow.pop %v4076
        %v4078 = vmul.f32 %v4043, 1.442695
        %v4079 = vpow.pop %v4078
        %v4080 = vmul.f32 %v4044, 1.442695
        %v4081 = vpow.pop %v4080
        %v4082 = vmul.f32 %v4045, 1.442695
        %v4083 = vpow.pop %v4082
        %v4084 = vmul.f32 %v4046, 1.442695
        %v4085 = vpow.pop %v4084
        %v4086 = vmul.f32 %v4047, 1.442695
        %v4087 = vpow.pop %v4086
        %v4088 = vmul.f32 %v4048, 1.442695
        %v4089 = vpow.pop %v4088
        %v4090 = vmul.f32 %v4049, 1.442695
        %v4091 = vpow.pop %v4090
        %v4092 = vmul.f32 %v4050, 1.442695
        %v4093 = vpow.pop %v4092
        %v4094 = vmul.f32 %v4051, 1.442695
        %v4095 = vpow.pop %v4094
        %v4096 = vmul.f32 %v4052, 1.442695
        %v4097 = vpow.pop %v4096
        %v4098 = vmul.f32 %v4053, 1.442695
        %v4099 = vpow.pop %v4098
        %v4100 = vmul.f32 %v4054, 1.442695
        %v4101 = vpow.pop %v4100
        %v4102 = vmul.f32 %v4055, 1.442695
        %v4103 = vpow.pop %v4102
        %v4104 = vmul.f32 %v4056, 1.442695
        %v4105 = vpow.pop %v4104
        %v4106 = vmul.f32 %v4057, 1.442695
        %v4107 = vpow.pop %v4106
        %v4108 = vmul.f32 %v4058, 1.442695
        %v4109 = vpow.pop %v4108
        %v4110 = vmul.f32 %v4059, 1.442695
        %v4111 = vpow.pop %v4110
        %v4112 = vmul.f32 %v4060, 1.442695
        %v4113 = vpow.pop %v4112
        %v4114 = vmul.f32 %v4061, 1.442695
        %v4115 = vpow.pop %v4114
        %v4116 = vmul.f32 %v4062, 1.442695
        %v4117 = vpow.pop %v4116
        %v4118 = vmul.f32 %v4063, 1.442695
        %v4119 = vpow.pop %v4118
        %v4120 = vmul.f32 %v4064, 1.442695
        %v4121 = vpow.pop %v4120
        %v4122 = vmul.f32 %v4065, 1.442695
        %v4123 = vpow.pop %v4122
        %v4124 = vmul.f32 %v4066, 1.442695
        %v4125 = vpow.pop %v4124
        %v4126 = vmul.f32 %v4067, 1.442695
        %v4127 = vpow.pop %v4126
        %v4128 = vmul.f32 %v4068, 1.442695
        %v4129 = vpow.pop %v4128
        %v4130 = vmul.f32 %v4069, 1.442695
        %v4131 = vpow.pop %v4130
        %v4132 = vmul.f32 %v4070, 1.442695
        %v4133 = vpow.pop %v4132
        %v4134 = vmul.f32 %v4071, 1.442695
        %v4135 = vpow.pop %v4134
        %v4136 = vadd.f32 %v4073, 1.0
        %v4137 = vadd.f32 %v4075, 1.0
        %v4138 = vadd.f32 %v4077, 1.0
        %v4139 = vadd.f32 %v4079, 1.0
        %v4140 = vadd.f32 %v4081, 1.0
        %v4141 = vadd.f32 %v4083, 1.0
        %v4142 = vadd.f32 %v4085, 1.0
        %v4143 = vadd.f32 %v4087, 1.0
        %v4144 = vadd.f32 %v4089, 1.0
        %v4145 = vadd.f32 %v4091, 1.0
        %v4146 = vadd.f32 %v4093, 1.0
        %v4147 = vadd.f32 %v4095, 1.0
        %v4148 = vadd.f32 %v4097, 1.0
        %v4149 = vadd.f32 %v4099, 1.0
        %v4150 = vadd.f32 %v4101, 1.0
        %v4151 = vadd.f32 %v4103, 1.0
        %v4152 = vadd.f32 %v4105, 1.0
        %v4153 = vadd.f32 %v4107, 1.0
        %v4154 = vadd.f32 %v4109, 1.0
        %v4155 = vadd.f32 %v4111, 1.0
        %v4156 = vadd.f32 %v4113, 1.0
        %v4157 = vadd.f32 %v4115, 1.0
        %v4158 = vadd.f32 %v4117, 1.0
        %v4159 = vadd.f32 %v4119, 1.0
        %v4160 = vadd.f32 %v4121, 1.0
        %v4161 = vadd.f32 %v4123, 1.0
        %v4162 = vadd.f32 %v4125, 1.0
        %v4163 = vadd.f32 %v4127, 1.0
        %v4164 = vadd.f32 %v4129, 1.0
        %v4165 = vadd.f32 %v4131, 1.0
        %v4166 = vadd.f32 %v4133, 1.0
        %v4167 = vadd.f32 %v4135, 1.0
        %v4168 = vrcp.pop %v4136
        %v4169 = vrcp.pop %v4137
        %v4170 = vrcp.pop %v4138
        %v4171 = vrcp.pop %v4139
        %v4172 = vrcp.pop %v4140
        %v4173 = vrcp.pop %v4141
        %v4174 = vrcp.pop %v4142
        %v4175 = vrcp.pop %v4143
        %v4176 = vrcp.pop %v4144
        %v4177 = vrcp.pop %v4145
        %v4178 = vrcp.pop %v4146
        %v4179 = vrcp.pop %v4147
        %v4180 = vrcp.pop %v4148
        %v4181 = vrcp.pop %v4149
        %v4182 = vrcp.pop %v4150
        %v4183 = vrcp.pop %v4151
        %v4184 = vrcp.pop %v4152
        %v4185 = vrcp.pop %v4153
        %v4186 = vrcp.pop %v4154
        %v4187 = vrcp.pop %v4155
        %v4188 = vrcp.pop %v4156
        %v4189 = vrcp.pop %v4157
        %v4190 = vrcp.pop %v4158
        %v4191 = vrcp.pop %v4159
        %v4192 = vrcp.pop %v4160
        %v4193 = vrcp.pop %v4161
        %v4194 = vrcp.pop %v4162
        %v4195 = vrcp.pop %v4163
        %v4196 = vrcp.pop %v4164
        %v4197 = vrcp.pop %v4165
        %v4198 = vrcp.pop %v4166
        %v4199 = vrcp.pop %v4167
        %v4200 = vmul.f32 %v4008, %v4168
        %v4201 = vmul.f32 %v4009, %v4169
        %v4202 = vmul.f32 %v4010, %v4170
        %v4203 = vmul.f32 %v4011, %v4171
        %v4204 = vmul.f32 %v4012, %v4172
        %v4205 = vmul.f32 %v4013, %v4173
        %v4206 = vmul.f32 %v4014, %v4174
        %v4207 = vmul.f32 %v4015, %v4175
        %v4208 = vmul.f32 %v4016, %v4176
        %v4209 = vmul.f32 %v4017, %v4177
        %v4210 = vmul.f32 %v4018, %v4178
        %v4211 = vmul.f32 %v4019, %v4179
        %v4212 = vmul.f32 %v4020, %v4180
        %v4213 = vmul.f32 %v4021, %v4181
        %v4214 = vmul.f32 %v4022, %v4182
        %v4215 = vmul.f32 %v4023, %v4183
        %v4216 = vmul.f32 %v4024, %v4184
        %v4217 = vmul.f32 %v4025, %v4185
        %v4218 = vmul.f32 %v4026, %v4186
        %v4219 = vmul.f32 %v4027, %v4187
        %v4220 = vmul.f32 %v4028, %v4188
        %v4221 = vmul.f32 %v4029, %v4189
        %v4222 = vmul.f32 %v4030, %v4190
        %v4223 = vmul.f32 %v4031, %v4191
        %v4224 = vmul.f32 %v4032, %v4192
        %v4225 = vmul.f32 %v4033, %v4193
        %v4226 = vmul.f32 %v4034, %v4194
        %v4227 = vmul.f32 %v4035, %v4195
        %v4228 = vmul.f32 %v4036, %v4196
        %v4229 = vmul.f32 %v4037, %v4197
        %v4230 = vmul.f32 %v4038, %v4198
        %v4231 = vmul.f32 %v4039, %v4199
        %4232 = vst [vmem:[%s271] sm:$0xff] %v4200
        %4233 = vst [vmem:[%s271 + $0x8] sm:$0xff] %v4201
        %4234 = vst [vmem:[%s271 + $0x10] sm:$0xff] %v4202
        %4235 = vst [vmem:[%s271 + $0x18] sm:$0xff] %v4203
        %4236 = vst [vmem:[%s271 + $0x20] sm:$0xff] %v4204
        %4237 = vst [vmem:[%s271 + $0x28] sm:$0xff] %v4205
        %4238 = vst [vmem:[%s271 + $0x30] sm:$0xff] %v4206
        %4239 = vst [vmem:[%s271 + $0x38] sm:$0xff] %v4207
        %4240 = vst [vmem:[%s271 + $0x40] sm:$0xff] %v4208
        %4241 = vst [vmem:[%s271 + $0x48] sm:$0xff] %v4209
        %4242 = vst [vmem:[%s271 + $0x50] sm:$0xff] %v4210
        %4243 = vst [vmem:[%s271 + $0x58] sm:$0xff] %v4211
        %4244 = vst [vmem:[%s271 + $0x60] sm:$0xff] %v4212
        %4245 = vst [vmem:[%s271 + $0x68] sm:$0xff] %v4213
        %4246 = vst [vmem:[%s271 + $0x70] sm:$0xff] %v4214
        %4247 = vst [vmem:[%s271 + $0x78] sm:$0xff] %v4215
        %4248 = vst [vmem:[%s271 + $0x80] sm:$0xff] %v4216
        %4249 = vst [vmem:[%s271 + $0x88] sm:$0xff] %v4217
        %4250 = vst [vmem:[%s271 + $0x90] sm:$0xff] %v4218
        %4251 = vst [vmem:[%s271 + $0x98] sm:$0xff] %v4219
        %4252 = vst [vmem:[%s271 + $0xa0] sm:$0xff] %v4220
        %4253 = vst [vmem:[%s271 + $0xa8] sm:$0xff] %v4221
        %4254 = vst [vmem:[%s271 + $0xb0] sm:$0xff] %v4222
        %4255 = vst [vmem:[%s271 + $0xb8] sm:$0xff] %v4223
        %4256 = vst [vmem:[%s271 + $0xc0] sm:$0xff] %v4224
        %4257 = vst [vmem:[%s271 + $0xc8] sm:$0xff] %v4225
        %4258 = vst [vmem:[%s271 + $0xd0] sm:$0xff] %v4226
        %4259 = vst [vmem:[%s271 + $0xd8] sm:$0xff] %v4227
        %4260 = vst [vmem:[%s271 + $0xe0] sm:$0xff] %v4228
        %4261 = vst [vmem:[%s271 + $0xe8] sm:$0xff] %v4229
        %4262 = vst [vmem:[%s271 + $0xf0] sm:$0xff] %v4230
        %4263 = vst [vmem:[%s271 + $0xf8] sm:$0xff] %v4231
        %s4264 = sand.u32 %s181, 1
        %s4265 = scalar_lea.sflag [#allocation3], %s4264
        %s4266 = sand.u32 %s181, 1
        %s4267 = smul.addr %s4266, 256
        %s4268 = scalar_lea.vmem [#allocation2], %s4267
        // Predicated region
        $region49: #{tpu_custom_call.1} parent=47 // pred_check
          %p4269 = pneg %p191
        $region50: #{tpu_custom_call.1} parent=47 // pred_check_branch
          %4271 = sbr.rel (%p4269) target = $region52
        $region51: #{tpu_custom_call.1} parent=47 // pred_region
          %s4273 = ssub.s32 4096, 4096
          %4274 = vsyncadd %s4265, %s4273
          %s4275 = smul.addr %s21, 32
          %s4276 = smul.addr %s4275, 128
          %s4277 = scalar_lea.hbm %s7, %s4276
          %s4278 = sshll.u32 %s4268, 4
          %s4279 = int_to_ptr.vmem [resolvable:$true] %s4278
          %4284 = dma.vmem_to_hbm [thread:$0]  %s4279, 4096, %s4277, %s4265, 128, 128, 8
        $region52: #{tpu_custom_call.1} parent=47 // pred_fallthru
          _
      $region48: #{tpu_custom_call.1} parent=5 // pred_fallthru
        _
      %p4285 = scmp.le.s32.totalorder 2, %s16
      // Predicated region
      $region53: #{tpu_custom_call.1} parent=5 // pred_check
        %p4286 = pneg %p4285
      $region54: #{tpu_custom_call.1} parent=5 // pred_check_branch
        %4288 = sbr.rel (%p4286) target = $region56
      $region55: #{tpu_custom_call.1} parent=5 // pred_region
        %s4289 = ssub.s32 %s16, 2
        // Predicated region
        $region57: #{tpu_custom_call.1} parent=55 // pred_check
          %p4290 = pneg %p197
        $region58: #{tpu_custom_call.1} parent=55 // pred_check_branch
          %4292 = sbr.rel (%p4290) target = $region60
        $region59: #{tpu_custom_call.1} parent=55 // pred_region
          %s4293 = sand.u32 %s182, 1
          %s4294 = scalar_lea.sflag [#allocation3], %s4293
          %s4295 = sand.u32 %s182, 1
          %s4296 = smul.addr %s4295, 256
          %s4297 = scalar_lea.vmem [#allocation2], %s4296
          %4298 = dma.done %s4294, 4096
        $region60: #{tpu_custom_call.1} parent=55 // pred_fallthru
          _
      $region56: #{tpu_custom_call.1} parent=5 // pred_fallthru
        _
    $region6: #{tpu_custom_call.1} parent=1 // loop_footer
      %s20 = sadd.s32 1, %s16
    $region7: #{tpu_custom_call.1} parent=1 // loop_footer_branch
      %15 = sbr.rel target = $region3
    $region8: #{tpu_custom_call.1} parent=1 // loop_exit
      _
    %4299 = vsyncpa [#allocation3], 1
    %s4300 = scalar_lea.sflag [#allocation3], 1
    %4301 = vsyncpa %s4300, 1

</llo_original>
